<compile_context>
chip_gen: v7x
topology: tpu7x:2x2x1
jax: 0.10.0
libtpu: 0.0.40
codegen_flags: <defaults>
</compile_context>

<pallas_src>
import jax
import jax.numpy as jnp
from jax import lax
from jax.experimental import pallas as pl
from jax.experimental.pallas import tpu as pltpu

BN_EPS = 1e-5
LANE = 128


def _round_up(v, m):
    return (v + m - 1) // m * m


def _pick_vmem_limit():
    """~75% of this generation's physical VMEM (48 MiB on v7x, ~96 MiB on v5e/v6e)."""
    cap = 64 * 1024 * 1024
    try:
        info = pltpu.get_tpu_info()
        cap = int(getattr(info, "vmem_capacity_bytes", cap) or cap)
    except Exception:
        pass
    return (cap * 3) // 4


def _plan_encoder(n, f_dim, hidden, g, num_layers, vmem_limit):
    """Pick lane paddings, row-tile size, node padding and A residency for the budget."""
    dh = _round_up(hidden, LANE)                    # lane-padded hidden width
    din = max(dh, _round_up(f_dim, LANE))           # lane-padded layer-input width

    def fixed_bytes(n_pad):
        # resident x + h scratch (bf16), z scratch (bf16), finalize f32 temporaries,
        # stacked bf16 MLP weights, plus headroom for P / bias blocks / accumulators.
        return (2 * n_pad * din * 2
                + n_pad * dh * 2
                + n_pad * dh * 4
                + 2 * num_layers * (din * dh + dh * dh)
                + 4 * 1024 * 1024)

    n_lane = _round_up(n, LANE)                     # lane-dense A, 128-aligned MXU K
    if fixed_bytes(n_lane) + n_lane * n_lane * 2 <= vmem_limit:
        # bf16 A fits: keep it fully resident -> DMA'd exactly once for all layers.
        a_resident = True
        n_pad = n_lane
        if n_pad <= 1024:
            tile = n_pad
        else:
            tile = 128
            for cand in (1024, 512, 256):
                if n_pad % cand == 0:
                    tile = cand
                    break
    else:
        # Stream A as (tile, n_pad) bf16 row tiles; biggest tile that fits 3 pipeline buffers.
        a_resident = False
        tile = 256
        for cand in (2048, 1024, 512, 256):
            n_pad_c = _round_up(n, cand)
            if fixed_bytes(n_pad_c) + 3 * cand * n_pad_c * 2 <= vmem_limit:
                tile = cand
                break
        n_pad = _round_up(n, tile)
    return dh, din, n_pad, tile, a_resident


# ---------------------------------------------------------------------------
# Fused encoder kernel: all GIN layers + pooling in one pallas_call
# ---------------------------------------------------------------------------
def _make_encoder_kernel(n_real, tile, dh, din, a_resident):
    def encoder_kernel(x_ref, a_ref, p_ref,
                       w1_ref, b1_ref, w2_ref, b2_ref, gamma_ref, beta_ref,
                       cnt_ref, pool_ref,
                       h_buf, z_buf, sum_buf, sq_buf, pool_acc):
        l = pl.program_id(0)          # encoder layer
        t = pl.program_id(1)          # node row-tile
        n_tiles = pl.num_programs(1)

        # Seed h with the (zero-padded, bf16) input node features on the very first step.
        @pl.when(jnp.logical_and(l == 0, t == 0))
        def _():
            h_buf[...] = x_ref[...]

        # Per-layer reset of the cross-tile accumulators.
        @pl.when(t == 0)
        def _():
            sum_buf[...] = jnp.zeros_like(sum_buf)
            sq_buf[...] = jnp.zeros_like(sq_buf)
            pool_acc[...] = jnp.zeros_like(pool_acc)

        # ---- GINConv + ReLU on this row tile (bf16 MXU matmuls, f32 accumulation) ----
        start = pl.multiple_of(t * tile, tile)
        h_all = h_buf[...]                                 # [N_pad, DIN] bf16
        h_tile = h_buf[pl.ds(start, tile), :]              # [TILE,  DIN] bf16
        if a_resident:
            a_tile = a_ref[pl.ds(start, tile), :]          # [TILE, N_pad] bf16 (resident)
        else:
            a_tile = a_ref[...]                            # [TILE, N_pad] bf16 (streamed)
        # (1 + eps) * x_i + sum_j A_ij x_j   with eps = 0 ; native bf16 MXU matmul.
        agg = (h_tile.astype(jnp.float32)
               + jnp.dot(a_tile, h_all, preferred_element_type=jnp.float32))
        z = jnp.dot(agg.astype(jnp.bfloat16), w1_ref[l],
                    preferred_element_type=jnp.float32) + b1_ref[l]
        z = jnp.maximum(z, 0.0)
        z = jnp.dot(z.astype(jnp.bfloat16), w2_ref[l],
                    preferred_element_type=jnp.float32) + b2_ref[l]
        z = jnp.maximum(z, 0.0)                            # x = F.relu(conv(x))

        # Stash pre-BN activations (bf16); accumulate BN stats over REAL nodes only.
        z_buf[pl.ds(start, tile), :] = z.astype(z_buf.dtype)
        row = start + lax.broadcasted_iota(jnp.int32, (tile, 1), 0)
        zv = z * (row < n_real).astype(jnp.float32)
        sum_buf[...] += jnp.sum(zv, axis=0, keepdims=True)
        sq_buf[...] += jnp.sum(zv * zv, axis=0, keepdims=True)

        # Per-tile pooling of the pre-BN activations.  P's padded columns are zero, so
        # fake nodes never contribute:  pool_acc += P[:, tile] @ z_tile.
        pool_acc[...] += jnp.dot(p_ref[...].astype(jnp.float32), z,
                                 preferred_element_type=jnp.float32)

        # BatchNorm affine (only meaningful at the last tile of a layer; [1, DH] math, cheap).
        inv_n = 1.0 / float(n_real)
        mean = sum_buf[...] * inv_n
        var = jnp.maximum(sq_buf[...] * inv_n - mean * mean, 0.0)   # biased variance
        scale = gamma_ref[l] * lax.rsqrt(var + BN_EPS)
        shift = beta_ref[l] - mean * scale
        is_last_tile = t == n_tiles - 1

        # global_add_pool(BN(z)) = (P @ z) * scale + nodes_per_graph * shift.
        @pl.when(is_last_tile)
        def _():
            pool_ref[...] = (pool_acc[...] * scale + cnt_ref[...] * shift)[None]

        # Next layer's input h = BN(z)  (skipped after the last layer).
        @pl.when(jnp.logical_and(is_last_tile, l + 1 < pl.num_programs(0)))
        def _():
            hn = z_buf[...].astype(jnp.float32) * scale + shift
            h_buf[:, pl.ds(0, dh)] = hn.astype(h_buf.dtype)

        if din > dh:
            # Columns [dh:din] held extra input features at l == 0; zero them once so the
            # padded lanes stay zero for all later layers (no per-layer concatenate).
            @pl.when(jnp.logical_and(is_last_tile, l == 0))
            def _():
                h_buf[:, pl.ds(dh, din - dh)] = jnp.zeros(
                    (h_buf.shape[0], din - dh), h_buf.dtype)

    return encoder_kernel


def encoder_forward(x, A, P, enc_params, vmem_limit):
    n, f = x.shape
    g = P.shape[0]
    num_layers = len(enc_params)
    hidden = enc_params[0]["w2"].shape[1]

    dh, din, n_pad, tile, a_resident = _plan_encoder(n, f, hidden, g, num_layers, vmem_limit)
    n_tiles = n_pad // tile

    # ---- pad / stack operands (tiny one-time plumbing) ----
    # NOTE: adjacency entries (edge multiplicities) must be exactly representable in bf16
    # (integers <= 256); true for simple graphs / multigraphs with small multiplicity.
    x_pad = jnp.zeros((n_pad, din), jnp.bfloat16).at[:n, :f].set(x.astype(jnp.bfloat16))
    if A.shape[0] == n_pad:
        A_pad = A.astype(jnp.bfloat16)
    else:
        A_pad = jnp.zeros((n_pad, n_pad), jnp.bfloat16).at[:n, :n].set(A.astype(jnp.bfloat16))
    P_pad = jnp.zeros((g, n_pad), jnp.bfloat16).at[:, :n].set(P.astype(jnp.bfloat16))
    cnt = jnp.sum(P.astype(jnp.float32), axis=1, keepdims=True)      # nodes per graph [G, 1]

    def pad_w(w, rows, cols):
        return jnp.zeros((rows, cols), jnp.float32).at[:w.shape[0], :w.shape[1]].set(w)

    def pad_v(v):
        v = v.reshape(1, -1)
        return jnp.zeros((1, dh), jnp.float32).at[:, :v.shape[1]].set(v)

    w1s = jnp.stack([pad_w(lp["w1"], din, dh) for lp in enc_params]).astype(jnp.bfloat16)
    w2s = jnp.stack([pad_w(lp["w2"], dh, dh) for lp in enc_params]).astype(jnp.bfloat16)
    b1s = jnp.stack([pad_v(lp["b1"]) for lp in enc_params])
    b2s = jnp.stack([pad_v(lp["b2"]) for lp in enc_params])
    gammas = jnp.stack([pad_v(lp["gamma"]) for lp in enc_params])
    betas = jnp.stack([pad_v(lp["beta"]) for lp in enc_params])

    # Full-array block with a constant index map -> DMA'd once, resident for the whole grid.
    def resident(a):
        return pl.BlockSpec(a.shape, lambda l, t: (0,) * a.ndim)

    if a_resident:
        a_spec = resident(A_pad)
    else:
        try:
            a_spec = pl.BlockSpec((tile, n_pad), lambda l, t: (t, 0),
                                  pipeline_mode=pl.Buffered(3))
        except TypeError:
            a_spec = pl.BlockSpec((tile, n_pad), lambda l, t: (t, 0))

    pooled = pl.pallas_call(
        _make_encoder_kernel(n, tile, dh, din, a_resident),
        out_shape=jax.ShapeDtypeStruct((num_layers, g, dh), jnp.float32),
        grid_spec=pltpu.PrefetchScalarGridSpec(
            num_scalar_prefetch=0,
            grid=(num_layers, n_tiles),
            in_specs=[
                resident(x_pad),                                   # node features (bf16)
                a_spec,                                            # adjacency (resident/streamed)
                pl.BlockSpec((g, tile), lambda l, t: (0, t)),      # pooling one-hots, streamed
                resident(w1s), resident(b1s), resident(w2s),
                resident(b2s), resident(gammas), resident(betas),
                resident(cnt),
            ],
            out_specs=pl.BlockSpec((1, g, dh), lambda l, t: (l, 0, 0)),
            scratch_shapes=[
                pltpu.VMEM((n_pad, din), jnp.bfloat16),  # h: current layer input (resident)
                pltpu.VMEM((n_pad, dh), jnp.bfloat16),   # pre-BN activations of the layer
                pltpu.VMEM((1, dh), jnp.float32),        # BN sum accumulator
                pltpu.VMEM((1, dh), jnp.float32),        # BN sum-of-squares accumulator
                pltpu.VMEM((g, dh), jnp.float32),        # pooled pre-BN accumulator
            ]),
        compiler_params=pltpu.CompilerParams(
            # Both axes carry cross-step state (layer dependency, BN accumulation) -> sequential.
            # TODO(synk): per-core BN partial sums + cross-core combine would let the tile axis
            # be core-parallel on v7x's 2 TensorCores.
            dimension_semantics=("arbitrary", "arbitrary"),
            vmem_limit_bytes=vmem_limit,
        ),
    )(x_pad, A_pad, P_pad, w1s, b1s, w2s, b2s, gammas, betas, cnt)

    return pooled, hidden    # pooled: [L, G, DH] (valid features in the first `hidden` lanes)


# ---------------------------------------------------------------------------
# Projection heads: grid=(2,) "parallel" -> one head per TensorCore on v7x
# ---------------------------------------------------------------------------
def proj_head_kernel(y_ref, mask_ref,
                     w1_ref, g1_ref, b1_ref, w2_ref, g2_ref, b2_ref, w3_ref,
                     out_ref):
    # Shared masked embedding; bf16 matmuls with f32 accumulation (BN stats in f32).
    y = (y_ref[...] * mask_ref[...]).astype(jnp.bfloat16)

    def bn_relu(z, gamma, beta):
        mean = jnp.mean(z, axis=0, keepdims=True)
        var = jnp.mean((z - mean) ** 2, axis=0, keepdims=True)
        return jnp.maximum((z - mean) * lax.rsqrt(var + BN_EPS) * gamma + beta, 0.0)

    z = jnp.dot(y, w1_ref[0], preferred_element_type=jnp.float32)
    z = bn_relu(z, g1_ref[0], b1_ref[0])
    z = jnp.dot(z.astype(jnp.bfloat16), w2_ref[0], preferred_element_type=jnp.float32)
    z = bn_relu(z, g2_ref[0], b2_ref[0])
    out_ref[...] = jnp.dot(z.astype(jnp.bfloat16), w3_ref[0],
                           preferred_element_type=jnp.float32)[None]


def proj_heads_forward(pooled, hidden, masks, head_params, head2_params, vmem_limit):
    num_layers, g, dh = pooled.shape
    emb_pad = num_layers * dh
    # [L, G, DH] -> lane-dense [G, L*DH]; layer l's real features sit at cols [l*DH, l*DH+hidden)
    y_pad = jnp.transpose(pooled, (1, 0, 2)).reshape(g, emb_pad)

    # masks order matches torch.cat(layer outputs, dim=1): layer-major.
    if masks is None:
        m = jnp.ones((num_layers, hidden), jnp.float32)
    else:
        m = masks.astype(jnp.float32).reshape(num_layers, hidden)
    mask_pad = jnp.pad(m, ((0, 0), (0, dh - hidden))).reshape(1, emb_pad)

    def prep_w1(hp):
        # scatter W1 rows to the lane-padded positions of y_pad; bf16 halves weight DMA bytes.
        w1 = hp["w1"].reshape(num_layers, hidden, -1)
        w1 = jnp.pad(w1, ((0, 0), (0, dh - hidden), (0, 0))).reshape(emb_pad, -1)
        return w1.astype(jnp.bfloat16)

    hps = (head2_params, head_params)            # index 0 -> y_bl (proj_head2), 1 -> y_cl
    w1s = jnp.stack([prep_w1(hp) for hp in hps])
    w2s = jnp.stack([hp["w2"].astype(jnp.bfloat16) for hp in hps])
    w3s = jnp.stack([hp["w3"].astype(jnp.bfloat16) for hp in hps])
    g1s = jnp.stack([hp["g1"] for hp in hps])
    b1s = jnp.stack([hp["b1"] for hp in hps])
    g2s = jnp.stack([hp["g2"] for hp in hps])
    b2s = jnp.stack([hp["b2"] for hp in hps])
    d_out = head_params["w3"].shape[1]

    def shared(a):                    # same block for every grid step -> DMA'd once
        return pl.BlockSpec(a.shape, lambda i: (0,) * a.ndim)

    def per_head(a):                  # one head's parameters per grid step
        return pl.BlockSpec((1,) + a.shape[1:], lambda i: (i,) + (0,) * (a.ndim - 1))

    out = pl.pallas_call(
        proj_head_kernel,
        out_shape=jax.ShapeDtypeStruct((2, g, d_out), jnp.float32),
        grid_spec=pltpu.PrefetchScalarGridSpec(
            num_scalar_prefetch=0,
            grid=(2,),
            in_specs=[shared(y_pad), shared(mask_pad),
                      per_head(w1s), per_head(g1s), per_head(b1s),
                      per_head(w2s), per_head(g2s), per_head(b2s),
                      per_head(w3s)],
            out_specs=pl.BlockSpec((1, g, d_out), lambda i: (i, 0, 0))),
        compiler_params=pltpu.CompilerParams(
            dimension_semantics=("parallel",),    # one head per TC on v7x; serial elsewhere
            vmem_limit_bytes=vmem_limit),
    )(y_pad, mask_pad, w1s, g1s, b1s, w2s, g2s, b2s, w3s)
    return out[0], out[1]


# ---------------------------------------------------------------------------
# Full forward
# ---------------------------------------------------------------------------
def mask_simclr_forward(x, A, P, params, masks=None):
    vmem_limit = _pick_vmem_limit()
    pooled, hidden = encoder_forward(x, A, P, params["encoder"], vmem_limit)
    y_bl, y_cl = proj_heads_forward(pooled, hidden, masks,
                                    params["proj_head"], params["proj_head2"], vmem_limit)
    return y_bl, y_cl


# ---------------------------------------------------------------------------
# Deterministic parameter init (xavier_uniform weights, zero biases, BN gamma=1/beta=0)
# ---------------------------------------------------------------------------
def xavier_uniform(key, fan_in, fan_out):
    a = (6.0 / (fan_in + fan_out)) ** 0.5
    return jax.random.uniform(key, (fan_in, fan_out), jnp.float32, -a, a)


def init_params(key, num_features, hidden_dim, num_gc_layers, proj_dim=512):
    embedding_dim = hidden_dim * num_gc_layers
    keys = jax.random.split(key, num_gc_layers * 2 + 6)
    ki = 0
    enc = []
    for i in range(num_gc_layers):
        din = num_features if i == 0 else hidden_dim
        w1 = xavier_uniform(keys[ki], din, hidden_dim); ki += 1
        w2 = xavier_uniform(keys[ki], hidden_dim, hidden_dim); ki += 1
        enc.append(dict(
            w1=w1, b1=jnp.zeros((1, hidden_dim), jnp.float32),
            w2=w2, b2=jnp.zeros((1, hidden_dim), jnp.float32),
            gamma=jnp.ones((1, hidden_dim), jnp.float32),
            beta=jnp.zeros((1, hidden_dim), jnp.float32)))
    sizes = [embedding_dim, proj_dim, proj_dim, proj_dim]
    heads = []
    for _ in range(2):  # proj_head and proj_head2 (independently re-initialized by init_emb)
        w1 = xavier_uniform(keys[ki], sizes[0], sizes[1]); ki += 1
        w2 = xavier_uniform(keys[ki], sizes[1], sizes[2]); ki += 1
        w3 = xavier_uniform(keys[ki], sizes[2], sizes[3]); ki += 1
        heads.append(dict(
            w1=w1, g1=jnp.ones((1, sizes[1]), jnp.float32), b1=jnp.zeros((1, sizes[1]), jnp.float32),
            w2=w2, g2=jnp.ones((1, sizes[2]), jnp.float32), b2=jnp.zeros((1, sizes[2]), jnp.float32),
            w3=w3))
    return dict(encoder=enc, proj_head=heads[0], proj_head2=heads[1])


# ---------------------------------------------------------------------------
if __name__ == "__main__":
    key = jax.random.PRNGKey(0)
    num_features, hidden_dim, num_gc_layers = 4, 32, 3
    nodes_per_graph, num_graphs = 8, 2
    N = nodes_per_graph * num_graphs

    k_x, k_p, k_m = jax.random.split(key, 3)
    x = jax.random.normal(k_x, (N, num_features), jnp.float32)
    batch = jnp.repeat(jnp.arange(num_graphs), nodes_per_graph)

    # Deterministic bidirectional ring within each graph.
    src_list, dst_list = [], []
    for gi in range(num_graphs):
        base = gi * nodes_per_graph
        for i in range(nodes_per_graph):
            a = base + i
            b = base + (i + 1) % nodes_per_graph
            src_list += [a, b]
            dst_list += [b, a]
    edge_index = jnp.array([src_list, dst_list], dtype=jnp.int32)

    # Glue: sparse edge_index -> dense adjacency, batch vector -> pooling matrix.
    A = jnp.zeros((N, N), jnp.float32).at[edge_index[1], edge_index[0]].add(1.0)
    assert float(jnp.max(A)) <= 256.0          # edge multiplicities exact in bf16
    P = (batch[None, :] == jnp.arange(num_graphs)[:, None]).astype(jnp.float32)

    params = init_params(k_p, num_features, hidden_dim, num_gc_layers)
    masks = jax.random.bernoulli(k_m, 0.5, (hidden_dim * num_gc_layers,)).astype(jnp.float32)

    fwd = jax.jit(mask_simclr_forward)
    y_bl, y_cl = fwd(x, A, P, params, masks)
    jax.block_until_ready((y_bl, y_cl))

    assert y_bl.shape == (num_graphs, 512) and y_cl.shape == (num_graphs, 512)
    assert y_bl.dtype == jnp.float32 and y_cl.dtype == jnp.float32
    assert bool(jnp.all(jnp.isfinite(y_bl))) and bool(jnp.all(jnp.isfinite(y_cl)))
    # TODO(synk): simclr_loss is a staticmethod not used in forward(); not implemented as a kernel.
    print("KERNEL_OK")
</pallas_src>

<mosaic_0001>
module attributes {stable_mosaic.version = 11 : i64} {
  func.func @encoder_kernel(%arg0: i32, %arg1: i32, %arg2: memref<128x128xbf16, #tpu.memory_space<vmem>>, %arg3: memref<128x128xbf16, #tpu.memory_space<vmem>>, %arg4: memref<2x128xbf16, #tpu.memory_space<vmem>>, %arg5: memref<3x128x128xbf16, #tpu.memory_space<vmem>>, %arg6: memref<3x1x128xf32, #tpu.memory_space<vmem>>, %arg7: memref<3x128x128xbf16, #tpu.memory_space<vmem>>, %arg8: memref<3x1x128xf32, #tpu.memory_space<vmem>>, %arg9: memref<3x1x128xf32, #tpu.memory_space<vmem>>, %arg10: memref<3x1x128xf32, #tpu.memory_space<vmem>>, %arg11: memref<2x1xf32, #tpu.memory_space<vmem>>, %arg12: memref<1x2x128xf32, #tpu.memory_space<vmem>>, %arg13: memref<128x128xbf16, #tpu.memory_space<vmem>>, %arg14: memref<128x128xbf16, #tpu.memory_space<vmem>>, %arg15: memref<1x128xf32, #tpu.memory_space<vmem>>, %arg16: memref<1x128xf32, #tpu.memory_space<vmem>>, %arg17: memref<2x128xf32, #tpu.memory_space<vmem>>) attributes {dimension_semantics = [#tpu.dimension_semantics<arbitrary>, #tpu.dimension_semantics<arbitrary>], iteration_bounds = array<i64: 3, 1>, scalar_prefetch = 0 : i64, scratch_operands = 5 : i64, tpu.core_type = #tpu.core_type<tc>, window_params = [{pipeline_mode = #tpu.pipeline_mode<synchronous>, transform_indices = @transform_0, window_bounds = array<i64: 128, 128>}, {pipeline_mode = #tpu.pipeline_mode<synchronous>, transform_indices = @transform_1, window_bounds = array<i64: 128, 128>}, {transform_indices = @transform_2, window_bounds = array<i64: 2, 128>}, {pipeline_mode = #tpu.pipeline_mode<synchronous>, transform_indices = @transform_3, window_bounds = array<i64: 3, 128, 128>}, {pipeline_mode = #tpu.pipeline_mode<synchronous>, transform_indices = @transform_4, window_bounds = array<i64: 3, 1, 128>}, {pipeline_mode = #tpu.pipeline_mode<synchronous>, transform_indices = @transform_5, window_bounds = array<i64: 3, 128, 128>}, {pipeline_mode = #tpu.pipeline_mode<synchronous>, transform_indices = @transform_6, window_bounds = array<i64: 3, 1, 128>}, {pipeline_mode = #tpu.pipeline_mode<synchronous>, transform_indices = @transform_7, window_bounds = array<i64: 3, 1, 128>}, {pipeline_mode = #tpu.pipeline_mode<synchronous>, transform_indices = @transform_8, window_bounds = array<i64: 3, 1, 128>}, {pipeline_mode = #tpu.pipeline_mode<synchronous>, transform_indices = @transform_9, window_bounds = array<i64: 2, 1>}, {transform_indices = @transform_10, window_bounds = array<i64: 1, 2, 128>}]} {
    %c0_i32 = arith.constant 0 : i32
    %0 = arith.cmpi eq, %arg0, %c0_i32 : i32
    %c0_i32_0 = arith.constant 0 : i32
    %1 = arith.cmpi eq, %arg1, %c0_i32_0 : i32
    %2 = arith.andi %0, %1 : i1
    %3 = arith.extui %2 : i1 to i32
    %c0_i32_1 = arith.constant 0 : i32
    %4 = arith.cmpi ne, %3, %c0_i32_1 : i32
    scf.if %4 {
      %c0_52 = arith.constant 0 : index
      %c0_53 = arith.constant 0 : index
      %101 = vector.load %arg2[%c0_52, %c0_53] : memref<128x128xbf16, #tpu.memory_space<vmem>>, vector<128x128xbf16>
      %c0_54 = arith.constant 0 : index
      %c0_55 = arith.constant 0 : index
      %102 = vector.load %arg13[%c0_54, %c0_55] : memref<128x128xbf16, #tpu.memory_space<vmem>>, vector<128x128xbf16>
      tpu.vector_store %arg13[%c0_54, %c0_55], %101 {strides = array<i32>} : memref<128x128xbf16, #tpu.memory_space<vmem>>, vector<128x128xbf16>,
    } else {
    }
    %c0_i32_2 = arith.constant 0 : i32
    %5 = arith.cmpi eq, %arg1, %c0_i32_2 : i32
    %6 = arith.extui %5 : i1 to i32
    %c0_i32_3 = arith.constant 0 : i32
    %7 = arith.cmpi ne, %6, %c0_i32_3 : i32
    scf.if %7 {
      %cst_52 = arith.constant 0.000000e+00 : f32
      %101 = vector.broadcast %cst_52 : f32 to vector<1x128xf32>
      %c0_53 = arith.constant 0 : index
      %c0_54 = arith.constant 0 : index
      %102 = vector.load %arg15[%c0_53, %c0_54] : memref<1x128xf32, #tpu.memory_space<vmem>>, vector<1x128xf32>
      tpu.vector_store %arg15[%c0_53, %c0_54], %101 {strides = array<i32>} : memref<1x128xf32, #tpu.memory_space<vmem>>, vector<1x128xf32>,
      %cst_55 = arith.constant 0.000000e+00 : f32
      %103 = vector.broadcast %cst_55 : f32 to vector<1x128xf32>
      %c0_56 = arith.constant 0 : index
      %c0_57 = arith.constant 0 : index
      %104 = vector.load %arg16[%c0_56, %c0_57] : memref<1x128xf32, #tpu.memory_space<vmem>>, vector<1x128xf32>
      tpu.vector_store %arg16[%c0_56, %c0_57], %103 {strides = array<i32>} : memref<1x128xf32, #tpu.memory_space<vmem>>, vector<1x128xf32>,
      %cst_58 = arith.constant 0.000000e+00 : f32
      %105 = vector.broadcast %cst_58 : f32 to vector<2x128xf32>
      %c0_59 = arith.constant 0 : index
      %c0_60 = arith.constant 0 : index
      %106 = vector.load %arg17[%c0_59, %c0_60] : memref<2x128xf32, #tpu.memory_space<vmem>>, vector<2x128xf32>
      tpu.vector_store %arg17[%c0_59, %c0_60], %105 {strides = array<i32>} : memref<2x128xf32, #tpu.memory_space<vmem>>, vector<2x128xf32>,
    } else {
    }
    %c128_i32 = arith.constant 128 : i32
    %8 = arith.muli %arg1, %c128_i32 : i32
    %9 = tpu.assume_multiple %8, 128 : i32
    %c0 = arith.constant 0 : index
    %c0_4 = arith.constant 0 : index
    %10 = vector.load %arg13[%c0, %c0_4] : memref<128x128xbf16, #tpu.memory_space<vmem>>, vector<128x128xbf16>
    %11 = arith.index_cast %9 : i32 to index
    %c0_5 = arith.constant 0 : index
    %12 = vector.load %arg13[%11, %c0_5] : memref<128x128xbf16, #tpu.memory_space<vmem>>, vector<128x128xbf16>
    %13 = arith.index_cast %9 : i32 to index
    %c0_6 = arith.constant 0 : index
    %14 = vector.load %arg3[%13, %c0_6] : memref<128x128xbf16, #tpu.memory_space<vmem>>, vector<128x128xbf16>
    %15 = arith.extf %12 : vector<128x128xbf16> to vector<128x128xf32>
    %cst = arith.constant dense<0.000000e+00> : vector<128x128xf32>
    %16 = tpu.matmul %14, %10, %cst {dimension_numbers = #tpu.dot_dimension_numbers<[1], [0], [0], [1], [0, 0, 1, 1], [], []>} : vector<128x128xbf16>, vector<128x128xbf16>, vector<128x128xf32> -> vector<128x128xf32>
    %17 = arith.addf %15, %16 : vector<128x128xf32>
    %18 = arith.truncf %17 : vector<128x128xf32> to vector<128x128xbf16>
    %19 = arith.index_cast %arg0 : i32 to index
    %c0_7 = arith.constant 0 : index
    %c0_8 = arith.constant 0 : index
    %20 = vector.load %arg5[%19, %c0_7, %c0_8] : memref<3x128x128xbf16, #tpu.memory_space<vmem>>, vector<1x128x128xbf16>
    %21 = vector.shape_cast %20 : vector<1x128x128xbf16> to vector<128x128xbf16>
    %cst_9 = arith.constant dense<0.000000e+00> : vector<128x128xf32>
    %22 = tpu.matmul %18, %21, %cst_9 {dimension_numbers = #tpu.dot_dimension_numbers<[1], [0], [0], [1], [0, 0, 1, 1], [], []>} : vector<128x128xbf16>, vector<128x128xbf16>, vector<128x128xf32> -> vector<128x128xf32>
    %23 = arith.index_cast %arg0 : i32 to index
    %c0_10 = arith.constant 0 : index
    %c0_11 = arith.constant 0 : index
    %24 = vector.load %arg6[%23, %c0_10, %c0_11] : memref<3x1x128xf32, #tpu.memory_space<vmem>>, vector<1x1x128xf32>
    %25 = vector.shape_cast %24 : vector<1x1x128xf32> to vector<1x128xf32>
    %26 = vector.broadcast %25 : vector<1x128xf32> to vector<128x128xf32>
    %27 = arith.addf %22, %26 : vector<128x128xf32>
    %cst_12 = arith.constant 0.000000e+00 : f32
    %28 = vector.broadcast %cst_12 : f32 to vector<128x128xf32>
    %29 = arith.maximumf %27, %28 : vector<128x128xf32>
    %30 = arith.truncf %29 : vector<128x128xf32> to vector<128x128xbf16>
    %31 = arith.index_cast %arg0 : i32 to index
    %c0_13 = arith.constant 0 : index
    %c0_14 = arith.constant 0 : index
    %32 = vector.load %arg7[%31, %c0_13, %c0_14] : memref<3x128x128xbf16, #tpu.memory_space<vmem>>, vector<1x128x128xbf16>
    %33 = vector.shape_cast %32 : vector<1x128x128xbf16> to vector<128x128xbf16>
    %cst_15 = arith.constant dense<0.000000e+00> : vector<128x128xf32>
    %34 = tpu.matmul %30, %33, %cst_15 {dimension_numbers = #tpu.dot_dimension_numbers<[1], [0], [0], [1], [0, 0, 1, 1], [], []>} : vector<128x128xbf16>, vector<128x128xbf16>, vector<128x128xf32> -> vector<128x128xf32>
    %35 = arith.index_cast %arg0 : i32 to index
    %c0_16 = arith.constant 0 : index
    %c0_17 = arith.constant 0 : index
    %36 = vector.load %arg8[%35, %c0_16, %c0_17] : memref<3x1x128xf32, #tpu.memory_space<vmem>>, vector<1x1x128xf32>
    %37 = vector.shape_cast %36 : vector<1x1x128xf32> to vector<1x128xf32>
    %38 = vector.broadcast %37 : vector<1x128xf32> to vector<128x128xf32>
    %39 = arith.addf %34, %38 : vector<128x128xf32>
    %cst_18 = arith.constant 0.000000e+00 : f32
    %40 = vector.broadcast %cst_18 : f32 to vector<128x128xf32>
    %41 = arith.maximumf %39, %40 : vector<128x128xf32>
    %42 = arith.truncf %41 : vector<128x128xf32> to vector<128x128xbf16>
    %43 = arith.index_cast %9 : i32 to index
    %c0_19 = arith.constant 0 : index
    %44 = vector.load %arg14[%43, %c0_19] : memref<128x128xbf16, #tpu.memory_space<vmem>>, vector<128x128xbf16>
    tpu.vector_store %arg14[%43, %c0_19], %42 {strides = array<i32>} : memref<128x128xbf16, #tpu.memory_space<vmem>>, vector<128x128xbf16>,
    %45 = tpu.iota {dimensions = array<i32: 0>} : vector<128x1xi32>
    %46 = vector.broadcast %9 : i32 to vector<128x1xi32>
    %47 = arith.addi %46, %45 : vector<128x1xi32>
    %c16_i32 = arith.constant 16 : i32
    %48 = vector.broadcast %c16_i32 : i32 to vector<128x1xi32>
    %49 = arith.cmpi slt, %47, %48 : vector<128x1xi32>
    %50 = arith.extui %49 : vector<128x1xi1> to vector<128x1xi32>
    %51 = arith.sitofp %50 : vector<128x1xi32> to vector<128x1xf32>
    %52 = vector.broadcast %51 : vector<128x1xf32> to vector<128x128xf32>
    %53 = arith.mulf %41, %52 : vector<128x128xf32>
    %c0_20 = arith.constant 0 : index
    %c0_21 = arith.constant 0 : index
    %54 = vector.load %arg15[%c0_20, %c0_21] : memref<1x128xf32, #tpu.memory_space<vmem>>, vector<1x128xf32>
    %cst_22 = arith.constant dense<0.000000e+00> : vector<128xf32>
    %55 = vector.multi_reduction <add>, %53, %cst_22 [0] : vector<128x128xf32> to vector<128xf32>
    %56 = vector.shape_cast %55 : vector<128xf32> to vector<1x128xf32>
    %57 = arith.addf %54, %56 : vector<1x128xf32>
    %c0_23 = arith.constant 0 : index
    %c0_24 = arith.constant 0 : index
    %58 = vector.load %arg15[%c0_23, %c0_24] : memref<1x128xf32, #tpu.memory_space<vmem>>, vector<1x128xf32>
    tpu.vector_store %arg15[%c0_23, %c0_24], %57 {strides = array<i32>} : memref<1x128xf32, #tpu.memory_space<vmem>>, vector<1x128xf32>,
    %c0_25 = arith.constant 0 : index
    %c0_26 = arith.constant 0 : index
    %59 = vector.load %arg16[%c0_25, %c0_26] : memref<1x128xf32, #tpu.memory_space<vmem>>, vector<1x128xf32>
    %60 = arith.mulf %53, %53 : vector<128x128xf32>
    %cst_27 = arith.constant dense<0.000000e+00> : vector<128xf32>
    %61 = vector.multi_reduction <add>, %60, %cst_27 [0] : vector<128x128xf32> to vector<128xf32>
    %62 = vector.shape_cast %61 : vector<128xf32> to vector<1x128xf32>
    %63 = arith.addf %59, %62 : vector<1x128xf32>
    %c0_28 = arith.constant 0 : index
    %c0_29 = arith.constant 0 : index
    %64 = vector.load %arg16[%c0_28, %c0_29] : memref<1x128xf32, #tpu.memory_space<vmem>>, vector<1x128xf32>
    tpu.vector_store %arg16[%c0_28, %c0_29], %63 {strides = array<i32>} : memref<1x128xf32, #tpu.memory_space<vmem>>, vector<1x128xf32>,
    %c0_30 = arith.constant 0 : index
    %c0_31 = arith.constant 0 : index
    %65 = vector.load %arg17[%c0_30, %c0_31] : memref<2x128xf32, #tpu.memory_space<vmem>>, vector<2x128xf32>
    %c0_32 = arith.constant 0 : index
    %c0_33 = arith.constant 0 : index
    %66 = vector.load %arg4[%c0_32, %c0_33] : memref<2x128xbf16, #tpu.memory_space<vmem>>, vector<2x128xbf16>
    %67 = arith.extf %66 : vector<2x128xbf16> to vector<2x128xf32>
    %cst_34 = arith.constant dense<0.000000e+00> : vector<2x128xf32>
    %68 = tpu.matmul %67, %41, %cst_34 {dimension_numbers = #tpu.dot_dimension_numbers<[1], [0], [0], [1], [0, 0, 1, 1], [], []>} : vector<2x128xf32>, vector<128x128xf32>, vector<2x128xf32> -> vector<2x128xf32>
    %69 = arith.addf %65, %68 : vector<2x128xf32>
    %c0_35 = arith.constant 0 : index
    %c0_36 = arith.constant 0 : index
    %70 = vector.load %arg17[%c0_35, %c0_36] : memref<2x128xf32, #tpu.memory_space<vmem>>, vector<2x128xf32>
    tpu.vector_store %arg17[%c0_35, %c0_36], %69 {strides = array<i32>} : memref<2x128xf32, #tpu.memory_space<vmem>>, vector<2x128xf32>,
    %c0_37 = arith.constant 0 : index
    %c0_38 = arith.constant 0 : index
    %71 = vector.load %arg15[%c0_37, %c0_38] : memref<1x128xf32, #tpu.memory_space<vmem>>, vector<1x128xf32>
    %cst_39 = arith.constant 6.250000e-02 : f32
    %72 = vector.broadcast %cst_39 : f32 to vector<1x128xf32>
    %73 = arith.mulf %71, %72 : vector<1x128xf32>
    %c0_40 = arith.constant 0 : index
    %c0_41 = arith.constant 0 : index
    %74 = vector.load %arg16[%c0_40, %c0_41] : memref<1x128xf32, #tpu.memory_space<vmem>>, vector<1x128xf32>
    %cst_42 = arith.constant 6.250000e-02 : f32
    %75 = vector.broadcast %cst_42 : f32 to vector<1x128xf32>
    %76 = arith.mulf %74, %75 : vector<1x128xf32>
    %77 = arith.mulf %73, %73 : vector<1x128xf32>
    %78 = arith.subf %76, %77 : vector<1x128xf32>
    %cst_43 = arith.constant 0.000000e+00 : f32
    %79 = vector.broadcast %cst_43 : f32 to vector<1x128xf32>
    %80 = arith.maximumf %78, %79 : vector<1x128xf32>
    %81 = arith.index_cast %arg0 : i32 to index
    %c0_44 = arith.constant 0 : index
    %c0_45 = arith.constant 0 : index
    %82 = vector.load %arg9[%81, %c0_44, %c0_45] : memref<3x1x128xf32, #tpu.memory_space<vmem>>, vector<1x1x128xf32>
    %83 = vector.shape_cast %82 : vector<1x1x128xf32> to vector<1x128xf32>
    %cst_46 = arith.constant 9.99999974E-6 : f32
    %84 = vector.broadcast %cst_46 : f32 to vector<1x128xf32>
    %85 = arith.addf %80, %84 : vector<1x128xf32>
    %86 = math.rsqrt %85 : vector<1x128xf32>
    %87 = arith.mulf %83, %86 : vector<1x128xf32>
    %88 = arith.index_cast %arg0 : i32 to index
    %c0_47 = arith.constant 0 : index
    %c0_48 = arith.constant 0 : index
    %89 = vector.load %arg10[%88, %c0_47, %c0_48] : memref<3x1x128xf32, #tpu.memory_space<vmem>>, vector<1x1x128xf32>
    %90 = vector.shape_cast %89 : vector<1x1x128xf32> to vector<1x128xf32>
    %91 = arith.mulf %73, %87 : vector<1x128xf32>
    %92 = arith.subf %90, %91 : vector<1x128xf32>
    %c0_i32_49 = arith.constant 0 : i32
    %93 = arith.cmpi eq, %arg1, %c0_i32_49 : i32
    %94 = arith.extui %93 : i1 to i32
    %c0_i32_50 = arith.constant 0 : i32
    %95 = arith.cmpi ne, %94, %c0_i32_50 : i32
    scf.if %95 {
      %c0_52 = arith.constant 0 : index
      %c0_53 = arith.constant 0 : index
      %101 = vector.load %arg17[%c0_52, %c0_53] : memref<2x128xf32, #tpu.memory_space<vmem>>, vector<2x128xf32>
      %102 = vector.broadcast %87 : vector<1x128xf32> to vector<2x128xf32>
      %103 = arith.mulf %101, %102 : vector<2x128xf32>
      %c0_54 = arith.constant 0 : index
      %c0_55 = arith.constant 0 : index
      %104 = vector.load %arg11[%c0_54, %c0_55] : memref<2x1xf32, #tpu.memory_space<vmem>>, vector<2x1xf32>
      %105 = vector.broadcast %104 : vector<2x1xf32> to vector<2x128xf32>
      %106 = vector.broadcast %92 : vector<1x128xf32> to vector<2x128xf32>
      %107 = arith.mulf %105, %106 : vector<2x128xf32>
      %108 = arith.addf %103, %107 : vector<2x128xf32>
      %109 = vector.shape_cast %108 : vector<2x128xf32> to vector<1x2x128xf32>
      %c0_56 = arith.constant 0 : index
      %c0_57 = arith.constant 0 : index
      %c0_58 = arith.constant 0 : index
      %110 = vector.load %arg12[%c0_56, %c0_57, %c0_58] : memref<1x2x128xf32, #tpu.memory_space<vmem>>, vector<1x2x128xf32>
      tpu.vector_store %arg12[%c0_56, %c0_57, %c0_58], %109 {strides = array<i32>} : memref<1x2x128xf32, #tpu.memory_space<vmem>>, vector<1x2x128xf32>,
    } else {
    }
    %c1_i32 = arith.constant 1 : i32
    %96 = arith.addi %arg0, %c1_i32 : i32
    %c3_i32 = arith.constant 3 : i32
    %97 = arith.cmpi slt, %96, %c3_i32 : i32
    %98 = arith.andi %93, %97 : i1
    %99 = arith.extui %98 : i1 to i32
    %c0_i32_51 = arith.constant 0 : i32
    %100 = arith.cmpi ne, %99, %c0_i32_51 : i32
    scf.if %100 {
      %c0_52 = arith.constant 0 : index
      %c0_53 = arith.constant 0 : index
      %101 = vector.load %arg14[%c0_52, %c0_53] : memref<128x128xbf16, #tpu.memory_space<vmem>>, vector<128x128xbf16>
      %102 = arith.extf %101 : vector<128x128xbf16> to vector<128x128xf32>
      %103 = vector.broadcast %87 : vector<1x128xf32> to vector<128x128xf32>
      %104 = arith.mulf %102, %103 : vector<128x128xf32>
      %105 = vector.broadcast %92 : vector<1x128xf32> to vector<128x128xf32>
      %106 = arith.addf %104, %105 : vector<128x128xf32>
      %107 = arith.truncf %106 : vector<128x128xf32> to vector<128x128xbf16>
      %c0_54 = arith.constant 0 : index
      %c0_55 = arith.constant 0 : index
      %108 = vector.load %arg13[%c0_54, %c0_55] : memref<128x128xbf16, #tpu.memory_space<vmem>>, vector<128x128xbf16>
      tpu.vector_store %arg13[%c0_54, %c0_55], %107 {strides = array<i32>} : memref<128x128xbf16, #tpu.memory_space<vmem>>, vector<128x128xbf16>,
    } else {
    }
    return
  }
  func.func @transform_0(%arg0: i32, %arg1: i32) -> (i32, i32) {
    %c0_i32 = arith.constant 0 : i32
    %c0_i32_0 = arith.constant 0 : i32
    %c0_i32_1 = arith.constant 0 : i32
    return %c0_i32, %c0_i32_0 : i32, i32
  }
  func.func @transform_1(%arg0: i32, %arg1: i32) -> (i32, i32) {
    %c0_i32 = arith.constant 0 : i32
    %c0_i32_0 = arith.constant 0 : i32
    %c0_i32_1 = arith.constant 0 : i32
    return %c0_i32, %c0_i32_0 : i32, i32
  }
  func.func @transform_2(%arg0: i32, %arg1: i32) -> (i32, i32) {
    %c0_i32 = arith.constant 0 : i32
    %c0_i32_0 = arith.constant 0 : i32
    return %c0_i32, %arg1 : i32, i32
  }
  func.func @transform_3(%arg0: i32, %arg1: i32) -> (i32, i32, i32) {
    %c0_i32 = arith.constant 0 : i32
    %c0_i32_0 = arith.constant 0 : i32
    %c0_i32_1 = arith.constant 0 : i32
    %c0_i32_2 = arith.constant 0 : i32
    return %c0_i32, %c0_i32_0, %c0_i32_1 : i32, i32, i32
  }
  func.func @transform_4(%arg0: i32, %arg1: i32) -> (i32, i32, i32) {
    %c0_i32 = arith.constant 0 : i32
    %c0_i32_0 = arith.constant 0 : i32
    %c0_i32_1 = arith.constant 0 : i32
    %c0_i32_2 = arith.constant 0 : i32
    return %c0_i32, %c0_i32_0, %c0_i32_1 : i32, i32, i32
  }
  func.func @transform_5(%arg0: i32, %arg1: i32) -> (i32, i32, i32) {
    %c0_i32 = arith.constant 0 : i32
    %c0_i32_0 = arith.constant 0 : i32
    %c0_i32_1 = arith.constant 0 : i32
    %c0_i32_2 = arith.constant 0 : i32
    return %c0_i32, %c0_i32_0, %c0_i32_1 : i32, i32, i32
  }
  func.func @transform_6(%arg0: i32, %arg1: i32) -> (i32, i32, i32) {
    %c0_i32 = arith.constant 0 : i32
    %c0_i32_0 = arith.constant 0 : i32
    %c0_i32_1 = arith.constant 0 : i32
    %c0_i32_2 = arith.constant 0 : i32
    return %c0_i32, %c0_i32_0, %c0_i32_1 : i32, i32, i32
  }
  func.func @transform_7(%arg0: i32, %arg1: i32) -> (i32, i32, i32) {
    %c0_i32 = arith.constant 0 : i32
    %c0_i32_0 = arith.constant 0 : i32
    %c0_i32_1 = arith.constant 0 : i32
    %c0_i32_2 = arith.constant 0 : i32
    return %c0_i32, %c0_i32_0, %c0_i32_1 : i32, i32, i32
  }
  func.func @transform_8(%arg0: i32, %arg1: i32) -> (i32, i32, i32) {
    %c0_i32 = arith.constant 0 : i32
    %c0_i32_0 = arith.constant 0 : i32
    %c0_i32_1 = arith.constant 0 : i32
    %c0_i32_2 = arith.constant 0 : i32
    return %c0_i32, %c0_i32_0, %c0_i32_1 : i32, i32, i32
  }
  func.func @transform_9(%arg0: i32, %arg1: i32) -> (i32, i32) {
    %c0_i32 = arith.constant 0 : i32
    %c0_i32_0 = arith.constant 0 : i32
    %c0_i32_1 = arith.constant 0 : i32
    return %c0_i32, %c0_i32_0 : i32, i32
  }
  func.func @transform_10(%arg0: i32, %arg1: i32) -> (i32, i32, i32) {
    %c0_i32 = arith.constant 0 : i32
    %c0_i32_0 = arith.constant 0 : i32
    %c0_i32_1 = arith.constant 0 : i32
    return %arg0, %c0_i32, %c0_i32_0 : i32, i32, i32
  }
}

module attributes {stable_mosaic.version = 11 : i64} {
  func.func @proj_head_kernel(%arg0: i32, %arg1: memref<2x384xf32, #tpu.memory_space<vmem>>, %arg2: memref<1x384xf32, #tpu.memory_space<vmem>>, %arg3: memref<1x384x512xbf16, #tpu.memory_space<vmem>>, %arg4: memref<1x1x512xf32, #tpu.memory_space<vmem>>, %arg5: memref<1x1x512xf32, #tpu.memory_space<vmem>>, %arg6: memref<1x512x512xbf16, #tpu.memory_space<vmem>>, %arg7: memref<1x1x512xf32, #tpu.memory_space<vmem>>, %arg8: memref<1x1x512xf32, #tpu.memory_space<vmem>>, %arg9: memref<1x512x512xbf16, #tpu.memory_space<vmem>>, %arg10: memref<1x2x512xf32, #tpu.memory_space<vmem>>) attributes {dimension_semantics = [#tpu.dimension_semantics<parallel>], iteration_bounds = array<i64: 2>, scalar_prefetch = 0 : i64, scratch_operands = 0 : i64, tpu.core_type = #tpu.core_type<tc>, window_params = [{pipeline_mode = #tpu.pipeline_mode<synchronous>, transform_indices = @transform_0, window_bounds = array<i64: 2, 384>}, {pipeline_mode = #tpu.pipeline_mode<synchronous>, transform_indices = @transform_1, window_bounds = array<i64: 1, 384>}, {transform_indices = @transform_2, window_bounds = array<i64: 1, 384, 512>}, {transform_indices = @transform_3, window_bounds = array<i64: 1, 1, 512>}, {transform_indices = @transform_4, window_bounds = array<i64: 1, 1, 512>}, {transform_indices = @transform_5, window_bounds = array<i64: 1, 512, 512>}, {transform_indices = @transform_6, window_bounds = array<i64: 1, 1, 512>}, {transform_indices = @transform_7, window_bounds = array<i64: 1, 1, 512>}, {transform_indices = @transform_8, window_bounds = array<i64: 1, 512, 512>}, {transform_indices = @transform_9, window_bounds = array<i64: 1, 2, 512>}]} {
    %c0 = arith.constant 0 : index
    %c0_0 = arith.constant 0 : index
    %0 = vector.load %arg1[%c0, %c0_0] : memref<2x384xf32, #tpu.memory_space<vmem>>, vector<2x384xf32>
    %c0_1 = arith.constant 0 : index
    %c0_2 = arith.constant 0 : index
    %1 = vector.load %arg2[%c0_1, %c0_2] : memref<1x384xf32, #tpu.memory_space<vmem>>, vector<1x384xf32>
    %2 = vector.broadcast %1 : vector<1x384xf32> to vector<2x384xf32>
    %3 = arith.mulf %0, %2 : vector<2x384xf32>
    %4 = arith.truncf %3 : vector<2x384xf32> to vector<2x384xbf16>
    %c0_3 = arith.constant 0 : index
    %c0_4 = arith.constant 0 : index
    %c0_5 = arith.constant 0 : index
    %5 = vector.load %arg3[%c0_3, %c0_4, %c0_5] : memref<1x384x512xbf16, #tpu.memory_space<vmem>>, vector<1x384x512xbf16>
    %6 = vector.shape_cast %5 : vector<1x384x512xbf16> to vector<384x512xbf16>
    %cst = arith.constant dense<0.000000e+00> : vector<2x512xf32>
    %7 = tpu.matmul %4, %6, %cst {dimension_numbers = #tpu.dot_dimension_numbers<[1], [0], [0], [1], [0, 0, 1, 1], [], []>} : vector<2x384xbf16>, vector<384x512xbf16>, vector<2x512xf32> -> vector<2x512xf32>
    %c0_6 = arith.constant 0 : index
    %c0_7 = arith.constant 0 : index
    %c0_8 = arith.constant 0 : index
    %8 = vector.load %arg4[%c0_6, %c0_7, %c0_8] : memref<1x1x512xf32, #tpu.memory_space<vmem>>, vector<1x1x512xf32>
    %9 = vector.shape_cast %8 : vector<1x1x512xf32> to vector<1x512xf32>
    %c0_9 = arith.constant 0 : index
    %c0_10 = arith.constant 0 : index
    %c0_11 = arith.constant 0 : index
    %10 = vector.load %arg5[%c0_9, %c0_10, %c0_11] : memref<1x1x512xf32, #tpu.memory_space<vmem>>, vector<1x1x512xf32>
    %11 = vector.shape_cast %10 : vector<1x1x512xf32> to vector<1x512xf32>
    %cst_12 = arith.constant dense<0.000000e+00> : vector<512xf32>
    %12 = vector.multi_reduction <add>, %7, %cst_12 [0] : vector<2x512xf32> to vector<512xf32>
    %13 = vector.shape_cast %12 : vector<512xf32> to vector<1x512xf32>
    %cst_13 = arith.constant 2.000000e+00 : f32
    %14 = vector.broadcast %cst_13 : f32 to vector<1x512xf32>
    %15 = arith.divf %13, %14 : vector<1x512xf32>
    %16 = vector.broadcast %15 : vector<1x512xf32> to vector<2x512xf32>
    %17 = arith.subf %7, %16 : vector<2x512xf32>
    %18 = arith.mulf %17, %17 : vector<2x512xf32>
    %cst_14 = arith.constant dense<0.000000e+00> : vector<512xf32>
    %19 = vector.multi_reduction <add>, %18, %cst_14 [0] : vector<2x512xf32> to vector<512xf32>
    %20 = vector.shape_cast %19 : vector<512xf32> to vector<1x512xf32>
    %cst_15 = arith.constant 2.000000e+00 : f32
    %21 = vector.broadcast %cst_15 : f32 to vector<1x512xf32>
    %22 = arith.divf %20, %21 : vector<1x512xf32>
    %23 = vector.broadcast %15 : vector<1x512xf32> to vector<2x512xf32>
    %24 = arith.subf %7, %23 : vector<2x512xf32>
    %cst_16 = arith.constant 9.99999974E-6 : f32
    %25 = vector.broadcast %cst_16 : f32 to vector<1x512xf32>
    %26 = arith.addf %22, %25 : vector<1x512xf32>
    %27 = math.rsqrt %26 : vector<1x512xf32>
    %28 = vector.broadcast %27 : vector<1x512xf32> to vector<2x512xf32>
    %29 = arith.mulf %24, %28 : vector<2x512xf32>
    %30 = vector.broadcast %9 : vector<1x512xf32> to vector<2x512xf32>
    %31 = arith.mulf %29, %30 : vector<2x512xf32>
    %32 = vector.broadcast %11 : vector<1x512xf32> to vector<2x512xf32>
    %33 = arith.addf %31, %32 : vector<2x512xf32>
    %cst_17 = arith.constant 0.000000e+00 : f32
    %34 = vector.broadcast %cst_17 : f32 to vector<2x512xf32>
    %35 = arith.maximumf %33, %34 : vector<2x512xf32>
    %36 = arith.truncf %35 : vector<2x512xf32> to vector<2x512xbf16>
    %c0_18 = arith.constant 0 : index
    %c0_19 = arith.constant 0 : index
    %c0_20 = arith.constant 0 : index
    %37 = vector.load %arg6[%c0_18, %c0_19, %c0_20] : memref<1x512x512xbf16, #tpu.memory_space<vmem>>, vector<1x512x512xbf16>
    %38 = vector.shape_cast %37 : vector<1x512x512xbf16> to vector<512x512xbf16>
    %cst_21 = arith.constant dense<0.000000e+00> : vector<2x512xf32>
    %39 = tpu.matmul %36, %38, %cst_21 {dimension_numbers = #tpu.dot_dimension_numbers<[1], [0], [0], [1], [0, 0, 1, 1], [], []>} : vector<2x512xbf16>, vector<512x512xbf16>, vector<2x512xf32> -> vector<2x512xf32>
    %c0_22 = arith.constant 0 : index
    %c0_23 = arith.constant 0 : index
    %c0_24 = arith.constant 0 : index
    %40 = vector.load %arg7[%c0_22, %c0_23, %c0_24] : memref<1x1x512xf32, #tpu.memory_space<vmem>>, vector<1x1x512xf32>
    %41 = vector.shape_cast %40 : vector<1x1x512xf32> to vector<1x512xf32>
    %c0_25 = arith.constant 0 : index
    %c0_26 = arith.constant 0 : index
    %c0_27 = arith.constant 0 : index
    %42 = vector.load %arg8[%c0_25, %c0_26, %c0_27] : memref<1x1x512xf32, #tpu.memory_space<vmem>>, vector<1x1x512xf32>
    %43 = vector.shape_cast %42 : vector<1x1x512xf32> to vector<1x512xf32>
    %cst_28 = arith.constant dense<0.000000e+00> : vector<512xf32>
    %44 = vector.multi_reduction <add>, %39, %cst_28 [0] : vector<2x512xf32> to vector<512xf32>
    %45 = vector.shape_cast %44 : vector<512xf32> to vector<1x512xf32>
    %cst_29 = arith.constant 2.000000e+00 : f32
    %46 = vector.broadcast %cst_29 : f32 to vector<1x512xf32>
    %47 = arith.divf %45, %46 : vector<1x512xf32>
    %48 = vector.broadcast %47 : vector<1x512xf32> to vector<2x512xf32>
    %49 = arith.subf %39, %48 : vector<2x512xf32>
    %50 = arith.mulf %49, %49 : vector<2x512xf32>
    %cst_30 = arith.constant dense<0.000000e+00> : vector<512xf32>
    %51 = vector.multi_reduction <add>, %50, %cst_30 [0] : vector<2x512xf32> to vector<512xf32>
    %52 = vector.shape_cast %51 : vector<512xf32> to vector<1x512xf32>
    %cst_31 = arith.constant 2.000000e+00 : f32
    %53 = vector.broadcast %cst_31 : f32 to vector<1x512xf32>
    %54 = arith.divf %52, %53 : vector<1x512xf32>
    %55 = vector.broadcast %47 : vector<1x512xf32> to vector<2x512xf32>
    %56 = arith.subf %39, %55 : vector<2x512xf32>
    %cst_32 = arith.constant 9.99999974E-6 : f32
    %57 = vector.broadcast %cst_32 : f32 to vector<1x512xf32>
    %58 = arith.addf %54, %57 : vector<1x512xf32>
    %59 = math.rsqrt %58 : vector<1x512xf32>
    %60 = vector.broadcast %59 : vector<1x512xf32> to vector<2x512xf32>
    %61 = arith.mulf %56, %60 : vector<2x512xf32>
    %62 = vector.broadcast %41 : vector<1x512xf32> to vector<2x512xf32>
    %63 = arith.mulf %61, %62 : vector<2x512xf32>
    %64 = vector.broadcast %43 : vector<1x512xf32> to vector<2x512xf32>
    %65 = arith.addf %63, %64 : vector<2x512xf32>
    %cst_33 = arith.constant 0.000000e+00 : f32
    %66 = vector.broadcast %cst_33 : f32 to vector<2x512xf32>
    %67 = arith.maximumf %65, %66 : vector<2x512xf32>
    %68 = arith.truncf %67 : vector<2x512xf32> to vector<2x512xbf16>
    %c0_34 = arith.constant 0 : index
    %c0_35 = arith.constant 0 : index
    %c0_36 = arith.constant 0 : index
    %69 = vector.load %arg9[%c0_34, %c0_35, %c0_36] : memref<1x512x512xbf16, #tpu.memory_space<vmem>>, vector<1x512x512xbf16>
    %70 = vector.shape_cast %69 : vector<1x512x512xbf16> to vector<512x512xbf16>
    %cst_37 = arith.constant dense<0.000000e+00> : vector<2x512xf32>
    %71 = tpu.matmul %68, %70, %cst_37 {dimension_numbers = #tpu.dot_dimension_numbers<[1], [0], [0], [1], [0, 0, 1, 1], [], []>} : vector<2x512xbf16>, vector<512x512xbf16>, vector<2x512xf32> -> vector<2x512xf32>
    %72 = vector.shape_cast %71 : vector<2x512xf32> to vector<1x2x512xf32>
    %c0_38 = arith.constant 0 : index
    %c0_39 = arith.constant 0 : index
    %c0_40 = arith.constant 0 : index
    %73 = vector.load %arg10[%c0_38, %c0_39, %c0_40] : memref<1x2x512xf32, #tpu.memory_space<vmem>>, vector<1x2x512xf32>
    tpu.vector_store %arg10[%c0_38, %c0_39, %c0_40], %72 {strides = array<i32>} : memref<1x2x512xf32, #tpu.memory_space<vmem>>, vector<1x2x512xf32>,
    return
  }
  func.func @transform_0(%arg0: i32) -> (i32, i32) {
    %c0_i32 = arith.constant 0 : i32
    %c0_i32_0 = arith.constant 0 : i32
    %c0_i32_1 = arith.constant 0 : i32
    return %c0_i32, %c0_i32_0 : i32, i32
  }
  func.func @transform_1(%arg0: i32) -> (i32, i32) {
    %c0_i32 = arith.constant 0 : i32
    %c0_i32_0 = arith.constant 0 : i32
    %c0_i32_1 = arith.constant 0 : i32
    return %c0_i32, %c0_i32_0 : i32, i32
  }
  func.func @transform_2(%arg0: i32) -> (i32, i32, i32) {
    %c0_i32 = arith.constant 0 : i32
    %c0_i32_0 = arith.constant 0 : i32
    %c0_i32_1 = arith.constant 0 : i32
    return %arg0, %c0_i32, %c0_i32_0 : i32, i32, i32
  }
  func.func @transform_3(%arg0: i32) -> (i32, i32, i32) {
    %c0_i32 = arith.constant 0 : i32
    %c0_i32_0 = arith.constant 0 : i32
    %c0_i32_1 = arith.constant 0 : i32
    return %arg0, %c0_i32, %c0_i32_0 : i32, i32, i32
  }
  func.func @transform_4(%arg0: i32) -> (i32, i32, i32) {
    %c0_i32 = arith.constant 0 : i32
    %c0_i32_0 = arith.constant 0 : i32
    %c0_i32_1 = arith.constant 0 : i32
    return %arg0, %c0_i32, %c0_i32_0 : i32, i32, i32
  }
  func.func @transform_5(%arg0: i32) -> (i32, i32, i32) {
    %c0_i32 = arith.constant 0 : i32
    %c0_i32_0 = arith.constant 0 : i32
    %c0_i32_1 = arith.constant 0 : i32
    return %arg0, %c0_i32, %c0_i32_0 : i32, i32, i32
  }
  func.func @transform_6(%arg0: i32) -> (i32, i32, i32) {
    %c0_i32 = arith.constant 0 : i32
    %c0_i32_0 = arith.constant 0 : i32
    %c0_i32_1 = arith.constant 0 : i32
    return %arg0, %c0_i32, %c0_i32_0 : i32, i32, i32
  }
  func.func @transform_7(%arg0: i32) -> (i32, i32, i32) {
    %c0_i32 = arith.constant 0 : i32
    %c0_i32_0 = arith.constant 0 : i32
    %c0_i32_1 = arith.constant 0 : i32
    return %arg0, %c0_i32, %c0_i32_0 : i32, i32, i32
  }
  func.func @transform_8(%arg0: i32) -> (i32, i32, i32) {
    %c0_i32 = arith.constant 0 : i32
    %c0_i32_0 = arith.constant 0 : i32
    %c0_i32_1 = arith.constant 0 : i32
    return %arg0, %c0_i32, %c0_i32_0 : i32, i32, i32
  }
  func.func @transform_9(%arg0: i32) -> (i32, i32, i32) {
    %c0_i32 = arith.constant 0 : i32
    %c0_i32_0 = arith.constant 0 : i32
    %c0_i32_1 = arith.constant 0 : i32
    return %arg0, %c0_i32, %c0_i32_0 : i32, i32, i32
  }
}

</mosaic_0001>

<llo_original>
// kernel: mask_simclr_forward.2
$region0: #{mask_simclr_forward.2}
  #allocation0 [shape = 'u32[]', space=smem, size = 0x4, offset = 0x4, fixed_abs, tag = 'smem constant byte address 0x4 - core index']
  #allocation1 [shape = 'u32[144,128]{1,0:T(1,128)}', space=vmem, size = 0x12000, scoped, tag = 'internal scratch']
  #allocation2 [shape = 'bf16[128,128]{1,0:T(16,128)(2,1)}', space=vmem, size = 0x8000, scoped, tag = 'scratch operand']
  #allocation3 [shape = 'bf16[128,128]{1,0:T(16,128)(2,1)}', space=vmem, size = 0x8000, scoped, tag = 'scratch operand']
  #allocation4 [shape = 'f32[1,128]{1,0:T(1,128)}', space=vmem, size = 0x200, scoped, tag = 'scratch operand']
  #allocation5 [shape = 'f32[1,128]{1,0:T(1,128)}', space=vmem, size = 0x200, scoped, tag = 'scratch operand']
  #allocation6 [shape = 'f32[2,128]{1,0:T(2,128)}', space=vmem, size = 0x400, scoped, tag = 'scratch operand']
  %s0 = inlined_call_operand.vmem [shape: bf16[128,128], index: 0, kind: input, shape index: {}]
  %s1 = inlined_call_operand.vmem [shape: bf16[128,128], index: 1, kind: input, shape index: {}]
  %s2 = inlined_call_operand.vmem [shape: bf16[2,128], index: 2, kind: input, shape index: {}]
  %s3 = inlined_call_operand.vmem [shape: bf16[3,128,128], index: 3, kind: input, shape index: {}]
  %s4 = inlined_call_operand.vmem [shape: f32[3,1,128], index: 4, kind: input, shape index: {}]
  %s5 = inlined_call_operand.vmem [shape: bf16[3,128,128], index: 5, kind: input, shape index: {}]
  %s6 = inlined_call_operand.vmem [shape: f32[3,1,128], index: 6, kind: input, shape index: {}]
  %s7 = inlined_call_operand.vmem [shape: f32[3,1,128], index: 7, kind: input, shape index: {}]
  %s8 = inlined_call_operand.vmem [shape: f32[3,1,128], index: 8, kind: input, shape index: {}]
  %s9 = inlined_call_operand.vmem [shape: f32[2,1], index: 9, kind: input, shape index: {}]
  %s10 = inlined_call_operand.vmem [shape: f32[3,2,128], index: 10, kind: output, shape index: {}]
  %s11 = sld [smem:[#allocation0]]
  $region89: #{mask_simclr_forward.2} parent=0
    _
  %s13 = ssub.s32 1, %s11
  %s14 = scalar_select 0, %s13, %s11
  loop: start=0, step=1, limit=5
  $region2: #{mask_simclr_forward.2} parent=0 // loop_pre_header
    _
  $region3: #{mask_simclr_forward.2} parent=0 // loop_header
    %s16 = sphi 0, %s20
    %p17 = scmp.ge.s32.totalorder %s16, 5
    %s23 = sphi 0, %s35
    %s24 = sphi 0, %s31
    %s25 = sphi 0, %s23
    %s26 = sphi 0, %s24
    %s27 = sphi 0, %s25
    %s28 = sphi 0, %s26
    %s36 = sphi 0, %s36
    %s38 = sphi 0, %s36
    %s39 = sphi 0, %s38
    %s53 = sphi 0, %s39
    %s57 = sphi 0, %s57
    %s59 = sphi 0, %s57
    %s60 = sphi 0, %s59
    %s74 = sphi 0, %s60
    %s80 = sphi 0, %s82
    %s83 = sphi 0, %s80
    %s84 = sphi 0, %s83
    %s100 = sphi 0, %s84
    %s104 = sphi 0, %s104
    %s106 = sphi 0, %s104
    %s107 = sphi 0, %s106
    %s121 = sphi 0, %s107
    %s125 = sphi 0, %s125
    %s127 = sphi 0, %s125
    %s128 = sphi 0, %s127
    %s142 = sphi 0, %s128
    %s146 = sphi 0, %s146
    %s148 = sphi 0, %s146
    %s149 = sphi 0, %s148
    %s163 = sphi 0, %s149
    %s167 = sphi 0, %s167
    %s169 = sphi 0, %s167
    %s170 = sphi 0, %s169
    %s184 = sphi 0, %s170
    %s188 = sphi 0, %s188
    %s190 = sphi 0, %s188
    %s191 = sphi 0, %s190
    %s205 = sphi 0, %s191
    %s209 = sphi 0, %s209
    %s211 = sphi 0, %s209
    %s212 = sphi 0, %s211
    %s226 = sphi 0, %s212
    %s230 = sphi 0, %s230
    %s232 = sphi 0, %s230
    %s233 = sphi 0, %s232
    %s247 = sphi 0, %s233
    %s253 = sphi 0, %s255
    %s256 = sphi 0, %s253
    %s257 = sphi 0, %s256
    %s273 = sphi 0, %s257
  $region4: #{mask_simclr_forward.2} parent=0 // loop_header_branch
    %19 = sbr.rel (%p17) target = $region8
  $region5: #{mask_simclr_forward.2} parent=0 // loop_body
    %s21 = ssub.s32 %s16, 1
    %s22 = ssub.s32 %s16, 2
    %s29 = sadd.s32 1, %s24
    %p30 = scmp.ge.s32.totalorder %s29, 1
    %s31 = scalar_select %p30, 0, %s29
    %s32 = sadd.s32 1, %s23
    %s33 = scalar_select %p30, %s32, %s23
    %p34 = scmp.ge.s32.totalorder %s33, 3
    %s35 = scalar_select %p34, 0, %s33
    %s37 = sadd.s32 %s36, 1
    %p40 = scmp.eq.s32.totalorder %s16, 2
    %p41 = scmp.ne.s32.totalorder %s36, %s38
    %p42 = scmp.eq.s32.totalorder %s16, 0
    %p43 = por %p41, %p42
    %p44 = scmp.ne.s32.totalorder %s36, %s38
    %p45 = scmp.eq.s32.totalorder %s21, 2
    %p46 = por %p44, %p45
    %p47 = scmp.ne.s32.totalorder %s38, %s39
    %p48 = scmp.eq.s32.totalorder %s21, 0
    %p49 = por %p47, %p48
    %p50 = scmp.ne.s32.totalorder %s38, %s39
    %p51 = scmp.eq.s32.totalorder %s22, 2
    %p52 = por %p50, %p51
    %p54 = scmp.ne.s32.totalorder %s39, %s53
    %p55 = scmp.eq.s32.totalorder %s22, 0
    %p56 = por %p54, %p55
    %s58 = sadd.s32 %s57, 1
    %p61 = scmp.eq.s32.totalorder %s16, 2
    %p62 = scmp.ne.s32.totalorder %s57, %s59
    %p63 = scmp.eq.s32.totalorder %s16, 0
    %p64 = por %p62, %p63
    %p65 = scmp.ne.s32.totalorder %s57, %s59
    %p66 = scmp.eq.s32.totalorder %s21, 2
    %p67 = por %p65, %p66
    %p68 = scmp.ne.s32.totalorder %s59, %s60
    %p69 = scmp.eq.s32.totalorder %s21, 0
    %p70 = por %p68, %p69
    %p71 = scmp.ne.s32.totalorder %s59, %s60
    %p72 = scmp.eq.s32.totalorder %s22, 2
    %p73 = por %p71, %p72
    %p75 = scmp.ne.s32.totalorder %s60, %s74
    %p76 = scmp.eq.s32.totalorder %s22, 0
    %p77 = por %p75, %p76
    %s78 = ssub.s32 %s24, %s31
    %p79 = scmp.eq.s32.totalorder %s78, 0
    %s81 = sadd.s32 %s80, 1
    %s82 = scalar_select %p79, %s80, %s81
    %p85 = pneg %p79
    %p86 = scmp.eq.s32.totalorder %s16, 2
    %p87 = por %p85, %p86
    %p88 = scmp.ne.s32.totalorder %s80, %s83
    %p89 = scmp.eq.s32.totalorder %s16, 0
    %p90 = por %p88, %p89
    %p91 = scmp.ne.s32.totalorder %s80, %s83
    %p92 = scmp.eq.s32.totalorder %s21, 2
    %p93 = por %p91, %p92
    %p94 = scmp.ne.s32.totalorder %s83, %s84
    %p95 = scmp.eq.s32.totalorder %s21, 0
    %p96 = por %p94, %p95
    %p97 = scmp.ne.s32.totalorder %s83, %s84
    %p98 = scmp.eq.s32.totalorder %s22, 2
    %p99 = por %p97, %p98
    %p101 = scmp.ne.s32.totalorder %s84, %s100
    %p102 = scmp.eq.s32.totalorder %s22, 0
    %p103 = por %p101, %p102
    %s105 = sadd.s32 %s104, 1
    %p108 = scmp.eq.s32.totalorder %s16, 2
    %p109 = scmp.ne.s32.totalorder %s104, %s106
    %p110 = scmp.eq.s32.totalorder %s16, 0
    %p111 = por %p109, %p110
    %p112 = scmp.ne.s32.totalorder %s104, %s106
    %p113 = scmp.eq.s32.totalorder %s21, 2
    %p114 = por %p112, %p113
    %p115 = scmp.ne.s32.totalorder %s106, %s107
    %p116 = scmp.eq.s32.totalorder %s21, 0
    %p117 = por %p115, %p116
    %p118 = scmp.ne.s32.totalorder %s106, %s107
    %p119 = scmp.eq.s32.totalorder %s22, 2
    %p120 = por %p118, %p119
    %p122 = scmp.ne.s32.totalorder %s107, %s121
    %p123 = scmp.eq.s32.totalorder %s22, 0
    %p124 = por %p122, %p123
    %s126 = sadd.s32 %s125, 1
    %p129 = scmp.eq.s32.totalorder %s16, 2
    %p130 = scmp.ne.s32.totalorder %s125, %s127
    %p131 = scmp.eq.s32.totalorder %s16, 0
    %p132 = por %p130, %p131
    %p133 = scmp.ne.s32.totalorder %s125, %s127
    %p134 = scmp.eq.s32.totalorder %s21, 2
    %p135 = por %p133, %p134
    %p136 = scmp.ne.s32.totalorder %s127, %s128
    %p137 = scmp.eq.s32.totalorder %s21, 0
    %p138 = por %p136, %p137
    %p139 = scmp.ne.s32.totalorder %s127, %s128
    %p140 = scmp.eq.s32.totalorder %s22, 2
    %p141 = por %p139, %p140
    %p143 = scmp.ne.s32.totalorder %s128, %s142
    %p144 = scmp.eq.s32.totalorder %s22, 0
    %p145 = por %p143, %p144
    %s147 = sadd.s32 %s146, 1
    %p150 = scmp.eq.s32.totalorder %s16, 2
    %p151 = scmp.ne.s32.totalorder %s146, %s148
    %p152 = scmp.eq.s32.totalorder %s16, 0
    %p153 = por %p151, %p152
    %p154 = scmp.ne.s32.totalorder %s146, %s148
    %p155 = scmp.eq.s32.totalorder %s21, 2
    %p156 = por %p154, %p155
    %p157 = scmp.ne.s32.totalorder %s148, %s149
    %p158 = scmp.eq.s32.totalorder %s21, 0
    %p159 = por %p157, %p158
    %p160 = scmp.ne.s32.totalorder %s148, %s149
    %p161 = scmp.eq.s32.totalorder %s22, 2
    %p162 = por %p160, %p161
    %p164 = scmp.ne.s32.totalorder %s149, %s163
    %p165 = scmp.eq.s32.totalorder %s22, 0
    %p166 = por %p164, %p165
    %s168 = sadd.s32 %s167, 1
    %p171 = scmp.eq.s32.totalorder %s16, 2
    %p172 = scmp.ne.s32.totalorder %s167, %s169
    %p173 = scmp.eq.s32.totalorder %s16, 0
    %p174 = por %p172, %p173
    %p175 = scmp.ne.s32.totalorder %s167, %s169
    %p176 = scmp.eq.s32.totalorder %s21, 2
    %p177 = por %p175, %p176
    %p178 = scmp.ne.s32.totalorder %s169, %s170
    %p179 = scmp.eq.s32.totalorder %s21, 0
    %p180 = por %p178, %p179
    %p181 = scmp.ne.s32.totalorder %s169, %s170
    %p182 = scmp.eq.s32.totalorder %s22, 2
    %p183 = por %p181, %p182
    %p185 = scmp.ne.s32.totalorder %s170, %s184
    %p186 = scmp.eq.s32.totalorder %s22, 0
    %p187 = por %p185, %p186
    %s189 = sadd.s32 %s188, 1
    %p192 = scmp.eq.s32.totalorder %s16, 2
    %p193 = scmp.ne.s32.totalorder %s188, %s190
    %p194 = scmp.eq.s32.totalorder %s16, 0
    %p195 = por %p193, %p194
    %p196 = scmp.ne.s32.totalorder %s188, %s190
    %p197 = scmp.eq.s32.totalorder %s21, 2
    %p198 = por %p196, %p197
    %p199 = scmp.ne.s32.totalorder %s190, %s191
    %p200 = scmp.eq.s32.totalorder %s21, 0
    %p201 = por %p199, %p200
    %p202 = scmp.ne.s32.totalorder %s190, %s191
    %p203 = scmp.eq.s32.totalorder %s22, 2
    %p204 = por %p202, %p203
    %p206 = scmp.ne.s32.totalorder %s191, %s205
    %p207 = scmp.eq.s32.totalorder %s22, 0
    %p208 = por %p206, %p207
    %s210 = sadd.s32 %s209, 1
    %p213 = scmp.eq.s32.totalorder %s16, 2
    %p214 = scmp.ne.s32.totalorder %s209, %s211
    %p215 = scmp.eq.s32.totalorder %s16, 0
    %p216 = por %p214, %p215
    %p217 = scmp.ne.s32.totalorder %s209, %s211
    %p218 = scmp.eq.s32.totalorder %s21, 2
    %p219 = por %p217, %p218
    %p220 = scmp.ne.s32.totalorder %s211, %s212
    %p221 = scmp.eq.s32.totalorder %s21, 0
    %p222 = por %p220, %p221
    %p223 = scmp.ne.s32.totalorder %s211, %s212
    %p224 = scmp.eq.s32.totalorder %s22, 2
    %p225 = por %p223, %p224
    %p227 = scmp.ne.s32.totalorder %s212, %s226
    %p228 = scmp.eq.s32.totalorder %s22, 0
    %p229 = por %p227, %p228
    %s231 = sadd.s32 %s230, 1
    %p234 = scmp.eq.s32.totalorder %s16, 2
    %p235 = scmp.ne.s32.totalorder %s230, %s232
    %p236 = scmp.eq.s32.totalorder %s16, 0
    %p237 = por %p235, %p236
    %p238 = scmp.ne.s32.totalorder %s230, %s232
    %p239 = scmp.eq.s32.totalorder %s21, 2
    %p240 = por %p238, %p239
    %p241 = scmp.ne.s32.totalorder %s232, %s233
    %p242 = scmp.eq.s32.totalorder %s21, 0
    %p243 = por %p241, %p242
    %p244 = scmp.ne.s32.totalorder %s232, %s233
    %p245 = scmp.eq.s32.totalorder %s22, 2
    %p246 = por %p244, %p245
    %p248 = scmp.ne.s32.totalorder %s233, %s247
    %p249 = scmp.eq.s32.totalorder %s22, 0
    %p250 = por %p248, %p249
    %s251 = ssub.s32 %s23, %s35
    %p252 = scmp.eq.s32.totalorder %s251, 0
    %s254 = sadd.s32 %s253, 1
    %s255 = scalar_select %p252, %s253, %s254
    %p258 = pneg %p252
    %p259 = scmp.eq.s32.totalorder %s16, 2
    %p260 = por %p258, %p259
    %p261 = scmp.ne.s32.totalorder %s253, %s256
    %p262 = scmp.eq.s32.totalorder %s16, 0
    %p263 = por %p261, %p262
    %p264 = scmp.ne.s32.totalorder %s253, %s256
    %p265 = scmp.eq.s32.totalorder %s21, 2
    %p266 = por %p264, %p265
    %p267 = scmp.ne.s32.totalorder %s256, %s257
    %p268 = scmp.eq.s32.totalorder %s21, 0
    %p269 = por %p267, %p268
    %p270 = scmp.ne.s32.totalorder %s256, %s257
    %p271 = scmp.eq.s32.totalorder %s22, 2
    %p272 = por %p270, %p271
    %p274 = scmp.ne.s32.totalorder %s257, %s273
    %p275 = scmp.eq.s32.totalorder %s22, 0
    %p276 = por %p274, %p275
    %p277 = scmp.le.s32.totalorder 1, %s16
    %p278 = scmp.lt.s32.totalorder %s16, 4
    %p279 = pnand %p277, %p278
    %p280 = pneg %p279
    // Predicated region
    $region9: #{mask_simclr_forward.2} parent=5 // pred_check
      _
    $region10: #{mask_simclr_forward.2} parent=5 // pred_check_branch
      %282 = sbr.rel (%p279) target = $region12
    $region11: #{mask_simclr_forward.2} parent=5 // pred_region
      %s283 = ssub.s32 %s16, 1
      // Predicated region
      $region13: #{mask_simclr_forward.2} parent=11 // pred_check
        %p284 = pneg %p49
      $region14: #{mask_simclr_forward.2} parent=11 // pred_check_branch
        %286 = sbr.rel (%p284) target = $region16
      $region15: #{mask_simclr_forward.2} parent=11 // pred_region
        _
      $region16: #{mask_simclr_forward.2} parent=11 // pred_fallthru
        _
      // Predicated region
      $region17: #{mask_simclr_forward.2} parent=11 // pred_check
        %p287 = pneg %p70
      $region18: #{mask_simclr_forward.2} parent=11 // pred_check_branch
        %289 = sbr.rel (%p287) target = $region20
      $region19: #{mask_simclr_forward.2} parent=11 // pred_region
        _
      $region20: #{mask_simclr_forward.2} parent=11 // pred_fallthru
        _
      // Predicated region
      $region21: #{mask_simclr_forward.2} parent=11 // pred_check
        %p290 = pneg %p96
      $region22: #{mask_simclr_forward.2} parent=11 // pred_check_branch
        %292 = sbr.rel (%p290) target = $region24
      $region23: #{mask_simclr_forward.2} parent=11 // pred_region
        %p293 = scmp.lt.s32.totalorder %s26, 0
        %s294 = scalar_select %p293, %s26, 0
        %s295 = scalar_lea.vmem %s2, %s294
      $region24: #{mask_simclr_forward.2} parent=11 // pred_fallthru
        _
      // Predicated region
      $region25: #{mask_simclr_forward.2} parent=11 // pred_check
        %p296 = pneg %p117
      $region26: #{mask_simclr_forward.2} parent=11 // pred_check_branch
        %298 = sbr.rel (%p296) target = $region28
      $region27: #{mask_simclr_forward.2} parent=11 // pred_region
        _
      $region28: #{mask_simclr_forward.2} parent=11 // pred_fallthru
        _
      // Predicated region
      $region29: #{mask_simclr_forward.2} parent=11 // pred_check
        %p299 = pneg %p138
      $region30: #{mask_simclr_forward.2} parent=11 // pred_check_branch
        %301 = sbr.rel (%p299) target = $region32
      $region31: #{mask_simclr_forward.2} parent=11 // pred_region
        _
      $region32: #{mask_simclr_forward.2} parent=11 // pred_fallthru
        _
      // Predicated region
      $region33: #{mask_simclr_forward.2} parent=11 // pred_check
        %p302 = pneg %p159
      $region34: #{mask_simclr_forward.2} parent=11 // pred_check_branch
        %304 = sbr.rel (%p302) target = $region36
      $region35: #{mask_simclr_forward.2} parent=11 // pred_region
        _
      $region36: #{mask_simclr_forward.2} parent=11 // pred_fallthru
        _
      // Predicated region
      $region37: #{mask_simclr_forward.2} parent=11 // pred_check
        %p305 = pneg %p180
      $region38: #{mask_simclr_forward.2} parent=11 // pred_check_branch
        %307 = sbr.rel (%p305) target = $region40
      $region39: #{mask_simclr_forward.2} parent=11 // pred_region
        _
      $region40: #{mask_simclr_forward.2} parent=11 // pred_fallthru
        _
      // Predicated region
      $region41: #{mask_simclr_forward.2} parent=11 // pred_check
        %p308 = pneg %p201
      $region42: #{mask_simclr_forward.2} parent=11 // pred_check_branch
        %310 = sbr.rel (%p308) target = $region44
      $region43: #{mask_simclr_forward.2} parent=11 // pred_region
        _
      $region44: #{mask_simclr_forward.2} parent=11 // pred_fallthru
        _
      // Predicated region
      $region45: #{mask_simclr_forward.2} parent=11 // pred_check
        %p311 = pneg %p222
      $region46: #{mask_simclr_forward.2} parent=11 // pred_check_branch
        %313 = sbr.rel (%p311) target = $region48
      $region47: #{mask_simclr_forward.2} parent=11 // pred_region
        _
      $region48: #{mask_simclr_forward.2} parent=11 // pred_fallthru
        _
      // Predicated region
      $region49: #{mask_simclr_forward.2} parent=11 // pred_check
        %p314 = pneg %p243
      $region50: #{mask_simclr_forward.2} parent=11 // pred_check_branch
        %316 = sbr.rel (%p314) target = $region52
      $region51: #{mask_simclr_forward.2} parent=11 // pred_region
        _
      $region52: #{mask_simclr_forward.2} parent=11 // pred_fallthru
        _
    $region12: #{mask_simclr_forward.2} parent=5 // pred_fallthru
      _
    %p317 = scmp.lt.s32.totalorder %s16, 3
    // Predicated region
    $region53: #{mask_simclr_forward.2} parent=5 // pred_check
      %p318 = pneg %p317
    $region54: #{mask_simclr_forward.2} parent=5 // pred_check_branch
      %320 = sbr.rel (%p318) target = $region56
    $region55: #{mask_simclr_forward.2} parent=5 // pred_region
      _
    $region56: #{mask_simclr_forward.2} parent=5 // pred_fallthru
      _
    %p321 = scmp.le.s32.totalorder 1, %s16
    %p322 = scmp.lt.s32.totalorder %s16, 4
    %p323 = pnand %p321, %p322
    %p324 = pneg %p323
    // Predicated region
    $region57: #{mask_simclr_forward.2} parent=5 // pred_check
      _
    $region58: #{mask_simclr_forward.2} parent=5 // pred_check_branch
      %326 = sbr.rel (%p323) target = $region60
    $region59: #{mask_simclr_forward.2} parent=5 // pred_region
      %s327 = ssub.s32 %s16, 1
      %p328 = pneg %p49
      %p329 = pneg %p46
      %p330 = pneg %p70
      %p331 = pneg %p67
      %p332 = scmp.lt.s32.totalorder %s26, 0
      %s333 = scalar_select %p332, %s26, 0
      %s334 = scalar_lea.vmem %s2, %s333
      %p335 = pneg %p96
      %p336 = pneg %p93
      %p337 = pneg %p117
      %p338 = pneg %p114
      %p339 = pneg %p138
      %p340 = pneg %p135
      %p341 = pneg %p159
      %p342 = pneg %p156
      %p343 = pneg %p180
      %p344 = pneg %p177
      %p345 = pneg %p201
      %p346 = pneg %p198
      %p347 = pneg %p222
      %p348 = pneg %p219
      %p349 = pneg %p243
      %p350 = pneg %p240
      %p351 = pneg %p269
      %p352 = pneg %p266
      %p353 = scmp.lt.s32.totalorder %s25, 2
      %s354 = scalar_select %p353, %s25, 2
      %s355 = smul.addr %s354, 2
      %s356 = scalar_lea.vmem %s10, %s355
      %p357 = scmp.lt.s32.totalorder %s26, 0
      %s358 = scalar_select %p357, %s26, 0
      %s359 = scalar_lea.vmem %s2, %s358
      %p360 = scmp.lt.s32.totalorder %s25, 2
      %s361 = scalar_select %p360, %s25, 2
      %s362 = smul.addr %s361, 2
      %s363 = scalar_lea.vmem %s10, %s362
      %p365 = scmp.eq.s32.totalorder %s25, 0
      %p366 = scmp.eq.s32.totalorder %s26, 0
      %p367 = pnand %p365, %p366
      %p368 = pneg %p367
      // Predicated region
      $region61: #{mask_simclr_forward.2} parent=59 // pred_check
        _
      $region62: #{mask_simclr_forward.2} parent=59 // pred_check_branch
        %370 = sbr.rel (%p367) target = $region64
      $region63: #{mask_simclr_forward.2} parent=59 // pred_region
        %v371 = vld [vmem:[%s0] sm:$0xf]
        %v372 = vld [vmem:[%s0 + $0x4] sm:$0xf]
        %v373 = vld [vmem:[%s0 + $0x8] sm:$0xf]
        %v374 = vld [vmem:[%s0 + $0xc] sm:$0xf]
        %v375 = vld [vmem:[%s0 + $0x10] sm:$0xf]
        %v376 = vld [vmem:[%s0 + $0x14] sm:$0xf]
        %v377 = vld [vmem:[%s0 + $0x18] sm:$0xf]
        %v378 = vld [vmem:[%s0 + $0x1c] sm:$0xf]
        %v379 = vld [vmem:[%s0 + $0x20] sm:$0xf]
        %v380 = vld [vmem:[%s0 + $0x24] sm:$0xf]
        %v381 = vld [vmem:[%s0 + $0x28] sm:$0xf]
        %v382 = vld [vmem:[%s0 + $0x2c] sm:$0xf]
        %v383 = vld [vmem:[%s0 + $0x30] sm:$0xf]
        %v384 = vld [vmem:[%s0 + $0x34] sm:$0xf]
        %v385 = vld [vmem:[%s0 + $0x38] sm:$0xf]
        %v386 = vld [vmem:[%s0 + $0x3c] sm:$0xf]
        %v403 = vunpack.c.l.b16 %v371
        %v404 = vunpack.c.l.b16 %v372
        %v405 = vunpack.c.l.b16 %v373
        %v406 = vunpack.c.l.b16 %v374
        %v407 = vunpack.c.l.b16 %v375
        %v408 = vunpack.c.l.b16 %v376
        %v409 = vunpack.c.l.b16 %v377
        %v410 = vunpack.c.l.b16 %v378
        %v411 = vunpack.c.l.b16 %v379
        %v412 = vunpack.c.l.b16 %v380
        %v413 = vunpack.c.l.b16 %v381
        %v414 = vunpack.c.l.b16 %v382
        %v415 = vunpack.c.l.b16 %v383
        %v416 = vunpack.c.l.b16 %v384
        %v417 = vunpack.c.l.b16 %v385
        %v418 = vunpack.c.l.b16 %v386
        %v419 = vpack.c.b16 %v404, %v403
        %v420 = vpack.c.b16 %v406, %v405
        %v421 = vpack.c.b16 %v408, %v407
        %v422 = vpack.c.b16 %v410, %v409
        %v423 = vpack.c.b16 %v412, %v411
        %v424 = vpack.c.b16 %v414, %v413
        %v425 = vpack.c.b16 %v416, %v415
        %v426 = vpack.c.b16 %v418, %v417
        %435 = vst [vmem:[#allocation2] sm:$0xff] %v419
        %436 = vst [vmem:[#allocation2 + $0x8] sm:$0xff] %v420
        %437 = vst [vmem:[#allocation2 + $0x10] sm:$0xff] %v421
        %438 = vst [vmem:[#allocation2 + $0x18] sm:$0xff] %v422
        %439 = vst [vmem:[#allocation2 + $0x20] sm:$0xff] %v423
        %440 = vst [vmem:[#allocation2 + $0x28] sm:$0xff] %v424
        %441 = vst [vmem:[#allocation2 + $0x30] sm:$0xff] %v425
        %442 = vst [vmem:[#allocation2 + $0x38] sm:$0xff] %v426
      $region64: #{mask_simclr_forward.2} parent=59 // pred_fallthru
        _
      // Predicated region
      $region65: #{mask_simclr_forward.2} parent=59 // pred_check
        %p443 = pneg %p366
      $region66: #{mask_simclr_forward.2} parent=59 // pred_check_branch
        %445 = sbr.rel (%p443) target = $region68
      $region67: #{mask_simclr_forward.2} parent=59 // pred_region
        %446 = vst [vmem:[#allocation4] sm:$0x1] 0.0
        %447 = vst [vmem:[#allocation5] sm:$0x1] 0.0
        %448 = vst [vmem:[#allocation6] sm:$0x3] 0.0
      $region68: #{mask_simclr_forward.2} parent=59 // pred_fallthru
        _
      %s449 = smul.u32 %s26, 128
      %v450 = vld [vmem:[#allocation2] sm:$0xff]
      %v451 = vld [vmem:[#allocation2 + $0x8] sm:$0xff]
      %v452 = vld [vmem:[#allocation2 + $0x10] sm:$0xff]
      %v453 = vld [vmem:[#allocation2 + $0x18] sm:$0xff]
      %v454 = vld [vmem:[#allocation2 + $0x20] sm:$0xff]
      %v455 = vld [vmem:[#allocation2 + $0x28] sm:$0xff]
      %v456 = vld [vmem:[#allocation2 + $0x30] sm:$0xff]
      %v457 = vld [vmem:[#allocation2 + $0x38] sm:$0xff]
      %s458 = sshra.s32 %s449, 4
      %s459 = sand.u32 %s449, 15
      %s460 = smul.addr %s458, 8
      %s461 = scalar_lea.vmem [#allocation2], %s460
      %v462 = vld [vmem:[%s461] sm:$0xff]
      %v463 = vld [vmem:[%s461 + $0x8] sm:$0xff]
      %v464 = vld [vmem:[%s461 + $0x10] sm:$0xff]
      %v465 = vld [vmem:[%s461 + $0x18] sm:$0xff]
      %v466 = vld [vmem:[%s461 + $0x20] sm:$0xff]
      %v467 = vld [vmem:[%s461 + $0x28] sm:$0xff]
      %v468 = vld [vmem:[%s461 + $0x30] sm:$0xff]
      %v469 = vld [vmem:[%s461 + $0x38] sm:$0xff]
      %s470 = sshra.s32 %s449, 3
      %s471 = sand.u32 %s449, 7
      %s472 = smul.addr %s470, 4
      %s473 = scalar_lea.vmem %s1, %s472
      %v474 = vld [vmem:[%s473] sm:$0xf]
      %v475 = vld [vmem:[%s473 + $0x4] sm:$0xf]
      %v476 = vld [vmem:[%s473 + $0x8] sm:$0xf]
      %v477 = vld [vmem:[%s473 + $0xc] sm:$0xf]
      %v478 = vld [vmem:[%s473 + $0x10] sm:$0xf]
      %v479 = vld [vmem:[%s473 + $0x14] sm:$0xf]
      %v480 = vld [vmem:[%s473 + $0x18] sm:$0xf]
      %v481 = vld [vmem:[%s473 + $0x1c] sm:$0xf]
      %v482 = vld [vmem:[%s473 + $0x20] sm:$0xf]
      %v483 = vld [vmem:[%s473 + $0x24] sm:$0xf]
      %v484 = vld [vmem:[%s473 + $0x28] sm:$0xf]
      %v485 = vld [vmem:[%s473 + $0x2c] sm:$0xf]
      %v486 = vld [vmem:[%s473 + $0x30] sm:$0xf]
      %v487 = vld [vmem:[%s473 + $0x34] sm:$0xf]
      %v488 = vld [vmem:[%s473 + $0x38] sm:$0xf]
      %v489 = vld [vmem:[%s473 + $0x3c] sm:$0xf]
      %v490 = vunpack.c.l.bf16 %v462
      %v491 = vunpack.c.h.bf16 %v462
      %v492 = vunpack.c.l.bf16 %v463
      %v493 = vunpack.c.h.bf16 %v463
      %v494 = vunpack.c.l.bf16 %v464
      %v495 = vunpack.c.h.bf16 %v464
      %v496 = vunpack.c.l.bf16 %v465
      %v497 = vunpack.c.h.bf16 %v465
      %v498 = vunpack.c.l.bf16 %v466
      %v499 = vunpack.c.h.bf16 %v466
      %v500 = vunpack.c.l.bf16 %v467
      %v501 = vunpack.c.h.bf16 %v467
      %v502 = vunpack.c.l.bf16 %v468
      %v503 = vunpack.c.h.bf16 %v468
      %v504 = vunpack.c.l.bf16 %v469
      %v505 = vunpack.c.h.bf16 %v469
      %v522 = vunpack.c.l.b16 %v474
      %v523 = vunpack.c.l.b16 %v475
      %v524 = vunpack.c.l.b16 %v476
      %v525 = vunpack.c.l.b16 %v477
      %v526 = vunpack.c.l.b16 %v478
      %v527 = vunpack.c.l.b16 %v479
      %v528 = vunpack.c.l.b16 %v480
      %v529 = vunpack.c.l.b16 %v481
      %v530 = vunpack.c.l.b16 %v482
      %v531 = vunpack.c.l.b16 %v483
      %v532 = vunpack.c.l.b16 %v484
      %v533 = vunpack.c.l.b16 %v485
      %v534 = vunpack.c.l.b16 %v486
      %v535 = vunpack.c.l.b16 %v487
      %v536 = vunpack.c.l.b16 %v488
      %v537 = vunpack.c.l.b16 %v489
      %v538 = vpack.c.b16 %v523, %v522
      %v539 = vpack.c.b16 %v525, %v524
      %v540 = vpack.c.b16 %v527, %v526
      %v541 = vpack.c.b16 %v529, %v528
      %v542 = vpack.c.b16 %v531, %v530
      %v543 = vpack.c.b16 %v533, %v532
      %v544 = vpack.c.b16 %v535, %v534
      %v545 = vpack.c.b16 %v537, %v536
      %554 = vmatprep.subr.bf16.mxu0 0
      %555 = vmatpush1.bf16.msra.mxu0 %v450
      %556 = vmatprep.subr.bf16.mxu0 0
      %557 = vmatpush1.bf16.msra.mxu0 %v451
      %558 = vmatprep.subr.bf16.mxu0 0
      %559 = vmatpush1.bf16.msra.mxu0 %v452
      %560 = vmatprep.subr.bf16.mxu0 0
      %561 = vmatpush1.bf16.msra.mxu0 %v453
      %562 = vmatprep.subr.bf16.mxu0 0
      %563 = vmatpush1.bf16.msra.mxu0 %v454
      %564 = vmatprep.subr.bf16.mxu0 0
      %565 = vmatpush1.bf16.msra.mxu0 %v455
      %566 = vmatprep.subr.bf16.mxu0 0
      %567 = vmatpush1.bf16.msra.mxu0 %v456
      %568 = vmatprep.subr.bf16.mxu0 0
      %569 = vmatpush1.bf16.msra.mxu0 %v457
      %570 = vmatprep.subr.bf16.mxu0 0
      %571 = vmatpush1.bf16.msra.mxu0 0
      %572 = vmatprep.subr.bf16.mxu0 0
      %573 = vmatpush1.bf16.msra.mxu0 0
      %574 = vmatprep.subr.bf16.mxu0 0
      %575 = vmatpush1.bf16.msra.mxu0 0
      %576 = vmatprep.subr.bf16.mxu0 0
      %577 = vmatpush1.bf16.msra.mxu0 0
      %578 = vmatprep.subr.bf16.mxu0 0
      %579 = vmatpush1.bf16.msra.mxu0 0
      %580 = vmatprep.subr.bf16.mxu0 0
      %581 = vmatpush1.bf16.msra.mxu0 0
      %582 = vmatprep.subr.bf16.mxu0 0
      %583 = vmatpush1.bf16.msra.mxu0 0
      %584 = vmatprep.subr.bf16.mxu0 0
      %585 = vmatpush1.bf16.msra.mxu0 0
      %586 = vmatprep.mubr.bf16.mxu0 0
      %587 = vmatmul.mubr.bf16.gmra.mrb[0].mxu0 %v538
      %v588 = vpop.f32.mrb[0].mxu0
      %v589 = vadd.f32 0.0, %v588
      %v590 = vpop.f32.mrb[0].mxu0
      %v591 = vpop.f32.mrb[0].mxu0
      %v592 = vadd.f32 0.0, %v591
      %v593 = vpop.f32.mrb[0].mxu0
      %594 = vmatprep.mubr.bf16.mxu0 0
      %595 = vmatmul.mubr.bf16.gmra.mrb[0].mxu0 %v539
      %v596 = vpop.f32.mrb[0].mxu0
      %v597 = vadd.f32 0.0, %v596
      %v598 = vpop.f32.mrb[0].mxu0
      %v599 = vpop.f32.mrb[0].mxu0
      %v600 = vadd.f32 0.0, %v599
      %v601 = vpop.f32.mrb[0].mxu0
      %602 = vmatprep.mubr.bf16.mxu0 0
      %603 = vmatmul.mubr.bf16.gmra.mrb[0].mxu0 %v540
      %v604 = vpop.f32.mrb[0].mxu0
      %v605 = vadd.f32 0.0, %v604
      %v606 = vpop.f32.mrb[0].mxu0
      %v607 = vpop.f32.mrb[0].mxu0
      %v608 = vadd.f32 0.0, %v607
      %v609 = vpop.f32.mrb[0].mxu0
      %610 = vmatprep.mubr.bf16.mxu0 0
      %611 = vmatmul.mubr.bf16.gmra.mrb[0].mxu0 %v541
      %v612 = vpop.f32.mrb[0].mxu0
      %v613 = vadd.f32 0.0, %v612
      %v614 = vpop.f32.mrb[0].mxu0
      %v615 = vpop.f32.mrb[0].mxu0
      %v616 = vadd.f32 0.0, %v615
      %v617 = vpop.f32.mrb[0].mxu0
      %618 = vmatprep.mubr.bf16.mxu0 0
      %619 = vmatmul.mubr.bf16.gmra.mrb[0].mxu0 %v542
      %v620 = vpop.f32.mrb[0].mxu0
      %v621 = vadd.f32 0.0, %v620
      %v622 = vpop.f32.mrb[0].mxu0
      %v623 = vpop.f32.mrb[0].mxu0
      %v624 = vadd.f32 0.0, %v623
      %v625 = vpop.f32.mrb[0].mxu0
      %626 = vmatprep.mubr.bf16.mxu0 0
      %627 = vmatmul.mubr.bf16.gmra.mrb[0].mxu0 %v543
      %v628 = vpop.f32.mrb[0].mxu0
      %v629 = vadd.f32 0.0, %v628
      %v630 = vpop.f32.mrb[0].mxu0
      %v631 = vpop.f32.mrb[0].mxu0
      %v632 = vadd.f32 0.0, %v631
      %v633 = vpop.f32.mrb[0].mxu0
      %634 = vmatprep.mubr.bf16.mxu0 0
      %635 = vmatmul.mubr.bf16.gmra.mrb[0].mxu0 %v544
      %v636 = vpop.f32.mrb[0].mxu0
      %v637 = vadd.f32 0.0, %v636
      %v638 = vpop.f32.mrb[0].mxu0
      %v639 = vpop.f32.mrb[0].mxu0
      %v640 = vadd.f32 0.0, %v639
      %v641 = vpop.f32.mrb[0].mxu0
      %642 = vmatprep.mubr.bf16.mxu0 0
      %643 = vmatmul.mubr.bf16.gmra.mrb[0].mxu0 %v545
      %v644 = vpop.f32.mrb[0].mxu0
      %v645 = vadd.f32 0.0, %v644
      %v646 = vpop.f32.mrb[0].mxu0
      %v647 = vpop.f32.mrb[0].mxu0
      %v648 = vadd.f32 0.0, %v647
      %v649 = vpop.f32.mrb[0].mxu0
      %650 = vdwg.mxu0
      %v651 = vadd.f32 %v490, %v589
      %v652 = vadd.f32 %v491, %v592
      %v653 = vadd.f32 %v492, %v597
      %v654 = vadd.f32 %v493, %v600
      %v655 = vadd.f32 %v494, %v605
      %v656 = vadd.f32 %v495, %v608
      %v657 = vadd.f32 %v496, %v613
      %v658 = vadd.f32 %v497, %v616
      %v659 = vadd.f32 %v498, %v621
      %v660 = vadd.f32 %v499, %v624
      %v661 = vadd.f32 %v500, %v629
      %v662 = vadd.f32 %v501, %v632
      %v663 = vadd.f32 %v502, %v637
      %v664 = vadd.f32 %v503, %v640
      %v665 = vadd.f32 %v504, %v645
      %v666 = vadd.f32 %v505, %v648
      %v667 = vpack.c.bf16 %v652, %v651
      %v668 = vpack.c.bf16 %v654, %v653
      %v669 = vpack.c.bf16 %v656, %v655
      %v670 = vpack.c.bf16 %v658, %v657
      %v671 = vpack.c.bf16 %v660, %v659
      %v672 = vpack.c.bf16 %v662, %v661
      %v673 = vpack.c.bf16 %v664, %v663
      %v674 = vpack.c.bf16 %v666, %v665
      %s675 = smul.u32 %s25, 16
      %s676 = smul.addr %s675, 4
      %s677 = scalar_lea.vmem %s3, %s676
      %v678 = vld [vmem:[%s677] sm:$0xf]
      %v679 = vld [vmem:[%s677 + $0x4] sm:$0xf]
      %v680 = vld [vmem:[%s677 + $0x8] sm:$0xf]
      %v681 = vld [vmem:[%s677 + $0xc] sm:$0xf]
      %v682 = vld [vmem:[%s677 + $0x10] sm:$0xf]
      %v683 = vld [vmem:[%s677 + $0x14] sm:$0xf]
      %v684 = vld [vmem:[%s677 + $0x18] sm:$0xf]
      %v685 = vld [vmem:[%s677 + $0x1c] sm:$0xf]
      %v686 = vld [vmem:[%s677 + $0x20] sm:$0xf]
      %v687 = vld [vmem:[%s677 + $0x24] sm:$0xf]
      %v688 = vld [vmem:[%s677 + $0x28] sm:$0xf]
      %v689 = vld [vmem:[%s677 + $0x2c] sm:$0xf]
      %v690 = vld [vmem:[%s677 + $0x30] sm:$0xf]
      %v691 = vld [vmem:[%s677 + $0x34] sm:$0xf]
      %v692 = vld [vmem:[%s677 + $0x38] sm:$0xf]
      %v693 = vld [vmem:[%s677 + $0x3c] sm:$0xf]
      %s694 = scalar_lea.vmem %s4, %s25
      %v695 = vld [vmem:[%s694] sm:$0x1]
      %v697 = vlaneseq
      %v698 = vshrl.u32 %v697, 7
      %v699 = vsub.s32 0, %v698
      %v700 = vrot.slane %v695, %v699
      %v718 = vunpack.c.l.b16 %v678
      %v719 = vunpack.c.l.b16 %v679
      %v720 = vunpack.c.l.b16 %v680
      %v721 = vunpack.c.l.b16 %v681
      %v722 = vunpack.c.l.b16 %v682
      %v723 = vunpack.c.l.b16 %v683
      %v724 = vunpack.c.l.b16 %v684
      %v725 = vunpack.c.l.b16 %v685
      %v726 = vunpack.c.l.b16 %v686
      %v727 = vunpack.c.l.b16 %v687
      %v728 = vunpack.c.l.b16 %v688
      %v729 = vunpack.c.l.b16 %v689
      %v730 = vunpack.c.l.b16 %v690
      %v731 = vunpack.c.l.b16 %v691
      %v732 = vunpack.c.l.b16 %v692
      %v733 = vunpack.c.l.b16 %v693
      %v734 = vpack.c.b16 %v719, %v718
      %v735 = vpack.c.b16 %v721, %v720
      %v736 = vpack.c.b16 %v723, %v722
      %v737 = vpack.c.b16 %v725, %v724
      %v738 = vpack.c.b16 %v727, %v726
      %v739 = vpack.c.b16 %v729, %v728
      %v740 = vpack.c.b16 %v731, %v730
      %v741 = vpack.c.b16 %v733, %v732
      %750 = vmatprep.subr.bf16.mxu0 0
      %751 = vmatpush1.bf16.msra.mxu0 %v734
      %752 = vmatprep.subr.bf16.mxu0 0
      %753 = vmatpush1.bf16.msra.mxu0 %v735
      %754 = vmatprep.subr.bf16.mxu0 0
      %755 = vmatpush1.bf16.msra.mxu0 %v736
      %756 = vmatprep.subr.bf16.mxu0 0
      %757 = vmatpush1.bf16.msra.mxu0 %v737
      %758 = vmatprep.subr.bf16.mxu0 0
      %759 = vmatpush1.bf16.msra.mxu0 %v738
      %760 = vmatprep.subr.bf16.mxu0 0
      %761 = vmatpush1.bf16.msra.mxu0 %v739
      %762 = vmatprep.subr.bf16.mxu0 0
      %763 = vmatpush1.bf16.msra.mxu0 %v740
      %764 = vmatprep.subr.bf16.mxu0 0
      %765 = vmatpush1.bf16.msra.mxu0 %v741
      %766 = vmatprep.subr.bf16.mxu0 0
      %767 = vmatpush1.bf16.msra.mxu0 0
      %768 = vmatprep.subr.bf16.mxu0 0
      %769 = vmatpush1.bf16.msra.mxu0 0
      %770 = vmatprep.subr.bf16.mxu0 0
      %771 = vmatpush1.bf16.msra.mxu0 0
      %772 = vmatprep.subr.bf16.mxu0 0
      %773 = vmatpush1.bf16.msra.mxu0 0
      %774 = vmatprep.subr.bf16.mxu0 0
      %775 = vmatpush1.bf16.msra.mxu0 0
      %776 = vmatprep.subr.bf16.mxu0 0
      %777 = vmatpush1.bf16.msra.mxu0 0
      %778 = vmatprep.subr.bf16.mxu0 0
      %779 = vmatpush1.bf16.msra.mxu0 0
      %780 = vmatprep.subr.bf16.mxu0 0
      %781 = vmatpush1.bf16.msra.mxu0 0
      %782 = vmatprep.mubr.bf16.mxu0 0
      %783 = vmatmul.mubr.bf16.gmra.mrb[0].mxu0 %v667
      %v784 = vpop.f32.mrb[0].mxu0
      %v785 = vadd.f32 %v700, %v784
      %v786 = vpop.f32.mrb[0].mxu0
      %v787 = vpop.f32.mrb[0].mxu0
      %v788 = vadd.f32 %v700, %v787
      %v789 = vpop.f32.mrb[0].mxu0
      %790 = vmatprep.mubr.bf16.mxu0 0
      %791 = vmatmul.mubr.bf16.gmra.mrb[0].mxu0 %v668
      %v792 = vpop.f32.mrb[0].mxu0
      %v793 = vadd.f32 %v700, %v792
      %v794 = vpop.f32.mrb[0].mxu0
      %v795 = vpop.f32.mrb[0].mxu0
      %v796 = vadd.f32 %v700, %v795
      %v797 = vpop.f32.mrb[0].mxu0
      %798 = vmatprep.mubr.bf16.mxu0 0
      %799 = vmatmul.mubr.bf16.gmra.mrb[0].mxu0 %v669
      %v800 = vpop.f32.mrb[0].mxu0
      %v801 = vadd.f32 %v700, %v800
      %v802 = vpop.f32.mrb[0].mxu0
      %v803 = vpop.f32.mrb[0].mxu0
      %v804 = vadd.f32 %v700, %v803
      %v805 = vpop.f32.mrb[0].mxu0
      %806 = vmatprep.mubr.bf16.mxu0 0
      %807 = vmatmul.mubr.bf16.gmra.mrb[0].mxu0 %v670
      %v808 = vpop.f32.mrb[0].mxu0
      %v809 = vadd.f32 %v700, %v808
      %v810 = vpop.f32.mrb[0].mxu0
      %v811 = vpop.f32.mrb[0].mxu0
      %v812 = vadd.f32 %v700, %v811
      %v813 = vpop.f32.mrb[0].mxu0
      %814 = vmatprep.mubr.bf16.mxu0 0
      %815 = vmatmul.mubr.bf16.gmra.mrb[0].mxu0 %v671
      %v816 = vpop.f32.mrb[0].mxu0
      %v817 = vadd.f32 %v700, %v816
      %v818 = vpop.f32.mrb[0].mxu0
      %v819 = vpop.f32.mrb[0].mxu0
      %v820 = vadd.f32 %v700, %v819
      %v821 = vpop.f32.mrb[0].mxu0
      %822 = vmatprep.mubr.bf16.mxu0 0
      %823 = vmatmul.mubr.bf16.gmra.mrb[0].mxu0 %v672
      %v824 = vpop.f32.mrb[0].mxu0
      %v825 = vadd.f32 %v700, %v824
      %v826 = vpop.f32.mrb[0].mxu0
      %v827 = vpop.f32.mrb[0].mxu0
      %v828 = vadd.f32 %v700, %v827
      %v829 = vpop.f32.mrb[0].mxu0
      %830 = vmatprep.mubr.bf16.mxu0 0
      %831 = vmatmul.mubr.bf16.gmra.mrb[0].mxu0 %v673
      %v832 = vpop.f32.mrb[0].mxu0
      %v833 = vadd.f32 %v700, %v832
      %v834 = vpop.f32.mrb[0].mxu0
      %v835 = vpop.f32.mrb[0].mxu0
      %v836 = vadd.f32 %v700, %v835
      %v837 = vpop.f32.mrb[0].mxu0
      %838 = vmatprep.mubr.bf16.mxu0 0
      %839 = vmatmul.mubr.bf16.gmra.mrb[0].mxu0 %v674
      %v840 = vpop.f32.mrb[0].mxu0
      %v841 = vadd.f32 %v700, %v840
      %v842 = vpop.f32.mrb[0].mxu0
      %v843 = vpop.f32.mrb[0].mxu0
      %v844 = vadd.f32 %v700, %v843
      %v845 = vpop.f32.mrb[0].mxu0
      %846 = vdwg.mxu0
      %v847 = vmax.f32 %v785, 0.0
      %v848 = vmax.f32 %v788, 0.0
      %v849 = vmax.f32 %v793, 0.0
      %v850 = vmax.f32 %v796, 0.0
      %v851 = vmax.f32 %v801, 0.0
      %v852 = vmax.f32 %v804, 0.0
      %v853 = vmax.f32 %v809, 0.0
      %v854 = vmax.f32 %v812, 0.0
      %v855 = vmax.f32 %v817, 0.0
      %v856 = vmax.f32 %v820, 0.0
      %v857 = vmax.f32 %v825, 0.0
      %v858 = vmax.f32 %v828, 0.0
      %v859 = vmax.f32 %v833, 0.0
      %v860 = vmax.f32 %v836, 0.0
      %v861 = vmax.f32 %v841, 0.0
      %v862 = vmax.f32 %v844, 0.0
      %v863 = vpack.c.bf16 %v848, %v847
      %v864 = vpack.c.bf16 %v850, %v849
      %v865 = vpack.c.bf16 %v852, %v851
      %v866 = vpack.c.bf16 %v854, %v853
      %v867 = vpack.c.bf16 %v856, %v855
      %v868 = vpack.c.bf16 %v858, %v857
      %v869 = vpack.c.bf16 %v860, %v859
      %v870 = vpack.c.bf16 %v862, %v861
      %s871 = smul.addr %s675, 4
      %s872 = scalar_lea.vmem %s5, %s871
      %v873 = vld [vmem:[%s872] sm:$0xf]
      %v874 = vld [vmem:[%s872 + $0x4] sm:$0xf]
      %v875 = vld [vmem:[%s872 + $0x8] sm:$0xf]
      %v876 = vld [vmem:[%s872 + $0xc] sm:$0xf]
      %v877 = vld [vmem:[%s872 + $0x10] sm:$0xf]
      %v878 = vld [vmem:[%s872 + $0x14] sm:$0xf]
      %v879 = vld [vmem:[%s872 + $0x18] sm:$0xf]
      %v880 = vld [vmem:[%s872 + $0x1c] sm:$0xf]
      %v881 = vld [vmem:[%s872 + $0x20] sm:$0xf]
      %v882 = vld [vmem:[%s872 + $0x24] sm:$0xf]
      %v883 = vld [vmem:[%s872 + $0x28] sm:$0xf]
      %v884 = vld [vmem:[%s872 + $0x2c] sm:$0xf]
      %v885 = vld [vmem:[%s872 + $0x30] sm:$0xf]
      %v886 = vld [vmem:[%s872 + $0x34] sm:$0xf]
      %v887 = vld [vmem:[%s872 + $0x38] sm:$0xf]
      %v888 = vld [vmem:[%s872 + $0x3c] sm:$0xf]
      %s889 = scalar_lea.vmem %s6, %s25
      %v890 = vld [vmem:[%s889] sm:$0x1]
      %v892 = vlaneseq
      %v893 = vshrl.u32 %v892, 7
      %v894 = vsub.s32 0, %v893
      %v895 = vrot.slane %v890, %v894
      %v913 = vunpack.c.l.b16 %v873
      %v914 = vunpack.c.l.b16 %v874
      %v915 = vunpack.c.l.b16 %v875
      %v916 = vunpack.c.l.b16 %v876
      %v917 = vunpack.c.l.b16 %v877
      %v918 = vunpack.c.l.b16 %v878
      %v919 = vunpack.c.l.b16 %v879
      %v920 = vunpack.c.l.b16 %v880
      %v921 = vunpack.c.l.b16 %v881
      %v922 = vunpack.c.l.b16 %v882
      %v923 = vunpack.c.l.b16 %v883
      %v924 = vunpack.c.l.b16 %v884
      %v925 = vunpack.c.l.b16 %v885
      %v926 = vunpack.c.l.b16 %v886
      %v927 = vunpack.c.l.b16 %v887
      %v928 = vunpack.c.l.b16 %v888
      %v929 = vpack.c.b16 %v914, %v913
      %v930 = vpack.c.b16 %v916, %v915
      %v931 = vpack.c.b16 %v918, %v917
      %v932 = vpack.c.b16 %v920, %v919
      %v933 = vpack.c.b16 %v922, %v921
      %v934 = vpack.c.b16 %v924, %v923
      %v935 = vpack.c.b16 %v926, %v925
      %v936 = vpack.c.b16 %v928, %v927
      %945 = vmatprep.subr.bf16.mxu0 0
      %946 = vmatpush1.bf16.msra.mxu0 %v929
      %947 = vmatprep.subr.bf16.mxu0 0
      %948 = vmatpush1.bf16.msra.mxu0 %v930
      %949 = vmatprep.subr.bf16.mxu0 0
      %950 = vmatpush1.bf16.msra.mxu0 %v931
      %951 = vmatprep.subr.bf16.mxu0 0
      %952 = vmatpush1.bf16.msra.mxu0 %v932
      %953 = vmatprep.subr.bf16.mxu0 0
      %954 = vmatpush1.bf16.msra.mxu0 %v933
      %955 = vmatprep.subr.bf16.mxu0 0
      %956 = vmatpush1.bf16.msra.mxu0 %v934
      %957 = vmatprep.subr.bf16.mxu0 0
      %958 = vmatpush1.bf16.msra.mxu0 %v935
      %959 = vmatprep.subr.bf16.mxu0 0
      %960 = vmatpush1.bf16.msra.mxu0 %v936
      %961 = vmatprep.subr.bf16.mxu0 0
      %962 = vmatpush1.bf16.msra.mxu0 0
      %963 = vmatprep.subr.bf16.mxu0 0
      %964 = vmatpush1.bf16.msra.mxu0 0
      %965 = vmatprep.subr.bf16.mxu0 0
      %966 = vmatpush1.bf16.msra.mxu0 0
      %967 = vmatprep.subr.bf16.mxu0 0
      %968 = vmatpush1.bf16.msra.mxu0 0
      %969 = vmatprep.subr.bf16.mxu0 0
      %970 = vmatpush1.bf16.msra.mxu0 0
      %971 = vmatprep.subr.bf16.mxu0 0
      %972 = vmatpush1.bf16.msra.mxu0 0
      %973 = vmatprep.subr.bf16.mxu0 0
      %974 = vmatpush1.bf16.msra.mxu0 0
      %975 = vmatprep.subr.bf16.mxu0 0
      %976 = vmatpush1.bf16.msra.mxu0 0
      %977 = vmatprep.mubr.bf16.mxu0 0
      %978 = vmatmul.mubr.bf16.gmra.mrb[0].mxu0 %v863
      %v979 = vpop.f32.mrb[0].mxu0
      %v980 = vadd.f32 %v895, %v979
      %v981 = vpop.f32.mrb[0].mxu0
      %v982 = vpop.f32.mrb[0].mxu0
      %v983 = vadd.f32 %v895, %v982
      %v984 = vpop.f32.mrb[0].mxu0
      %985 = vmatprep.mubr.bf16.mxu0 0
      %986 = vmatmul.mubr.bf16.gmra.mrb[0].mxu0 %v864
      %v987 = vpop.f32.mrb[0].mxu0
      %v988 = vadd.f32 %v895, %v987
      %v989 = vpop.f32.mrb[0].mxu0
      %v990 = vpop.f32.mrb[0].mxu0
      %v991 = vadd.f32 %v895, %v990
      %v992 = vpop.f32.mrb[0].mxu0
      %993 = vmatprep.mubr.bf16.mxu0 0
      %994 = vmatmul.mubr.bf16.gmra.mrb[0].mxu0 %v865
      %v995 = vpop.f32.mrb[0].mxu0
      %v996 = vadd.f32 %v895, %v995
      %v997 = vpop.f32.mrb[0].mxu0
      %v998 = vpop.f32.mrb[0].mxu0
      %v999 = vadd.f32 %v895, %v998
      %v1000 = vpop.f32.mrb[0].mxu0
      %1001 = vmatprep.mubr.bf16.mxu0 0
      %1002 = vmatmul.mubr.bf16.gmra.mrb[0].mxu0 %v866
      %v1003 = vpop.f32.mrb[0].mxu0
      %v1004 = vadd.f32 %v895, %v1003
      %v1005 = vpop.f32.mrb[0].mxu0
      %v1006 = vpop.f32.mrb[0].mxu0
      %v1007 = vadd.f32 %v895, %v1006
      %v1008 = vpop.f32.mrb[0].mxu0
      %1009 = vmatprep.mubr.bf16.mxu0 0
      %1010 = vmatmul.mubr.bf16.gmra.mrb[0].mxu0 %v867
      %v1011 = vpop.f32.mrb[0].mxu0
      %v1012 = vadd.f32 %v895, %v1011
      %v1013 = vpop.f32.mrb[0].mxu0
      %v1014 = vpop.f32.mrb[0].mxu0
      %v1015 = vadd.f32 %v895, %v1014
      %v1016 = vpop.f32.mrb[0].mxu0
      %1017 = vmatprep.mubr.bf16.mxu0 0
      %1018 = vmatmul.mubr.bf16.gmra.mrb[0].mxu0 %v868
      %v1019 = vpop.f32.mrb[0].mxu0
      %v1020 = vadd.f32 %v895, %v1019
      %v1021 = vpop.f32.mrb[0].mxu0
      %v1022 = vpop.f32.mrb[0].mxu0
      %v1023 = vadd.f32 %v895, %v1022
      %v1024 = vpop.f32.mrb[0].mxu0
      %1025 = vmatprep.mubr.bf16.mxu0 0
      %1026 = vmatmul.mubr.bf16.gmra.mrb[0].mxu0 %v869
      %v1027 = vpop.f32.mrb[0].mxu0
      %v1028 = vadd.f32 %v895, %v1027
      %v1029 = vpop.f32.mrb[0].mxu0
      %v1030 = vpop.f32.mrb[0].mxu0
      %v1031 = vadd.f32 %v895, %v1030
      %v1032 = vpop.f32.mrb[0].mxu0
      %1033 = vmatprep.mubr.bf16.mxu0 0
      %1034 = vmatmul.mubr.bf16.gmra.mrb[0].mxu0 %v870
      %v1035 = vpop.f32.mrb[0].mxu0
      %v1036 = vadd.f32 %v895, %v1035
      %v1037 = vpop.f32.mrb[0].mxu0
      %v1038 = vpop.f32.mrb[0].mxu0
      %v1039 = vadd.f32 %v895, %v1038
      %v1040 = vpop.f32.mrb[0].mxu0
      %1041 = vdwg.mxu0
      %v1042 = vmax.f32 %v980, 0.0
      %v1043 = vmax.f32 %v983, 0.0
      %v1044 = vmax.f32 %v988, 0.0
      %v1045 = vmax.f32 %v991, 0.0
      %v1046 = vmax.f32 %v996, 0.0
      %v1047 = vmax.f32 %v999, 0.0
      %v1048 = vmax.f32 %v1004, 0.0
      %v1049 = vmax.f32 %v1007, 0.0
      %v1050 = vmax.f32 %v1012, 0.0
      %v1051 = vmax.f32 %v1015, 0.0
      %v1052 = vmax.f32 %v1020, 0.0
      %v1053 = vmax.f32 %v1023, 0.0
      %v1054 = vmax.f32 %v1028, 0.0
      %v1055 = vmax.f32 %v1031, 0.0
      %v1056 = vmax.f32 %v1036, 0.0
      %v1057 = vmax.f32 %v1039, 0.0
      %v1058 = vpack.c.bf16 %v1043, %v1042
      %v1059 = vpack.c.bf16 %v1045, %v1044
      %v1060 = vpack.c.bf16 %v1047, %v1046
      %v1061 = vpack.c.bf16 %v1049, %v1048
      %v1062 = vpack.c.bf16 %v1051, %v1050
      %v1063 = vpack.c.bf16 %v1053, %v1052
      %v1064 = vpack.c.bf16 %v1055, %v1054
      %v1065 = vpack.c.bf16 %v1057, %v1056
      %s1066 = smul.addr %s458, 8
      %s1067 = scalar_lea.vmem [#allocation3], %s1066
      %1068 = vst [vmem:[%s1067] sm:$0xff] %v1058
      %1069 = vst [vmem:[%s1067 + $0x8] sm:$0xff] %v1059
      %1070 = vst [vmem:[%s1067 + $0x10] sm:$0xff] %v1060
      %1071 = vst [vmem:[%s1067 + $0x18] sm:$0xff] %v1061
      %1072 = vst [vmem:[%s1067 + $0x20] sm:$0xff] %v1062
      %1073 = vst [vmem:[%s1067 + $0x28] sm:$0xff] %v1063
      %1074 = vst [vmem:[%s1067 + $0x30] sm:$0xff] %v1064
      %1075 = vst [vmem:[%s1067 + $0x38] sm:$0xff] %v1065
      %v1076 = vlaneseq
      %v1077 = vshrl.u32 %v1076, 7
      %v1078 = vadd.s32 %v1077, 8
      %v1079 = vadd.s32 %v1077, 16
      %v1080 = vadd.s32 %v1077, 24
      %v1081 = vadd.s32 %v1077, 32
      %v1082 = vadd.s32 %v1077, 40
      %v1083 = vadd.s32 %v1077, 48
      %v1084 = vadd.s32 %v1077, 56
      %v1085 = vadd.s32 %v1077, 64
      %v1086 = vadd.s32 %v1077, 72
      %v1087 = vadd.s32 %v1077, 80
      %v1088 = vadd.s32 %v1077, 88
      %v1089 = vadd.s32 %v1077, 96
      %v1090 = vadd.s32 %v1077, 104
      %v1091 = vadd.s32 %v1077, 112
      %v1092 = vadd.s32 %v1077, 120
      %v1093 = vstv %s449
      %v1094 = vadd.s32 %v1093, %v1077
      %v1095 = vadd.s32 %v1093, %v1078
      %v1096 = vadd.s32 %v1093, %v1079
      %v1097 = vadd.s32 %v1093, %v1080
      %v1098 = vadd.s32 %v1093, %v1081
      %v1099 = vadd.s32 %v1093, %v1082
      %v1100 = vadd.s32 %v1093, %v1083
      %v1101 = vadd.s32 %v1093, %v1084
      %v1102 = vadd.s32 %v1093, %v1085
      %v1103 = vadd.s32 %v1093, %v1086
      %v1104 = vadd.s32 %v1093, %v1087
      %v1105 = vadd.s32 %v1093, %v1088
      %v1106 = vadd.s32 %v1093, %v1089
      %v1107 = vadd.s32 %v1093, %v1090
      %v1108 = vadd.s32 %v1093, %v1091
      %v1109 = vadd.s32 %v1093, %v1092
      %vm1110 = vcmp.lt.s32.totalorder %v1094, 16
      %vm1111 = vcmp.lt.s32.totalorder %v1095, 16
      %vm1112 = vcmp.lt.s32.totalorder %v1096, 16
      %vm1113 = vcmp.lt.s32.totalorder %v1097, 16
      %vm1114 = vcmp.lt.s32.totalorder %v1098, 16
      %vm1115 = vcmp.lt.s32.totalorder %v1099, 16
      %vm1116 = vcmp.lt.s32.totalorder %v1100, 16
      %vm1117 = vcmp.lt.s32.totalorder %v1101, 16
      %vm1118 = vcmp.lt.s32.totalorder %v1102, 16
      %vm1119 = vcmp.lt.s32.totalorder %v1103, 16
      %vm1120 = vcmp.lt.s32.totalorder %v1104, 16
      %vm1121 = vcmp.lt.s32.totalorder %v1105, 16
      %vm1122 = vcmp.lt.s32.totalorder %v1106, 16
      %vm1123 = vcmp.lt.s32.totalorder %v1107, 16
      %vm1124 = vcmp.lt.s32.totalorder %v1108, 16
      %vm1125 = vcmp.lt.s32.totalorder %v1109, 16
      %v1126 = vsel %vm1110, 1, 0
      %v1127 = vsel %vm1111, 1, 0
      %v1128 = vsel %vm1112, 1, 0
      %v1129 = vsel %vm1113, 1, 0
      %v1130 = vsel %vm1114, 1, 0
      %v1131 = vsel %vm1115, 1, 0
      %v1132 = vsel %vm1116, 1, 0
      %v1133 = vsel %vm1117, 1, 0
      %v1134 = vsel %vm1118, 1, 0
      %v1135 = vsel %vm1119, 1, 0
      %v1136 = vsel %vm1120, 1, 0
      %v1137 = vsel %vm1121, 1, 0
      %v1138 = vsel %vm1122, 1, 0
      %v1139 = vsel %vm1123, 1, 0
      %v1140 = vsel %vm1124, 1, 0
      %v1141 = vsel %vm1125, 1, 0
      %v1142 = vcvt.s32.f32 %v1126
      %v1143 = vcvt.s32.f32 %v1127
      %v1144 = vcvt.s32.f32 %v1128
      %v1145 = vcvt.s32.f32 %v1129
      %v1146 = vcvt.s32.f32 %v1130
      %v1147 = vcvt.s32.f32 %v1131
      %v1148 = vcvt.s32.f32 %v1132
      %v1149 = vcvt.s32.f32 %v1133
      %v1150 = vcvt.s32.f32 %v1134
      %v1151 = vcvt.s32.f32 %v1135
      %v1152 = vcvt.s32.f32 %v1136
      %v1153 = vcvt.s32.f32 %v1137
      %v1154 = vcvt.s32.f32 %v1138
      %v1155 = vcvt.s32.f32 %v1139
      %v1156 = vcvt.s32.f32 %v1140
      %v1157 = vcvt.s32.f32 %v1141
      %v1158 = vmul.f32 %v1042, %v1142
      %v1159 = vmul.f32 %v1043, %v1143
      %v1160 = vmul.f32 %v1044, %v1144
      %v1161 = vmul.f32 %v1045, %v1145
      %v1162 = vmul.f32 %v1046, %v1146
      %v1163 = vmul.f32 %v1047, %v1147
      %v1164 = vmul.f32 %v1048, %v1148
      %v1165 = vmul.f32 %v1049, %v1149
      %v1166 = vmul.f32 %v1050, %v1150
      %v1167 = vmul.f32 %v1051, %v1151
      %v1168 = vmul.f32 %v1052, %v1152
      %v1169 = vmul.f32 %v1053, %v1153
      %v1170 = vmul.f32 %v1054, %v1154
      %v1171 = vmul.f32 %v1055, %v1155
      %v1172 = vmul.f32 %v1056, %v1156
      %v1173 = vmul.f32 %v1057, %v1157
      %v1174 = vld [vmem:[#allocation4] sm:$0x1]
      %v1175 = vadd.f32 %v1158, %v1159
      %v1176 = vadd.f32 %v1175, %v1160
      %v1177 = vadd.f32 %v1176, %v1161
      %v1178 = vadd.f32 %v1177, %v1162
      %v1179 = vadd.f32 %v1178, %v1163
      %v1180 = vadd.f32 %v1179, %v1164
      %v1181 = vadd.f32 %v1180, %v1165
      %v1182 = vadd.f32 %v1181, %v1166
      %v1183 = vadd.f32 %v1182, %v1167
      %v1184 = vadd.f32 %v1183, %v1168
      %v1185 = vadd.f32 %v1184, %v1169
      %v1186 = vadd.f32 %v1185, %v1170
      %v1187 = vadd.f32 %v1186, %v1171
      %v1188 = vadd.f32 %v1187, %v1172
      %v1189 = vadd.f32 %v1188, %v1173
      %v1190 = vrot.slane %v1189, 4
      %v1191 = vadd.f32 %v1189, %v1190
      %v1192 = vrot.slane %v1191, 2
      %v1193 = vadd.f32 %v1191, %v1192
      %v1194 = vrot.slane %v1193, 1
      %v1195 = vadd.f32 %v1193, %v1194
      %v1196 = vadd.f32 %v1174, %v1195
      %1197 = vst [vmem:[#allocation4] sm:$0x1] %v1196
      %v1198 = vld [vmem:[#allocation5] sm:$0x1]
      %v1199 = vmul.f32 %v1158, %v1158
      %v1200 = vmul.f32 %v1159, %v1159
      %v1201 = vmul.f32 %v1160, %v1160
      %v1202 = vmul.f32 %v1161, %v1161
      %v1203 = vmul.f32 %v1162, %v1162
      %v1204 = vmul.f32 %v1163, %v1163
      %v1205 = vmul.f32 %v1164, %v1164
      %v1206 = vmul.f32 %v1165, %v1165
      %v1207 = vmul.f32 %v1166, %v1166
      %v1208 = vmul.f32 %v1167, %v1167
      %v1209 = vmul.f32 %v1168, %v1168
      %v1210 = vmul.f32 %v1169, %v1169
      %v1211 = vmul.f32 %v1170, %v1170
      %v1212 = vmul.f32 %v1171, %v1171
      %v1213 = vmul.f32 %v1172, %v1172
      %v1214 = vmul.f32 %v1173, %v1173
      %v1215 = vadd.f32 %v1199, %v1200
      %v1216 = vadd.f32 %v1215, %v1201
      %v1217 = vadd.f32 %v1216, %v1202
      %v1218 = vadd.f32 %v1217, %v1203
      %v1219 = vadd.f32 %v1218, %v1204
      %v1220 = vadd.f32 %v1219, %v1205
      %v1221 = vadd.f32 %v1220, %v1206
      %v1222 = vadd.f32 %v1221, %v1207
      %v1223 = vadd.f32 %v1222, %v1208
      %v1224 = vadd.f32 %v1223, %v1209
      %v1225 = vadd.f32 %v1224, %v1210
      %v1226 = vadd.f32 %v1225, %v1211
      %v1227 = vadd.f32 %v1226, %v1212
      %v1228 = vadd.f32 %v1227, %v1213
      %v1229 = vadd.f32 %v1228, %v1214
      %v1230 = vrot.slane %v1229, 4
      %v1231 = vadd.f32 %v1229, %v1230
      %v1232 = vrot.slane %v1231, 2
      %v1233 = vadd.f32 %v1231, %v1232
      %v1234 = vrot.slane %v1233, 1
      %v1235 = vadd.f32 %v1233, %v1234
      %v1236 = vadd.f32 %v1198, %v1235
      %1237 = vst [vmem:[#allocation5] sm:$0x1] %v1236
      %v1238 = vld [vmem:[#allocation6] sm:$0x3]
      %v1239 = vld [vmem:[%s359] sm:$0x1]
      %v1240 = vunpack.c.l.bf16 %v1239
      %1241 = vmatprep.subr.mxu0 0.0
      %1242 = vmatpush1.msra.mxu0 %v1042
      %1243 = vmatprep.subr.mxu0 0.0
      %1244 = vmatpush1.msra.mxu0 %v1043
      %1245 = vmatprep.subr.mxu0 0.0
      %1246 = vmatpush1.msra.mxu0 %v1044
      %1247 = vmatprep.subr.mxu0 0.0
      %1248 = vmatpush1.msra.mxu0 %v1045
      %1249 = vmatprep.subr.mxu0 0.0
      %1250 = vmatpush1.msra.mxu0 %v1046
      %1251 = vmatprep.subr.mxu0 0.0
      %1252 = vmatpush1.msra.mxu0 %v1047
      %1253 = vmatprep.subr.mxu0 0.0
      %1254 = vmatpush1.msra.mxu0 %v1048
      %1255 = vmatprep.subr.mxu0 0.0
      %1256 = vmatpush1.msra.mxu0 %v1049
      %1257 = vmatprep.subr.mxu0 0.0
      %1258 = vmatpush1.msra.mxu0 %v1050
      %1259 = vmatprep.subr.mxu0 0.0
      %1260 = vmatpush1.msra.mxu0 %v1051
      %1261 = vmatprep.subr.mxu0 0.0
      %1262 = vmatpush1.msra.mxu0 %v1052
      %1263 = vmatprep.subr.mxu0 0.0
      %1264 = vmatpush1.msra.mxu0 %v1053
      %1265 = vmatprep.subr.mxu0 0.0
      %1266 = vmatpush1.msra.mxu0 %v1054
      %1267 = vmatprep.subr.mxu0 0.0
      %1268 = vmatpush1.msra.mxu0 %v1055
      %1269 = vmatprep.subr.mxu0 0.0
      %1270 = vmatpush1.msra.mxu0 %v1056
      %1271 = vmatprep.subr.mxu0 0.0
      %1272 = vmatpush1.msra.mxu0 %v1057
      %1273 = vmatprep.subr.mxu0 0.0
      %1274 = vmatpush1.msra.mxu0 0.0
      %1275 = vmatprep.subr.mxu0 0.0
      %1276 = vmatpush1.msra.mxu0 0.0
      %1277 = vmatprep.subr.mxu0 0.0
      %1278 = vmatpush1.msra.mxu0 0.0
      %1279 = vmatprep.subr.mxu0 0.0
      %1280 = vmatpush1.msra.mxu0 0.0
      %1281 = vmatprep.subr.mxu0 0.0
      %1282 = vmatpush1.msra.mxu0 0.0
      %1283 = vmatprep.subr.mxu0 0.0
      %1284 = vmatpush1.msra.mxu0 0.0
      %1285 = vmatprep.subr.mxu0 0.0
      %1286 = vmatpush1.msra.mxu0 0.0
      %1287 = vmatprep.subr.mxu0 0.0
      %1288 = vmatpush1.msra.mxu0 0.0
      %1289 = vmatprep.subr.mxu0 0.0
      %1290 = vmatpush1.msra.mxu0 0.0
      %1291 = vmatprep.subr.mxu0 0.0
      %1292 = vmatpush1.msra.mxu0 0.0
      %1293 = vmatprep.subr.mxu0 0.0
      %1294 = vmatpush1.msra.mxu0 0.0
      %1295 = vmatprep.subr.mxu0 0.0
      %1296 = vmatpush1.msra.mxu0 0.0
      %1297 = vmatprep.subr.mxu0 0.0
      %1298 = vmatpush1.msra.mxu0 0.0
      %1299 = vmatprep.subr.mxu0 0.0
      %1300 = vmatpush1.msra.mxu0 0.0
      %1301 = vmatprep.subr.mxu0 0.0
      %1302 = vmatpush1.msra.mxu0 0.0
      %1303 = vmatprep.subr.mxu0 0.0
      %1304 = vmatpush1.msra.mxu0 0.0
      %1305 = vmatprep.mubr.f32.mxu0 0.0
      %1306 = vmatmul.mubr.f32.gmra.mrb[0].mxu0 %v1240
      %v1307 = vpop.f32.mrb[0].mxu0
      %v1308 = vadd.f32 0.0, %v1307
      %v1309 = vpop.f32.mrb[0].mxu0
      %1310 = vdwg.mxu0
      %v1311 = vadd.f32 %v1238, %v1308
      %1312 = vst [vmem:[#allocation6] sm:$0x3] %v1311
      %v1313 = vld [vmem:[#allocation4] sm:$0x1]
      %v1314 = vmul.f32 %v1313, 0.0625
      %v1315 = vld [vmem:[#allocation5] sm:$0x1]
      %v1316 = vmul.f32 %v1315, 0.0625
      %v1317 = vmul.f32 %v1314, %v1314
      %v1318 = vsub.f32 %v1316, %v1317
      %v1319 = vmax.f32 %v1318, 0.0
      %s1320 = scalar_lea.vmem %s7, %s25
      %v1321 = vld [vmem:[%s1320] sm:$0x1]
      %v1322 = vadd.f32 %v1319, 1e-05
      %v1323 = vrsqrt.pop %v1322
      %v1324 = vmul.f32 %v1321, %v1323
      %s1325 = scalar_lea.vmem %s8, %s25
      %v1326 = vld [vmem:[%s1325] sm:$0x1]
      %v1327 = vmul.f32 %v1314, %v1324
      %v1328 = vsub.f32 %v1326, %v1327
      // Predicated region
      $region69: #{mask_simclr_forward.2} parent=59 // pred_check
        %p1329 = pneg %p366
      $region70: #{mask_simclr_forward.2} parent=59 // pred_check_branch
        %1331 = sbr.rel (%p1329) target = $region72
      $region71: #{mask_simclr_forward.2} parent=59 // pred_region
        %v1332 = vld [vmem:[#allocation6] sm:$0x3]
        %v1334 = vlaneseq
        %v1335 = vshrl.u32 %v1334, 7
        %v1336 = vsub.s32 0, %v1335
        %v1337 = vrot.slane %v1324, %v1336
        %v1339 = vmul.f32 %v1332, %v1337
        %v1340 = vld [vmem:[%s9] sm:$0x3]
        %1342 = vset.pattern.permute.xlu0 0
        %1343 = vperm.xlu0 %1342, %v1340
        %v1344 = vpop.permute.xlu0 %1343
        %v1347 = vlaneseq
        %v1348 = vshrl.u32 %v1347, 7
        %v1349 = vsub.s32 0, %v1348
        %v1350 = vrot.slane %v1328, %v1349
        %v1352 = vmul.f32 %v1344, %v1350
        %v1353 = vadd.f32 %v1339, %v1352
        %1354 = vst [vmem:[%s363] sm:$0x3] %v1353
      $region72: #{mask_simclr_forward.2} parent=59 // pred_fallthru
        _
      %s1355 = sadd.s32 %s25, 1
      %p1356 = scmp.lt.s32.totalorder %s1355, 3
      %p1357 = pnand %p366, %p1356
      %p1358 = pneg %p1357
      // Predicated region
      $region73: #{mask_simclr_forward.2} parent=59 // pred_check
        _
      $region74: #{mask_simclr_forward.2} parent=59 // pred_check_branch
        %1360 = sbr.rel (%p1357) target = $region76
      $region75: #{mask_simclr_forward.2} parent=59 // pred_region
        %v1361 = vld [vmem:[#allocation3] sm:$0xff]
        %v1362 = vld [vmem:[#allocation3 + $0x8] sm:$0xff]
        %v1363 = vld [vmem:[#allocation3 + $0x10] sm:$0xff]
        %v1364 = vld [vmem:[#allocation3 + $0x18] sm:$0xff]
        %v1365 = vld [vmem:[#allocation3 + $0x20] sm:$0xff]
        %v1366 = vld [vmem:[#allocation3 + $0x28] sm:$0xff]
        %v1367 = vld [vmem:[#allocation3 + $0x30] sm:$0xff]
        %v1368 = vld [vmem:[#allocation3 + $0x38] sm:$0xff]
        %v1369 = vunpack.c.l.bf16 %v1361
        %v1370 = vunpack.c.h.bf16 %v1361
        %v1371 = vunpack.c.l.bf16 %v1362
        %v1372 = vunpack.c.h.bf16 %v1362
        %v1373 = vunpack.c.l.bf16 %v1363
        %v1374 = vunpack.c.h.bf16 %v1363
        %v1375 = vunpack.c.l.bf16 %v1364
        %v1376 = vunpack.c.h.bf16 %v1364
        %v1377 = vunpack.c.l.bf16 %v1365
        %v1378 = vunpack.c.h.bf16 %v1365
        %v1379 = vunpack.c.l.bf16 %v1366
        %v1380 = vunpack.c.h.bf16 %v1366
        %v1381 = vunpack.c.l.bf16 %v1367
        %v1382 = vunpack.c.h.bf16 %v1367
        %v1383 = vunpack.c.l.bf16 %v1368
        %v1384 = vunpack.c.h.bf16 %v1368
        %v1386 = vlaneseq
        %v1387 = vshrl.u32 %v1386, 7
        %v1388 = vsub.s32 0, %v1387
        %v1389 = vrot.slane %v1324, %v1388
        %v1391 = vmul.f32 %v1369, %v1389
        %v1392 = vmul.f32 %v1370, %v1389
        %v1393 = vmul.f32 %v1371, %v1389
        %v1394 = vmul.f32 %v1372, %v1389
        %v1395 = vmul.f32 %v1373, %v1389
        %v1396 = vmul.f32 %v1374, %v1389
        %v1397 = vmul.f32 %v1375, %v1389
        %v1398 = vmul.f32 %v1376, %v1389
        %v1399 = vmul.f32 %v1377, %v1389
        %v1400 = vmul.f32 %v1378, %v1389
        %v1401 = vmul.f32 %v1379, %v1389
        %v1402 = vmul.f32 %v1380, %v1389
        %v1403 = vmul.f32 %v1381, %v1389
        %v1404 = vmul.f32 %v1382, %v1389
        %v1405 = vmul.f32 %v1383, %v1389
        %v1406 = vmul.f32 %v1384, %v1389
        %v1408 = vlaneseq
        %v1409 = vshrl.u32 %v1408, 7
        %v1410 = vsub.s32 0, %v1409
        %v1411 = vrot.slane %v1328, %v1410
        %v1413 = vadd.f32 %v1391, %v1411
        %v1414 = vadd.f32 %v1392, %v1411
        %v1415 = vadd.f32 %v1393, %v1411
        %v1416 = vadd.f32 %v1394, %v1411
        %v1417 = vadd.f32 %v1395, %v1411
        %v1418 = vadd.f32 %v1396, %v1411
        %v1419 = vadd.f32 %v1397, %v1411
        %v1420 = vadd.f32 %v1398, %v1411
        %v1421 = vadd.f32 %v1399, %v1411
        %v1422 = vadd.f32 %v1400, %v1411
        %v1423 = vadd.f32 %v1401, %v1411
        %v1424 = vadd.f32 %v1402, %v1411
        %v1425 = vadd.f32 %v1403, %v1411
        %v1426 = vadd.f32 %v1404, %v1411
        %v1427 = vadd.f32 %v1405, %v1411
        %v1428 = vadd.f32 %v1406, %v1411
        %v1429 = vpack.c.bf16 %v1414, %v1413
        %v1430 = vpack.c.bf16 %v1416, %v1415
        %v1431 = vpack.c.bf16 %v1418, %v1417
        %v1432 = vpack.c.bf16 %v1420, %v1419
        %v1433 = vpack.c.bf16 %v1422, %v1421
        %v1434 = vpack.c.bf16 %v1424, %v1423
        %v1435 = vpack.c.bf16 %v1426, %v1425
        %v1436 = vpack.c.bf16 %v1428, %v1427
        %1437 = vst [vmem:[#allocation2] sm:$0xff] %v1429
        %1438 = vst [vmem:[#allocation2 + $0x8] sm:$0xff] %v1430
        %1439 = vst [vmem:[#allocation2 + $0x10] sm:$0xff] %v1431
        %1440 = vst [vmem:[#allocation2 + $0x18] sm:$0xff] %v1432
        %1441 = vst [vmem:[#allocation2 + $0x20] sm:$0xff] %v1433
        %1442 = vst [vmem:[#allocation2 + $0x28] sm:$0xff] %v1434
        %1443 = vst [vmem:[#allocation2 + $0x30] sm:$0xff] %v1435
        %1444 = vst [vmem:[#allocation2 + $0x38] sm:$0xff] %v1436
      $region76: #{mask_simclr_forward.2} parent=59 // pred_fallthru
        _
      %p1445 = scmp.lt.s32.totalorder %s25, 2
      %s1446 = scalar_select %p1445, %s25, 2
      %s1447 = smul.addr %s1446, 2
      %s1448 = scalar_lea.vmem %s10, %s1447
      // Predicated region
      $region77: #{mask_simclr_forward.2} parent=59 // pred_check
        %p1449 = pneg %p266
      $region78: #{mask_simclr_forward.2} parent=59 // pred_check_branch
        %1451 = sbr.rel (%p1449) target = $region80
      $region79: #{mask_simclr_forward.2} parent=59 // pred_region
        _
      $region80: #{mask_simclr_forward.2} parent=59 // pred_fallthru
        _
    $region60: #{mask_simclr_forward.2} parent=5 // pred_fallthru
      _
    %p1452 = scmp.le.s32.totalorder 2, %s16
    // Predicated region
    $region81: #{mask_simclr_forward.2} parent=5 // pred_check
      %p1453 = pneg %p1452
    $region82: #{mask_simclr_forward.2} parent=5 // pred_check_branch
      %1455 = sbr.rel (%p1453) target = $region84
    $region83: #{mask_simclr_forward.2} parent=5 // pred_region
      %s1456 = ssub.s32 %s16, 2
      // Predicated region
      $region85: #{mask_simclr_forward.2} parent=83 // pred_check
        %p1457 = pneg %p272
      $region86: #{mask_simclr_forward.2} parent=83 // pred_check_branch
        %1459 = sbr.rel (%p1457) target = $region88
      $region87: #{mask_simclr_forward.2} parent=83 // pred_region
        %p1460 = scmp.lt.s32.totalorder %s27, 2
        %s1461 = scalar_select %p1460, %s27, 2
        %s1462 = smul.addr %s1461, 2
        %s1463 = scalar_lea.vmem %s10, %s1462
      $region88: #{mask_simclr_forward.2} parent=83 // pred_fallthru
        _
    $region84: #{mask_simclr_forward.2} parent=5 // pred_fallthru
      _
  $region6: #{mask_simclr_forward.2} parent=0 // loop_footer
    %s20 = sadd.s32 1, %s16
  $region7: #{mask_simclr_forward.2} parent=0 // loop_footer_branch
    %15 = sbr.rel target = $region3
  $region8: #{mask_simclr_forward.2} parent=0 // loop_exit
    _

// kernel: mask_simclr_forward.3
$region0: #{mask_simclr_forward.3}
  #allocation0 [shape = 'u32[]', space=smem, size = 0x4, offset = 0x4, fixed_abs, tag = 'smem constant byte address 0x4 - core index']
  #allocation1 [shape = 'u32[144,128]{1,0:T(1,128)}', space=vmem, size = 0x12000, scoped, tag = 'internal scratch']
  %s0 = inlined_call_operand.vmem [shape: f32[2,384], index: 0, kind: input, shape index: {}]
  %s1 = inlined_call_operand.vmem [shape: f32[1,384], index: 1, kind: input, shape index: {}]
  %s2 = inlined_call_operand.vmem [shape: bf16[2,384,512], index: 2, kind: input, shape index: {}]
  %s3 = inlined_call_operand.vmem [shape: f32[2,1,512], index: 3, kind: input, shape index: {}]
  %s4 = inlined_call_operand.vmem [shape: f32[2,1,512], index: 4, kind: input, shape index: {}]
  %s5 = inlined_call_operand.vmem [shape: bf16[2,512,512], index: 5, kind: input, shape index: {}]
  %s6 = inlined_call_operand.vmem [shape: f32[2,1,512], index: 6, kind: input, shape index: {}]
  %s7 = inlined_call_operand.vmem [shape: f32[2,1,512], index: 7, kind: input, shape index: {}]
  %s8 = inlined_call_operand.vmem [shape: bf16[2,512,512], index: 8, kind: input, shape index: {}]
  %s9 = inlined_call_operand.vmem [shape: f32[2,2,512], index: 9, kind: output, shape index: {}]
  %s10 = sld [smem:[#allocation0]]
  $region69: #{mask_simclr_forward.3} parent=0
    _
  %s12 = ssub.s32 1, %s10
  %s13 = scalar_select 0, %s12, %s10
  loop: start=0, step=1, limit=4
  $region2: #{mask_simclr_forward.3} parent=0 // loop_pre_header
    _
  $region3: #{mask_simclr_forward.3} parent=0 // loop_header
    %s15 = sphi 0, %s19
    %p16 = scmp.ge.s32.totalorder %s15, 4
    %s23 = sphi 0, %s23
    %s25 = sphi 0, %s23
    %s26 = sphi 0, %s25
    %s40 = sphi 0, %s26
    %s44 = sphi 0, %s44
    %s46 = sphi 0, %s44
    %s47 = sphi 0, %s46
    %s61 = sphi 0, %s47
    %s67 = sphi 0, %s69
    %s70 = sphi 0, %s67
    %s71 = sphi 0, %s70
    %s87 = sphi 0, %s71
    %s93 = sphi 0, %s95
    %s96 = sphi 0, %s93
    %s97 = sphi 0, %s96
    %s113 = sphi 0, %s97
    %s119 = sphi 0, %s121
    %s122 = sphi 0, %s119
    %s123 = sphi 0, %s122
    %s139 = sphi 0, %s123
    %s145 = sphi 0, %s147
    %s148 = sphi 0, %s145
    %s149 = sphi 0, %s148
    %s165 = sphi 0, %s149
    %s171 = sphi 0, %s173
    %s174 = sphi 0, %s171
    %s175 = sphi 0, %s174
    %s191 = sphi 0, %s175
    %s197 = sphi 0, %s199
    %s200 = sphi 0, %s197
    %s201 = sphi 0, %s200
    %s217 = sphi 0, %s201
    %s223 = sphi 0, %s225
    %s226 = sphi 0, %s223
    %s227 = sphi 0, %s226
    %s243 = sphi 0, %s227
    %s249 = sphi 0, %s251
    %s252 = sphi 0, %s249
    %s253 = sphi 0, %s252
    %s269 = sphi 0, %s253
  $region4: #{mask_simclr_forward.3} parent=0 // loop_header_branch
    %18 = sbr.rel (%p16) target = $region8
  $region5: #{mask_simclr_forward.3} parent=0 // loop_body
    %s20 = ssub.s32 %s15, 1
    %s21 = ssub.s32 %s15, 2
    %s22 = sadd.s32 %s15, 1
    %s24 = sadd.s32 %s23, 1
    %p27 = scmp.eq.s32.totalorder %s15, 1
    %p28 = scmp.ne.s32.totalorder %s23, %s25
    %p29 = scmp.eq.s32.totalorder %s15, 0
    %p30 = por %p28, %p29
    %p31 = scmp.ne.s32.totalorder %s23, %s25
    %p32 = scmp.eq.s32.totalorder %s20, 1
    %p33 = por %p31, %p32
    %p34 = scmp.ne.s32.totalorder %s25, %s26
    %p35 = scmp.eq.s32.totalorder %s20, 0
    %p36 = por %p34, %p35
    %p37 = scmp.ne.s32.totalorder %s25, %s26
    %p38 = scmp.eq.s32.totalorder %s21, 1
    %p39 = por %p37, %p38
    %p41 = scmp.ne.s32.totalorder %s26, %s40
    %p42 = scmp.eq.s32.totalorder %s21, 0
    %p43 = por %p41, %p42
    %s45 = sadd.s32 %s44, 1
    %p48 = scmp.eq.s32.totalorder %s15, 1
    %p49 = scmp.ne.s32.totalorder %s44, %s46
    %p50 = scmp.eq.s32.totalorder %s15, 0
    %p51 = por %p49, %p50
    %p52 = scmp.ne.s32.totalorder %s44, %s46
    %p53 = scmp.eq.s32.totalorder %s20, 1
    %p54 = por %p52, %p53
    %p55 = scmp.ne.s32.totalorder %s46, %s47
    %p56 = scmp.eq.s32.totalorder %s20, 0
    %p57 = por %p55, %p56
    %p58 = scmp.ne.s32.totalorder %s46, %s47
    %p59 = scmp.eq.s32.totalorder %s21, 1
    %p60 = por %p58, %p59
    %p62 = scmp.ne.s32.totalorder %s47, %s61
    %p63 = scmp.eq.s32.totalorder %s21, 0
    %p64 = por %p62, %p63
    %s65 = ssub.s32 %s15, %s22
    %p66 = scmp.eq.s32.totalorder %s65, 0
    %s68 = sadd.s32 %s67, 1
    %s69 = scalar_select %p66, %s67, %s68
    %p72 = pneg %p66
    %p73 = scmp.eq.s32.totalorder %s15, 1
    %p74 = por %p72, %p73
    %p75 = scmp.ne.s32.totalorder %s67, %s70
    %p76 = scmp.eq.s32.totalorder %s15, 0
    %p77 = por %p75, %p76
    %p78 = scmp.ne.s32.totalorder %s67, %s70
    %p79 = scmp.eq.s32.totalorder %s20, 1
    %p80 = por %p78, %p79
    %p81 = scmp.ne.s32.totalorder %s70, %s71
    %p82 = scmp.eq.s32.totalorder %s20, 0
    %p83 = por %p81, %p82
    %p84 = scmp.ne.s32.totalorder %s70, %s71
    %p85 = scmp.eq.s32.totalorder %s21, 1
    %p86 = por %p84, %p85
    %p88 = scmp.ne.s32.totalorder %s71, %s87
    %p89 = scmp.eq.s32.totalorder %s21, 0
    %p90 = por %p88, %p89
    %s91 = ssub.s32 %s15, %s22
    %p92 = scmp.eq.s32.totalorder %s91, 0
    %s94 = sadd.s32 %s93, 1
    %s95 = scalar_select %p92, %s93, %s94
    %p98 = pneg %p92
    %p99 = scmp.eq.s32.totalorder %s15, 1
    %p100 = por %p98, %p99
    %p101 = scmp.ne.s32.totalorder %s93, %s96
    %p102 = scmp.eq.s32.totalorder %s15, 0
    %p103 = por %p101, %p102
    %p104 = scmp.ne.s32.totalorder %s93, %s96
    %p105 = scmp.eq.s32.totalorder %s20, 1
    %p106 = por %p104, %p105
    %p107 = scmp.ne.s32.totalorder %s96, %s97
    %p108 = scmp.eq.s32.totalorder %s20, 0
    %p109 = por %p107, %p108
    %p110 = scmp.ne.s32.totalorder %s96, %s97
    %p111 = scmp.eq.s32.totalorder %s21, 1
    %p112 = por %p110, %p111
    %p114 = scmp.ne.s32.totalorder %s97, %s113
    %p115 = scmp.eq.s32.totalorder %s21, 0
    %p116 = por %p114, %p115
    %s117 = ssub.s32 %s15, %s22
    %p118 = scmp.eq.s32.totalorder %s117, 0
    %s120 = sadd.s32 %s119, 1
    %s121 = scalar_select %p118, %s119, %s120
    %p124 = pneg %p118
    %p125 = scmp.eq.s32.totalorder %s15, 1
    %p126 = por %p124, %p125
    %p127 = scmp.ne.s32.totalorder %s119, %s122
    %p128 = scmp.eq.s32.totalorder %s15, 0
    %p129 = por %p127, %p128
    %p130 = scmp.ne.s32.totalorder %s119, %s122
    %p131 = scmp.eq.s32.totalorder %s20, 1
    %p132 = por %p130, %p131
    %p133 = scmp.ne.s32.totalorder %s122, %s123
    %p134 = scmp.eq.s32.totalorder %s20, 0
    %p135 = por %p133, %p134
    %p136 = scmp.ne.s32.totalorder %s122, %s123
    %p137 = scmp.eq.s32.totalorder %s21, 1
    %p138 = por %p136, %p137
    %p140 = scmp.ne.s32.totalorder %s123, %s139
    %p141 = scmp.eq.s32.totalorder %s21, 0
    %p142 = por %p140, %p141
    %s143 = ssub.s32 %s15, %s22
    %p144 = scmp.eq.s32.totalorder %s143, 0
    %s146 = sadd.s32 %s145, 1
    %s147 = scalar_select %p144, %s145, %s146
    %p150 = pneg %p144
    %p151 = scmp.eq.s32.totalorder %s15, 1
    %p152 = por %p150, %p151
    %p153 = scmp.ne.s32.totalorder %s145, %s148
    %p154 = scmp.eq.s32.totalorder %s15, 0
    %p155 = por %p153, %p154
    %p156 = scmp.ne.s32.totalorder %s145, %s148
    %p157 = scmp.eq.s32.totalorder %s20, 1
    %p158 = por %p156, %p157
    %p159 = scmp.ne.s32.totalorder %s148, %s149
    %p160 = scmp.eq.s32.totalorder %s20, 0
    %p161 = por %p159, %p160
    %p162 = scmp.ne.s32.totalorder %s148, %s149
    %p163 = scmp.eq.s32.totalorder %s21, 1
    %p164 = por %p162, %p163
    %p166 = scmp.ne.s32.totalorder %s149, %s165
    %p167 = scmp.eq.s32.totalorder %s21, 0
    %p168 = por %p166, %p167
    %s169 = ssub.s32 %s15, %s22
    %p170 = scmp.eq.s32.totalorder %s169, 0
    %s172 = sadd.s32 %s171, 1
    %s173 = scalar_select %p170, %s171, %s172
    %p176 = pneg %p170
    %p177 = scmp.eq.s32.totalorder %s15, 1
    %p178 = por %p176, %p177
    %p179 = scmp.ne.s32.totalorder %s171, %s174
    %p180 = scmp.eq.s32.totalorder %s15, 0
    %p181 = por %p179, %p180
    %p182 = scmp.ne.s32.totalorder %s171, %s174
    %p183 = scmp.eq.s32.totalorder %s20, 1
    %p184 = por %p182, %p183
    %p185 = scmp.ne.s32.totalorder %s174, %s175
    %p186 = scmp.eq.s32.totalorder %s20, 0
    %p187 = por %p185, %p186
    %p188 = scmp.ne.s32.totalorder %s174, %s175
    %p189 = scmp.eq.s32.totalorder %s21, 1
    %p190 = por %p188, %p189
    %p192 = scmp.ne.s32.totalorder %s175, %s191
    %p193 = scmp.eq.s32.totalorder %s21, 0
    %p194 = por %p192, %p193
    %s195 = ssub.s32 %s15, %s22
    %p196 = scmp.eq.s32.totalorder %s195, 0
    %s198 = sadd.s32 %s197, 1
    %s199 = scalar_select %p196, %s197, %s198
    %p202 = pneg %p196
    %p203 = scmp.eq.s32.totalorder %s15, 1
    %p204 = por %p202, %p203
    %p205 = scmp.ne.s32.totalorder %s197, %s200
    %p206 = scmp.eq.s32.totalorder %s15, 0
    %p207 = por %p205, %p206
    %p208 = scmp.ne.s32.totalorder %s197, %s200
    %p209 = scmp.eq.s32.totalorder %s20, 1
    %p210 = por %p208, %p209
    %p211 = scmp.ne.s32.totalorder %s200, %s201
    %p212 = scmp.eq.s32.totalorder %s20, 0
    %p213 = por %p211, %p212
    %p214 = scmp.ne.s32.totalorder %s200, %s201
    %p215 = scmp.eq.s32.totalorder %s21, 1
    %p216 = por %p214, %p215
    %p218 = scmp.ne.s32.totalorder %s201, %s217
    %p219 = scmp.eq.s32.totalorder %s21, 0
    %p220 = por %p218, %p219
    %s221 = ssub.s32 %s15, %s22
    %p222 = scmp.eq.s32.totalorder %s221, 0
    %s224 = sadd.s32 %s223, 1
    %s225 = scalar_select %p222, %s223, %s224
    %p228 = pneg %p222
    %p229 = scmp.eq.s32.totalorder %s15, 1
    %p230 = por %p228, %p229
    %p231 = scmp.ne.s32.totalorder %s223, %s226
    %p232 = scmp.eq.s32.totalorder %s15, 0
    %p233 = por %p231, %p232
    %p234 = scmp.ne.s32.totalorder %s223, %s226
    %p235 = scmp.eq.s32.totalorder %s20, 1
    %p236 = por %p234, %p235
    %p237 = scmp.ne.s32.totalorder %s226, %s227
    %p238 = scmp.eq.s32.totalorder %s20, 0
    %p239 = por %p237, %p238
    %p240 = scmp.ne.s32.totalorder %s226, %s227
    %p241 = scmp.eq.s32.totalorder %s21, 1
    %p242 = por %p240, %p241
    %p244 = scmp.ne.s32.totalorder %s227, %s243
    %p245 = scmp.eq.s32.totalorder %s21, 0
    %p246 = por %p244, %p245
    %s247 = ssub.s32 %s15, %s22
    %p248 = scmp.eq.s32.totalorder %s247, 0
    %s250 = sadd.s32 %s249, 1
    %s251 = scalar_select %p248, %s249, %s250
    %p254 = pneg %p248
    %p255 = scmp.eq.s32.totalorder %s15, 1
    %p256 = por %p254, %p255
    %p257 = scmp.ne.s32.totalorder %s249, %s252
    %p258 = scmp.eq.s32.totalorder %s15, 0
    %p259 = por %p257, %p258
    %p260 = scmp.ne.s32.totalorder %s249, %s252
    %p261 = scmp.eq.s32.totalorder %s20, 1
    %p262 = por %p260, %p261
    %p263 = scmp.ne.s32.totalorder %s252, %s253
    %p264 = scmp.eq.s32.totalorder %s20, 0
    %p265 = por %p263, %p264
    %p266 = scmp.ne.s32.totalorder %s252, %s253
    %p267 = scmp.eq.s32.totalorder %s21, 1
    %p268 = por %p266, %p267
    %p270 = scmp.ne.s32.totalorder %s253, %s269
    %p271 = scmp.eq.s32.totalorder %s21, 0
    %p272 = por %p270, %p271
    %p273 = scmp.le.s32.totalorder 1, %s15
    %p274 = scmp.lt.s32.totalorder %s15, 3
    %p275 = pnand %p273, %p274
    %p276 = pneg %p275
    // Predicated region
    $region9: #{mask_simclr_forward.3} parent=5 // pred_check
      _
    $region10: #{mask_simclr_forward.3} parent=5 // pred_check_branch
      %278 = sbr.rel (%p275) target = $region12
    $region11: #{mask_simclr_forward.3} parent=5 // pred_region
      %s279 = ssub.s32 %s15, 1
      // Predicated region
      $region13: #{mask_simclr_forward.3} parent=11 // pred_check
        %p280 = pneg %p36
      $region14: #{mask_simclr_forward.3} parent=11 // pred_check_branch
        %282 = sbr.rel (%p280) target = $region16
      $region15: #{mask_simclr_forward.3} parent=11 // pred_region
        _
      $region16: #{mask_simclr_forward.3} parent=11 // pred_fallthru
        _
      // Predicated region
      $region17: #{mask_simclr_forward.3} parent=11 // pred_check
        %p283 = pneg %p57
      $region18: #{mask_simclr_forward.3} parent=11 // pred_check_branch
        %285 = sbr.rel (%p283) target = $region20
      $region19: #{mask_simclr_forward.3} parent=11 // pred_region
        _
      $region20: #{mask_simclr_forward.3} parent=11 // pred_fallthru
        _
    $region12: #{mask_simclr_forward.3} parent=5 // pred_fallthru
      _
    %p286 = scmp.lt.s32.totalorder %s15, 2
    // Predicated region
    $region21: #{mask_simclr_forward.3} parent=5 // pred_check
      %p287 = pneg %p286
    $region22: #{mask_simclr_forward.3} parent=5 // pred_check_branch
      %289 = sbr.rel (%p287) target = $region24
    $region23: #{mask_simclr_forward.3} parent=5 // pred_region
      // Predicated region
      $region25: #{mask_simclr_forward.3} parent=23 // pred_check
        %p290 = pneg %p77
      $region26: #{mask_simclr_forward.3} parent=23 // pred_check_branch
        %292 = sbr.rel (%p290) target = $region28
      $region27: #{mask_simclr_forward.3} parent=23 // pred_region
        %p293 = scmp.lt.s32.totalorder %s15, 1
        %s294 = scalar_select %p293, %s15, 1
        %s295 = smul.addr %s294, 192
        %s296 = smul.addr %s295, 4
        %s297 = scalar_lea.vmem %s2, %s296
      $region28: #{mask_simclr_forward.3} parent=23 // pred_fallthru
        _
      // Predicated region
      $region29: #{mask_simclr_forward.3} parent=23 // pred_check
        %p298 = pneg %p103
      $region30: #{mask_simclr_forward.3} parent=23 // pred_check_branch
        %300 = sbr.rel (%p298) target = $region32
      $region31: #{mask_simclr_forward.3} parent=23 // pred_region
        %p301 = scmp.lt.s32.totalorder %s15, 1
        %s302 = scalar_select %p301, %s15, 1
        %s303 = smul.addr %s302, 4
        %s304 = scalar_lea.vmem %s3, %s303
      $region32: #{mask_simclr_forward.3} parent=23 // pred_fallthru
        _
      // Predicated region
      $region33: #{mask_simclr_forward.3} parent=23 // pred_check
        %p305 = pneg %p129
      $region34: #{mask_simclr_forward.3} parent=23 // pred_check_branch
        %307 = sbr.rel (%p305) target = $region36
      $region35: #{mask_simclr_forward.3} parent=23 // pred_region
        %p308 = scmp.lt.s32.totalorder %s15, 1
        %s309 = scalar_select %p308, %s15, 1
        %s310 = smul.addr %s309, 4
        %s311 = scalar_lea.vmem %s4, %s310
      $region36: #{mask_simclr_forward.3} parent=23 // pred_fallthru
        _
      // Predicated region
      $region37: #{mask_simclr_forward.3} parent=23 // pred_check
        %p312 = pneg %p155
      $region38: #{mask_simclr_forward.3} parent=23 // pred_check_branch
        %314 = sbr.rel (%p312) target = $region40
      $region39: #{mask_simclr_forward.3} parent=23 // pred_region
        %p315 = scmp.lt.s32.totalorder %s15, 1
        %s316 = scalar_select %p315, %s15, 1
        %s317 = smul.addr %s316, 256
        %s318 = smul.addr %s317, 4
        %s319 = scalar_lea.vmem %s5, %s318
      $region40: #{mask_simclr_forward.3} parent=23 // pred_fallthru
        _
      // Predicated region
      $region41: #{mask_simclr_forward.3} parent=23 // pred_check
        %p320 = pneg %p181
      $region42: #{mask_simclr_forward.3} parent=23 // pred_check_branch
        %322 = sbr.rel (%p320) target = $region44
      $region43: #{mask_simclr_forward.3} parent=23 // pred_region
        %p323 = scmp.lt.s32.totalorder %s15, 1
        %s324 = scalar_select %p323, %s15, 1
        %s325 = smul.addr %s324, 4
        %s326 = scalar_lea.vmem %s6, %s325
      $region44: #{mask_simclr_forward.3} parent=23 // pred_fallthru
        _
      // Predicated region
      $region45: #{mask_simclr_forward.3} parent=23 // pred_check
        %p327 = pneg %p207
      $region46: #{mask_simclr_forward.3} parent=23 // pred_check_branch
        %329 = sbr.rel (%p327) target = $region48
      $region47: #{mask_simclr_forward.3} parent=23 // pred_region
        %p330 = scmp.lt.s32.totalorder %s15, 1
        %s331 = scalar_select %p330, %s15, 1
        %s332 = smul.addr %s331, 4
        %s333 = scalar_lea.vmem %s7, %s332
      $region48: #{mask_simclr_forward.3} parent=23 // pred_fallthru
        _
      // Predicated region
      $region49: #{mask_simclr_forward.3} parent=23 // pred_check
        %p334 = pneg %p233
      $region50: #{mask_simclr_forward.3} parent=23 // pred_check_branch
        %336 = sbr.rel (%p334) target = $region52
      $region51: #{mask_simclr_forward.3} parent=23 // pred_region
        %p337 = scmp.lt.s32.totalorder %s15, 1
        %s338 = scalar_select %p337, %s15, 1
        %s339 = smul.addr %s338, 256
        %s340 = smul.addr %s339, 4
        %s341 = scalar_lea.vmem %s8, %s340
      $region52: #{mask_simclr_forward.3} parent=23 // pred_fallthru
        _
    $region24: #{mask_simclr_forward.3} parent=5 // pred_fallthru
      _
    %p342 = scmp.le.s32.totalorder 1, %s15
    %p343 = scmp.lt.s32.totalorder %s15, 3
    %p344 = pnand %p342, %p343
    %p345 = pneg %p344
    // Predicated region
    $region53: #{mask_simclr_forward.3} parent=5 // pred_check
      _
    $region54: #{mask_simclr_forward.3} parent=5 // pred_check_branch
      %347 = sbr.rel (%p344) target = $region56
    $region55: #{mask_simclr_forward.3} parent=5 // pred_region
      %s348 = ssub.s32 %s15, 1
      %p349 = pneg %p36
      %p350 = pneg %p33
      %p351 = pneg %p57
      %p352 = pneg %p54
      %p353 = scmp.lt.s32.totalorder %s20, 1
      %s354 = scalar_select %p353, %s20, 1
      %s355 = smul.addr %s354, 192
      %s356 = smul.addr %s355, 4
      %s357 = scalar_lea.vmem %s2, %s356
      %p358 = pneg %p83
      %p359 = pneg %p80
      %p360 = scmp.lt.s32.totalorder %s20, 1
      %s361 = scalar_select %p360, %s20, 1
      %s362 = smul.addr %s361, 4
      %s363 = scalar_lea.vmem %s3, %s362
      %p364 = pneg %p109
      %p365 = pneg %p106
      %p366 = scmp.lt.s32.totalorder %s20, 1
      %s367 = scalar_select %p366, %s20, 1
      %s368 = smul.addr %s367, 4
      %s369 = scalar_lea.vmem %s4, %s368
      %p370 = pneg %p135
      %p371 = pneg %p132
      %p372 = scmp.lt.s32.totalorder %s20, 1
      %s373 = scalar_select %p372, %s20, 1
      %s374 = smul.addr %s373, 256
      %s375 = smul.addr %s374, 4
      %s376 = scalar_lea.vmem %s5, %s375
      %p377 = pneg %p161
      %p378 = pneg %p158
      %p379 = scmp.lt.s32.totalorder %s20, 1
      %s380 = scalar_select %p379, %s20, 1
      %s381 = smul.addr %s380, 4
      %s382 = scalar_lea.vmem %s6, %s381
      %p383 = pneg %p187
      %p384 = pneg %p184
      %p385 = scmp.lt.s32.totalorder %s20, 1
      %s386 = scalar_select %p385, %s20, 1
      %s387 = smul.addr %s386, 4
      %s388 = scalar_lea.vmem %s7, %s387
      %p389 = pneg %p213
      %p390 = pneg %p210
      %p391 = scmp.lt.s32.totalorder %s20, 1
      %s392 = scalar_select %p391, %s20, 1
      %s393 = smul.addr %s392, 256
      %s394 = smul.addr %s393, 4
      %s395 = scalar_lea.vmem %s8, %s394
      %p396 = pneg %p239
      %p397 = pneg %p236
      %p398 = pneg %p265
      %p399 = pneg %p262
      %p400 = scmp.lt.s32.totalorder %s20, 1
      %s401 = scalar_select %p400, %s20, 1
      %s402 = smul.addr %s401, 4
      %s403 = smul.addr %s402, 2
      %s404 = scalar_lea.vmem %s9, %s403
      %p405 = scmp.lt.s32.totalorder %s20, 1
      %s406 = scalar_select %p405, %s20, 1
      %s407 = smul.addr %s406, 192
      %s408 = smul.addr %s407, 4
      %s409 = scalar_lea.vmem %s2, %s408
      %p410 = scmp.lt.s32.totalorder %s20, 1
      %s411 = scalar_select %p410, %s20, 1
      %s412 = smul.addr %s411, 4
      %s413 = scalar_lea.vmem %s3, %s412
      %p414 = scmp.lt.s32.totalorder %s20, 1
      %s415 = scalar_select %p414, %s20, 1
      %s416 = smul.addr %s415, 4
      %s417 = scalar_lea.vmem %s4, %s416
      %p418 = scmp.lt.s32.totalorder %s20, 1
      %s419 = scalar_select %p418, %s20, 1
      %s420 = smul.addr %s419, 256
      %s421 = smul.addr %s420, 4
      %s422 = scalar_lea.vmem %s5, %s421
      %p423 = scmp.lt.s32.totalorder %s20, 1
      %s424 = scalar_select %p423, %s20, 1
      %s425 = smul.addr %s424, 4
      %s426 = scalar_lea.vmem %s6, %s425
      %p427 = scmp.lt.s32.totalorder %s20, 1
      %s428 = scalar_select %p427, %s20, 1
      %s429 = smul.addr %s428, 4
      %s430 = scalar_lea.vmem %s7, %s429
      %p431 = scmp.lt.s32.totalorder %s20, 1
      %s432 = scalar_select %p431, %s20, 1
      %s433 = smul.addr %s432, 256
      %s434 = smul.addr %s433, 4
      %s435 = scalar_lea.vmem %s8, %s434
      %p436 = scmp.lt.s32.totalorder %s20, 1
      %s437 = scalar_select %p436, %s20, 1
      %s438 = smul.addr %s437, 4
      %s439 = smul.addr %s438, 2
      %s440 = scalar_lea.vmem %s9, %s439
      %v442 = vld [vmem:[%s0] sm:$0x3f]
      %v443 = vld [vmem:[%s1] sm:$0x7]
      %v445 = vlaneseq
      %v446 = vshrl.u32 %v445, 7
      %v447 = vsub.s32 0, %v446
      %v448 = vrot.slane %v443, %v447
      %v449 = vlaneseq
      %v450 = vshrl.u32 %v449, 7
      %v451 = vsub.s32 1, %v450
      %v452 = vrot.slane %v443, %v451
      %v453 = vlaneseq
      %v454 = vshrl.u32 %v453, 7
      %v455 = vsub.s32 2, %v454
      %v456 = vrot.slane %v443, %v455
      %v457 = vcombine.low %v448, %v452
      %v459 = vunpack.c.l.s4 1983009808
      %v460 = vunpack.c.0.s8 %v459
      %v461 = vlaneseq
      %v462 = vshrl.u32 %v461, 7
      %v463 = vsub.s32 %v460, %v462
      %v464 = vrot.slane %v457, %v463
      %v466 = vunpack.c.l.s4 1983009808
      %v467 = vunpack.c.0.s8 %v466
      %v468 = vlaneseq
      %v469 = vshrl.u32 %v468, 7
      %v470 = vsub.s32 %v467, %v469
      %v471 = vrot.slane %v456, %v470
      %v472 = vcombine.low %v464, %v471
      %v474 = vmul.f32 %v442, %v472
      %v476 = vcombine.high %v474, %v474
      %v478 = vunpack.c.l.s4 1983009808
      %v479 = vunpack.c.0.s8 %v478
      %v480 = vlaneseq
      %v481 = vshrl.u32 %v480, 7
      %v482 = vsub.s32 %v479, %v481
      %v483 = vrot.slane %v474, %v482
      %v485 = vunpack.c.l.s4 1983009808
      %v486 = vunpack.c.0.s8 %v485
      %v487 = vlaneseq
      %v488 = vshrl.u32 %v487, 7
      %v489 = vsub.s32 %v486, %v488
      %v490 = vrot.slane %v476, %v489
      %v491 = vcombine.high %v483, %v483
      %v495 = vpack.c.bf16 %v483, %v483
      %v496 = vpack.c.bf16 %v491, %v491
      %v497 = vpack.c.bf16 %v490, %v490
      %v498 = vld [vmem:[%s409] sm:$0xff]
      %v499 = vld [vmem:[%s409 + $0x8] sm:$0xff]
      %v500 = vld [vmem:[%s409 + $0x10] sm:$0xff]
      %v501 = vld [vmem:[%s409 + $0x18] sm:$0xff]
      %v502 = vld [vmem:[%s409 + $0x20] sm:$0xff]
      %v503 = vld [vmem:[%s409 + $0x28] sm:$0xff]
      %v504 = vld [vmem:[%s409 + $0x30] sm:$0xff]
      %v505 = vld [vmem:[%s409 + $0x38] sm:$0xff]
      %v506 = vld [vmem:[%s409 + $0x40] sm:$0xff]
      %v507 = vld [vmem:[%s409 + $0x48] sm:$0xff]
      %v508 = vld [vmem:[%s409 + $0x50] sm:$0xff]
      %v509 = vld [vmem:[%s409 + $0x58] sm:$0xff]
      %v510 = vld [vmem:[%s409 + $0x60] sm:$0xff]
      %v511 = vld [vmem:[%s409 + $0x68] sm:$0xff]
      %v512 = vld [vmem:[%s409 + $0x70] sm:$0xff]
      %v513 = vld [vmem:[%s409 + $0x78] sm:$0xff]
      %v514 = vld [vmem:[%s409 + $0x80] sm:$0xff]
      %v515 = vld [vmem:[%s409 + $0x88] sm:$0xff]
      %v516 = vld [vmem:[%s409 + $0x90] sm:$0xff]
      %v517 = vld [vmem:[%s409 + $0x98] sm:$0xff]
      %v518 = vld [vmem:[%s409 + $0xa0] sm:$0xff]
      %v519 = vld [vmem:[%s409 + $0xa8] sm:$0xff]
      %v520 = vld [vmem:[%s409 + $0xb0] sm:$0xff]
      %v521 = vld [vmem:[%s409 + $0xb8] sm:$0xff]
      %v522 = vld [vmem:[%s409 + $0xc0] sm:$0xff]
      %v523 = vld [vmem:[%s409 + $0xc8] sm:$0xff]
      %v524 = vld [vmem:[%s409 + $0xd0] sm:$0xff]
      %v525 = vld [vmem:[%s409 + $0xd8] sm:$0xff]
      %v526 = vld [vmem:[%s409 + $0xe0] sm:$0xff]
      %v527 = vld [vmem:[%s409 + $0xe8] sm:$0xff]
      %v528 = vld [vmem:[%s409 + $0xf0] sm:$0xff]
      %v529 = vld [vmem:[%s409 + $0xf8] sm:$0xff]
      %v530 = vld [vmem:[%s409 + $0x100] sm:$0xff]
      %v531 = vld [vmem:[%s409 + $0x108] sm:$0xff]
      %v532 = vld [vmem:[%s409 + $0x110] sm:$0xff]
      %v533 = vld [vmem:[%s409 + $0x118] sm:$0xff]
      %v534 = vld [vmem:[%s409 + $0x120] sm:$0xff]
      %v535 = vld [vmem:[%s409 + $0x128] sm:$0xff]
      %v536 = vld [vmem:[%s409 + $0x130] sm:$0xff]
      %v537 = vld [vmem:[%s409 + $0x138] sm:$0xff]
      %v538 = vld [vmem:[%s409 + $0x140] sm:$0xff]
      %v539 = vld [vmem:[%s409 + $0x148] sm:$0xff]
      %v540 = vld [vmem:[%s409 + $0x150] sm:$0xff]
      %v541 = vld [vmem:[%s409 + $0x158] sm:$0xff]
      %v542 = vld [vmem:[%s409 + $0x160] sm:$0xff]
      %v543 = vld [vmem:[%s409 + $0x168] sm:$0xff]
      %v544 = vld [vmem:[%s409 + $0x170] sm:$0xff]
      %v545 = vld [vmem:[%s409 + $0x178] sm:$0xff]
      %v546 = vld [vmem:[%s409 + $0x180] sm:$0xff]
      %v547 = vld [vmem:[%s409 + $0x188] sm:$0xff]
      %v548 = vld [vmem:[%s409 + $0x190] sm:$0xff]
      %v549 = vld [vmem:[%s409 + $0x198] sm:$0xff]
      %v550 = vld [vmem:[%s409 + $0x1a0] sm:$0xff]
      %v551 = vld [vmem:[%s409 + $0x1a8] sm:$0xff]
      %v552 = vld [vmem:[%s409 + $0x1b0] sm:$0xff]
      %v553 = vld [vmem:[%s409 + $0x1b8] sm:$0xff]
      %v554 = vld [vmem:[%s409 + $0x1c0] sm:$0xff]
      %v555 = vld [vmem:[%s409 + $0x1c8] sm:$0xff]
      %v556 = vld [vmem:[%s409 + $0x1d0] sm:$0xff]
      %v557 = vld [vmem:[%s409 + $0x1d8] sm:$0xff]
      %v558 = vld [vmem:[%s409 + $0x1e0] sm:$0xff]
      %v559 = vld [vmem:[%s409 + $0x1e8] sm:$0xff]
      %v560 = vld [vmem:[%s409 + $0x1f0] sm:$0xff]
      %v561 = vld [vmem:[%s409 + $0x1f8] sm:$0xff]
      %v562 = vld [vmem:[%s409 + $0x200] sm:$0xff]
      %v563 = vld [vmem:[%s409 + $0x208] sm:$0xff]
      %v564 = vld [vmem:[%s409 + $0x210] sm:$0xff]
      %v565 = vld [vmem:[%s409 + $0x218] sm:$0xff]
      %v566 = vld [vmem:[%s409 + $0x220] sm:$0xff]
      %v567 = vld [vmem:[%s409 + $0x228] sm:$0xff]
      %v568 = vld [vmem:[%s409 + $0x230] sm:$0xff]
      %v569 = vld [vmem:[%s409 + $0x238] sm:$0xff]
      %v570 = vld [vmem:[%s409 + $0x240] sm:$0xff]
      %v571 = vld [vmem:[%s409 + $0x248] sm:$0xff]
      %v572 = vld [vmem:[%s409 + $0x250] sm:$0xff]
      %v573 = vld [vmem:[%s409 + $0x258] sm:$0xff]
      %v574 = vld [vmem:[%s409 + $0x260] sm:$0xff]
      %v575 = vld [vmem:[%s409 + $0x268] sm:$0xff]
      %v576 = vld [vmem:[%s409 + $0x270] sm:$0xff]
      %v577 = vld [vmem:[%s409 + $0x278] sm:$0xff]
      %v578 = vld [vmem:[%s409 + $0x280] sm:$0xff]
      %v579 = vld [vmem:[%s409 + $0x288] sm:$0xff]
      %v580 = vld [vmem:[%s409 + $0x290] sm:$0xff]
      %v581 = vld [vmem:[%s409 + $0x298] sm:$0xff]
      %v582 = vld [vmem:[%s409 + $0x2a0] sm:$0xff]
      %v583 = vld [vmem:[%s409 + $0x2a8] sm:$0xff]
      %v584 = vld [vmem:[%s409 + $0x2b0] sm:$0xff]
      %v585 = vld [vmem:[%s409 + $0x2b8] sm:$0xff]
      %v586 = vld [vmem:[%s409 + $0x2c0] sm:$0xff]
      %v587 = vld [vmem:[%s409 + $0x2c8] sm:$0xff]
      %v588 = vld [vmem:[%s409 + $0x2d0] sm:$0xff]
      %v589 = vld [vmem:[%s409 + $0x2d8] sm:$0xff]
      %v590 = vld [vmem:[%s409 + $0x2e0] sm:$0xff]
      %v591 = vld [vmem:[%s409 + $0x2e8] sm:$0xff]
      %v592 = vld [vmem:[%s409 + $0x2f0] sm:$0xff]
      %v593 = vld [vmem:[%s409 + $0x2f8] sm:$0xff]
      %v690 = vunpack.c.l.b16 %v498
      %v691 = vunpack.c.h.b16 %v498
      %v692 = vunpack.c.l.b16 %v499
      %v693 = vunpack.c.h.b16 %v499
      %v694 = vunpack.c.l.b16 %v500
      %v695 = vunpack.c.h.b16 %v500
      %v696 = vunpack.c.l.b16 %v501
      %v697 = vunpack.c.h.b16 %v501
      %v698 = vunpack.c.l.b16 %v502
      %v699 = vunpack.c.h.b16 %v502
      %v700 = vunpack.c.l.b16 %v503
      %v701 = vunpack.c.h.b16 %v503
      %v702 = vunpack.c.l.b16 %v504
      %v703 = vunpack.c.h.b16 %v504
      %v704 = vunpack.c.l.b16 %v505
      %v705 = vunpack.c.h.b16 %v505
      %v706 = vunpack.c.l.b16 %v506
      %v707 = vunpack.c.h.b16 %v506
      %v708 = vunpack.c.l.b16 %v507
      %v709 = vunpack.c.h.b16 %v507
      %v710 = vunpack.c.l.b16 %v508
      %v711 = vunpack.c.h.b16 %v508
      %v712 = vunpack.c.l.b16 %v509
      %v713 = vunpack.c.h.b16 %v509
      %v714 = vunpack.c.l.b16 %v510
      %v715 = vunpack.c.h.b16 %v510
      %v716 = vunpack.c.l.b16 %v511
      %v717 = vunpack.c.h.b16 %v511
      %v718 = vunpack.c.l.b16 %v512
      %v719 = vunpack.c.h.b16 %v512
      %v720 = vunpack.c.l.b16 %v513
      %v721 = vunpack.c.h.b16 %v513
      %v722 = vunpack.c.l.b16 %v514
      %v723 = vunpack.c.h.b16 %v514
      %v724 = vunpack.c.l.b16 %v515
      %v725 = vunpack.c.h.b16 %v515
      %v726 = vunpack.c.l.b16 %v516
      %v727 = vunpack.c.h.b16 %v516
      %v728 = vunpack.c.l.b16 %v517
      %v729 = vunpack.c.h.b16 %v517
      %v730 = vunpack.c.l.b16 %v518
      %v731 = vunpack.c.h.b16 %v518
      %v732 = vunpack.c.l.b16 %v519
      %v733 = vunpack.c.h.b16 %v519
      %v734 = vunpack.c.l.b16 %v520
      %v735 = vunpack.c.h.b16 %v520
      %v736 = vunpack.c.l.b16 %v521
      %v737 = vunpack.c.h.b16 %v521
      %v738 = vunpack.c.l.b16 %v522
      %v739 = vunpack.c.h.b16 %v522
      %v740 = vunpack.c.l.b16 %v523
      %v741 = vunpack.c.h.b16 %v523
      %v742 = vunpack.c.l.b16 %v524
      %v743 = vunpack.c.h.b16 %v524
      %v744 = vunpack.c.l.b16 %v525
      %v745 = vunpack.c.h.b16 %v525
      %v746 = vunpack.c.l.b16 %v526
      %v747 = vunpack.c.h.b16 %v526
      %v748 = vunpack.c.l.b16 %v527
      %v749 = vunpack.c.h.b16 %v527
      %v750 = vunpack.c.l.b16 %v528
      %v751 = vunpack.c.h.b16 %v528
      %v752 = vunpack.c.l.b16 %v529
      %v753 = vunpack.c.h.b16 %v529
      %v754 = vunpack.c.l.b16 %v530
      %v755 = vunpack.c.h.b16 %v530
      %v756 = vunpack.c.l.b16 %v531
      %v757 = vunpack.c.h.b16 %v531
      %v758 = vunpack.c.l.b16 %v532
      %v759 = vunpack.c.h.b16 %v532
      %v760 = vunpack.c.l.b16 %v533
      %v761 = vunpack.c.h.b16 %v533
      %v762 = vunpack.c.l.b16 %v534
      %v763 = vunpack.c.h.b16 %v534
      %v764 = vunpack.c.l.b16 %v535
      %v765 = vunpack.c.h.b16 %v535
      %v766 = vunpack.c.l.b16 %v536
      %v767 = vunpack.c.h.b16 %v536
      %v768 = vunpack.c.l.b16 %v537
      %v769 = vunpack.c.h.b16 %v537
      %v770 = vunpack.c.l.b16 %v538
      %v771 = vunpack.c.h.b16 %v538
      %v772 = vunpack.c.l.b16 %v539
      %v773 = vunpack.c.h.b16 %v539
      %v774 = vunpack.c.l.b16 %v540
      %v775 = vunpack.c.h.b16 %v540
      %v776 = vunpack.c.l.b16 %v541
      %v777 = vunpack.c.h.b16 %v541
      %v778 = vunpack.c.l.b16 %v542
      %v779 = vunpack.c.h.b16 %v542
      %v780 = vunpack.c.l.b16 %v543
      %v781 = vunpack.c.h.b16 %v543
      %v782 = vunpack.c.l.b16 %v544
      %v783 = vunpack.c.h.b16 %v544
      %v784 = vunpack.c.l.b16 %v545
      %v785 = vunpack.c.h.b16 %v545
      %v786 = vunpack.c.l.b16 %v546
      %v787 = vunpack.c.h.b16 %v546
      %v788 = vunpack.c.l.b16 %v547
      %v789 = vunpack.c.h.b16 %v547
      %v790 = vunpack.c.l.b16 %v548
      %v791 = vunpack.c.h.b16 %v548
      %v792 = vunpack.c.l.b16 %v549
      %v793 = vunpack.c.h.b16 %v549
      %v794 = vunpack.c.l.b16 %v550
      %v795 = vunpack.c.h.b16 %v550
      %v796 = vunpack.c.l.b16 %v551
      %v797 = vunpack.c.h.b16 %v551
      %v798 = vunpack.c.l.b16 %v552
      %v799 = vunpack.c.h.b16 %v552
      %v800 = vunpack.c.l.b16 %v553
      %v801 = vunpack.c.h.b16 %v553
      %v802 = vunpack.c.l.b16 %v554
      %v803 = vunpack.c.h.b16 %v554
      %v804 = vunpack.c.l.b16 %v555
      %v805 = vunpack.c.h.b16 %v555
      %v806 = vunpack.c.l.b16 %v556
      %v807 = vunpack.c.h.b16 %v556
      %v808 = vunpack.c.l.b16 %v557
      %v809 = vunpack.c.h.b16 %v557
      %v810 = vunpack.c.l.b16 %v558
      %v811 = vunpack.c.h.b16 %v558
      %v812 = vunpack.c.l.b16 %v559
      %v813 = vunpack.c.h.b16 %v559
      %v814 = vunpack.c.l.b16 %v560
      %v815 = vunpack.c.h.b16 %v560
      %v816 = vunpack.c.l.b16 %v561
      %v817 = vunpack.c.h.b16 %v561
      %v818 = vunpack.c.l.b16 %v562
      %v819 = vunpack.c.h.b16 %v562
      %v820 = vunpack.c.l.b16 %v563
      %v821 = vunpack.c.h.b16 %v563
      %v822 = vunpack.c.l.b16 %v564
      %v823 = vunpack.c.h.b16 %v564
      %v824 = vunpack.c.l.b16 %v565
      %v825 = vunpack.c.h.b16 %v565
      %v826 = vunpack.c.l.b16 %v566
      %v827 = vunpack.c.h.b16 %v566
      %v828 = vunpack.c.l.b16 %v567
      %v829 = vunpack.c.h.b16 %v567
      %v830 = vunpack.c.l.b16 %v568
      %v831 = vunpack.c.h.b16 %v568
      %v832 = vunpack.c.l.b16 %v569
      %v833 = vunpack.c.h.b16 %v569
      %v834 = vunpack.c.l.b16 %v570
      %v835 = vunpack.c.h.b16 %v570
      %v836 = vunpack.c.l.b16 %v571
      %v837 = vunpack.c.h.b16 %v571
      %v838 = vunpack.c.l.b16 %v572
      %v839 = vunpack.c.h.b16 %v572
      %v840 = vunpack.c.l.b16 %v573
      %v841 = vunpack.c.h.b16 %v573
      %v842 = vunpack.c.l.b16 %v574
      %v843 = vunpack.c.h.b16 %v574
      %v844 = vunpack.c.l.b16 %v575
      %v845 = vunpack.c.h.b16 %v575
      %v846 = vunpack.c.l.b16 %v576
      %v847 = vunpack.c.h.b16 %v576
      %v848 = vunpack.c.l.b16 %v577
      %v849 = vunpack.c.h.b16 %v577
      %v850 = vunpack.c.l.b16 %v578
      %v851 = vunpack.c.h.b16 %v578
      %v852 = vunpack.c.l.b16 %v579
      %v853 = vunpack.c.h.b16 %v579
      %v854 = vunpack.c.l.b16 %v580
      %v855 = vunpack.c.h.b16 %v580
      %v856 = vunpack.c.l.b16 %v581
      %v857 = vunpack.c.h.b16 %v581
      %v858 = vunpack.c.l.b16 %v582
      %v859 = vunpack.c.h.b16 %v582
      %v860 = vunpack.c.l.b16 %v583
      %v861 = vunpack.c.h.b16 %v583
      %v862 = vunpack.c.l.b16 %v584
      %v863 = vunpack.c.h.b16 %v584
      %v864 = vunpack.c.l.b16 %v585
      %v865 = vunpack.c.h.b16 %v585
      %v866 = vunpack.c.l.b16 %v586
      %v867 = vunpack.c.h.b16 %v586
      %v868 = vunpack.c.l.b16 %v587
      %v869 = vunpack.c.h.b16 %v587
      %v870 = vunpack.c.l.b16 %v588
      %v871 = vunpack.c.h.b16 %v588
      %v872 = vunpack.c.l.b16 %v589
      %v873 = vunpack.c.h.b16 %v589
      %v874 = vunpack.c.l.b16 %v590
      %v875 = vunpack.c.h.b16 %v590
      %v876 = vunpack.c.l.b16 %v591
      %v877 = vunpack.c.h.b16 %v591
      %v878 = vunpack.c.l.b16 %v592
      %v879 = vunpack.c.h.b16 %v592
      %v880 = vunpack.c.l.b16 %v593
      %v881 = vunpack.c.h.b16 %v593
      %v882 = vpack.c.b16 %v694, %v690
      %v883 = vpack.c.b16 %v695, %v691
      %v884 = vpack.c.b16 %v696, %v692
      %v885 = vpack.c.b16 %v697, %v693
      %v886 = vpack.c.b16 %v702, %v698
      %v887 = vpack.c.b16 %v703, %v699
      %v888 = vpack.c.b16 %v704, %v700
      %v889 = vpack.c.b16 %v705, %v701
      %v890 = vpack.c.b16 %v710, %v706
      %v891 = vpack.c.b16 %v711, %v707
      %v892 = vpack.c.b16 %v712, %v708
      %v893 = vpack.c.b16 %v713, %v709
      %v894 = vpack.c.b16 %v718, %v714
      %v895 = vpack.c.b16 %v719, %v715
      %v896 = vpack.c.b16 %v720, %v716
      %v897 = vpack.c.b16 %v721, %v717
      %v898 = vpack.c.b16 %v726, %v722
      %v899 = vpack.c.b16 %v727, %v723
      %v900 = vpack.c.b16 %v728, %v724
      %v901 = vpack.c.b16 %v729, %v725
      %v902 = vpack.c.b16 %v734, %v730
      %v903 = vpack.c.b16 %v735, %v731
      %v904 = vpack.c.b16 %v736, %v732
      %v905 = vpack.c.b16 %v737, %v733
      %v906 = vpack.c.b16 %v742, %v738
      %v907 = vpack.c.b16 %v743, %v739
      %v908 = vpack.c.b16 %v744, %v740
      %v909 = vpack.c.b16 %v745, %v741
      %v910 = vpack.c.b16 %v750, %v746
      %v911 = vpack.c.b16 %v751, %v747
      %v912 = vpack.c.b16 %v752, %v748
      %v913 = vpack.c.b16 %v753, %v749
      %v914 = vpack.c.b16 %v758, %v754
      %v915 = vpack.c.b16 %v759, %v755
      %v916 = vpack.c.b16 %v760, %v756
      %v917 = vpack.c.b16 %v761, %v757
      %v918 = vpack.c.b16 %v766, %v762
      %v919 = vpack.c.b16 %v767, %v763
      %v920 = vpack.c.b16 %v768, %v764
      %v921 = vpack.c.b16 %v769, %v765
      %v922 = vpack.c.b16 %v774, %v770
      %v923 = vpack.c.b16 %v775, %v771
      %v924 = vpack.c.b16 %v776, %v772
      %v925 = vpack.c.b16 %v777, %v773
      %v926 = vpack.c.b16 %v782, %v778
      %v927 = vpack.c.b16 %v783, %v779
      %v928 = vpack.c.b16 %v784, %v780
      %v929 = vpack.c.b16 %v785, %v781
      %v930 = vpack.c.b16 %v790, %v786
      %v931 = vpack.c.b16 %v791, %v787
      %v932 = vpack.c.b16 %v792, %v788
      %v933 = vpack.c.b16 %v793, %v789
      %v934 = vpack.c.b16 %v798, %v794
      %v935 = vpack.c.b16 %v799, %v795
      %v936 = vpack.c.b16 %v800, %v796
      %v937 = vpack.c.b16 %v801, %v797
      %v938 = vpack.c.b16 %v806, %v802
      %v939 = vpack.c.b16 %v807, %v803
      %v940 = vpack.c.b16 %v808, %v804
      %v941 = vpack.c.b16 %v809, %v805
      %v942 = vpack.c.b16 %v814, %v810
      %v943 = vpack.c.b16 %v815, %v811
      %v944 = vpack.c.b16 %v816, %v812
      %v945 = vpack.c.b16 %v817, %v813
      %v946 = vpack.c.b16 %v822, %v818
      %v947 = vpack.c.b16 %v823, %v819
      %v948 = vpack.c.b16 %v824, %v820
      %v949 = vpack.c.b16 %v825, %v821
      %v950 = vpack.c.b16 %v830, %v826
      %v951 = vpack.c.b16 %v831, %v827
      %v952 = vpack.c.b16 %v832, %v828
      %v953 = vpack.c.b16 %v833, %v829
      %v954 = vpack.c.b16 %v838, %v834
      %v955 = vpack.c.b16 %v839, %v835
      %v956 = vpack.c.b16 %v840, %v836
      %v957 = vpack.c.b16 %v841, %v837
      %v958 = vpack.c.b16 %v846, %v842
      %v959 = vpack.c.b16 %v847, %v843
      %v960 = vpack.c.b16 %v848, %v844
      %v961 = vpack.c.b16 %v849, %v845
      %v962 = vpack.c.b16 %v854, %v850
      %v963 = vpack.c.b16 %v855, %v851
      %v964 = vpack.c.b16 %v856, %v852
      %v965 = vpack.c.b16 %v857, %v853
      %v966 = vpack.c.b16 %v862, %v858
      %v967 = vpack.c.b16 %v863, %v859
      %v968 = vpack.c.b16 %v864, %v860
      %v969 = vpack.c.b16 %v865, %v861
      %v970 = vpack.c.b16 %v870, %v866
      %v971 = vpack.c.b16 %v871, %v867
      %v972 = vpack.c.b16 %v872, %v868
      %v973 = vpack.c.b16 %v873, %v869
      %v974 = vpack.c.b16 %v878, %v874
      %v975 = vpack.c.b16 %v879, %v875
      %v976 = vpack.c.b16 %v880, %v876
      %v977 = vpack.c.b16 %v881, %v877
      %1074 = vmatprep.subr.bf16.mxu0 %v883
      %1075 = vmatpush1.bf16.msra.mxu0 %v882
      %1076 = vmatprep.subr.bf16.mxu0 %v887
      %1077 = vmatpush1.bf16.msra.mxu0 %v886
      %1078 = vmatprep.subr.bf16.mxu0 %v891
      %1079 = vmatpush1.bf16.msra.mxu0 %v890
      %1080 = vmatprep.subr.bf16.mxu0 %v895
      %1081 = vmatpush1.bf16.msra.mxu0 %v894
      %1082 = vmatprep.subr.bf16.mxu0 %v899
      %1083 = vmatpush1.bf16.msra.mxu0 %v898
      %1084 = vmatprep.subr.bf16.mxu0 %v903
      %1085 = vmatpush1.bf16.msra.mxu0 %v902
      %1086 = vmatprep.subr.bf16.mxu0 %v907
      %1087 = vmatpush1.bf16.msra.mxu0 %v906
      %1088 = vmatprep.subr.bf16.mxu0 %v911
      %1089 = vmatpush1.bf16.msra.mxu0 %v910
      %1090 = vmatprep.subr.bf16.mxu0 %v915
      %1091 = vmatpush1.bf16.msra.mxu0 %v914
      %1092 = vmatprep.subr.bf16.mxu0 %v919
      %1093 = vmatpush1.bf16.msra.mxu0 %v918
      %1094 = vmatprep.subr.bf16.mxu0 %v923
      %1095 = vmatpush1.bf16.msra.mxu0 %v922
      %1096 = vmatprep.subr.bf16.mxu0 %v927
      %1097 = vmatpush1.bf16.msra.mxu0 %v926
      %1098 = vmatprep.subr.bf16.mxu0 %v931
      %1099 = vmatpush1.bf16.msra.mxu0 %v930
      %1100 = vmatprep.subr.bf16.mxu0 %v935
      %1101 = vmatpush1.bf16.msra.mxu0 %v934
      %1102 = vmatprep.subr.bf16.mxu0 %v939
      %1103 = vmatpush1.bf16.msra.mxu0 %v938
      %1104 = vmatprep.subr.bf16.mxu0 %v943
      %1105 = vmatpush1.bf16.msra.mxu0 %v942
      %1106 = vmatprep.mubr.bf16.mxu0 %v496
      %1107 = vmatmul.mubr.bf16.gmra.mrb[0].mxu0 %v495
      %v1108 = vpop.f32.mrb[0].mxu0
      %v1109 = vadd.f32 0.0, %v1108
      %v1110 = vpop.f32.mrb[0].mxu0
      %v1111 = vadd.f32 0.0, %v1110
      %v1112 = vpop.f32.mrb[0].mxu0
      %v1113 = vpop.f32.mrb[0].mxu0
      %1114 = vdwg.mxu0
      %1115 = vmatprep.subr.bf16.mxu0 %v947
      %1116 = vmatpush1.bf16.msra.mxu0 %v946
      %1117 = vmatprep.subr.bf16.mxu0 %v951
      %1118 = vmatpush1.bf16.msra.mxu0 %v950
      %1119 = vmatprep.subr.bf16.mxu0 %v955
      %1120 = vmatpush1.bf16.msra.mxu0 %v954
      %1121 = vmatprep.subr.bf16.mxu0 %v959
      %1122 = vmatpush1.bf16.msra.mxu0 %v958
      %1123 = vmatprep.subr.bf16.mxu0 %v963
      %1124 = vmatpush1.bf16.msra.mxu0 %v962
      %1125 = vmatprep.subr.bf16.mxu0 %v967
      %1126 = vmatpush1.bf16.msra.mxu0 %v966
      %1127 = vmatprep.subr.bf16.mxu0 %v971
      %1128 = vmatpush1.bf16.msra.mxu0 %v970
      %1129 = vmatprep.subr.bf16.mxu0 %v975
      %1130 = vmatpush1.bf16.msra.mxu0 %v974
      %1131 = vmatprep.subr.bf16.mxu0 0
      %1132 = vmatpush1.bf16.msra.mxu0 0
      %1133 = vmatprep.subr.bf16.mxu0 0
      %1134 = vmatpush1.bf16.msra.mxu0 0
      %1135 = vmatprep.subr.bf16.mxu0 0
      %1136 = vmatpush1.bf16.msra.mxu0 0
      %1137 = vmatprep.subr.bf16.mxu0 0
      %1138 = vmatpush1.bf16.msra.mxu0 0
      %1139 = vmatprep.subr.bf16.mxu0 0
      %1140 = vmatpush1.bf16.msra.mxu0 0
      %1141 = vmatprep.subr.bf16.mxu0 0
      %1142 = vmatpush1.bf16.msra.mxu0 0
      %1143 = vmatprep.subr.bf16.mxu0 0
      %1144 = vmatpush1.bf16.msra.mxu0 0
      %1145 = vmatprep.subr.bf16.mxu0 0
      %1146 = vmatpush1.bf16.msra.mxu0 0
      %1147 = vmatprep.mubr.bf16.mxu0 0
      %1148 = vmatmul.mubr.bf16.gmra.mrb[0].mxu0 %v497
      %v1149 = vpop.f32.mrb[0].mxu0
      %v1150 = vadd.f32 %v1109, %v1149
      %v1151 = vpop.f32.mrb[0].mxu0
      %v1152 = vadd.f32 %v1111, %v1151
      %v1153 = vpop.f32.mrb[0].mxu0
      %v1154 = vpop.f32.mrb[0].mxu0
      %1155 = vdwg.mxu0
      %1156 = vmatprep.subr.bf16.mxu0 %v885
      %1157 = vmatpush1.bf16.msra.mxu0 %v884
      %1158 = vmatprep.subr.bf16.mxu0 %v889
      %1159 = vmatpush1.bf16.msra.mxu0 %v888
      %1160 = vmatprep.subr.bf16.mxu0 %v893
      %1161 = vmatpush1.bf16.msra.mxu0 %v892
      %1162 = vmatprep.subr.bf16.mxu0 %v897
      %1163 = vmatpush1.bf16.msra.mxu0 %v896
      %1164 = vmatprep.subr.bf16.mxu0 %v901
      %1165 = vmatpush1.bf16.msra.mxu0 %v900
      %1166 = vmatprep.subr.bf16.mxu0 %v905
      %1167 = vmatpush1.bf16.msra.mxu0 %v904
      %1168 = vmatprep.subr.bf16.mxu0 %v909
      %1169 = vmatpush1.bf16.msra.mxu0 %v908
      %1170 = vmatprep.subr.bf16.mxu0 %v913
      %1171 = vmatpush1.bf16.msra.mxu0 %v912
      %1172 = vmatprep.subr.bf16.mxu0 %v917
      %1173 = vmatpush1.bf16.msra.mxu0 %v916
      %1174 = vmatprep.subr.bf16.mxu0 %v921
      %1175 = vmatpush1.bf16.msra.mxu0 %v920
      %1176 = vmatprep.subr.bf16.mxu0 %v925
      %1177 = vmatpush1.bf16.msra.mxu0 %v924
      %1178 = vmatprep.subr.bf16.mxu0 %v929
      %1179 = vmatpush1.bf16.msra.mxu0 %v928
      %1180 = vmatprep.subr.bf16.mxu0 %v933
      %1181 = vmatpush1.bf16.msra.mxu0 %v932
      %1182 = vmatprep.subr.bf16.mxu0 %v937
      %1183 = vmatpush1.bf16.msra.mxu0 %v936
      %1184 = vmatprep.subr.bf16.mxu0 %v941
      %1185 = vmatpush1.bf16.msra.mxu0 %v940
      %1186 = vmatprep.subr.bf16.mxu0 %v945
      %1187 = vmatpush1.bf16.msra.mxu0 %v944
      %1188 = vmatprep.mubr.bf16.mxu0 %v496
      %1189 = vmatmul.mubr.bf16.gmra.mrb[0].mxu0 %v495
      %v1190 = vpop.f32.mrb[0].mxu0
      %v1191 = vadd.f32 0.0, %v1190
      %v1192 = vpop.f32.mrb[0].mxu0
      %v1193 = vadd.f32 0.0, %v1192
      %v1194 = vpop.f32.mrb[0].mxu0
      %v1195 = vpop.f32.mrb[0].mxu0
      %1196 = vdwg.mxu0
      %1197 = vmatprep.subr.bf16.mxu0 %v949
      %1198 = vmatpush1.bf16.msra.mxu0 %v948
      %1199 = vmatprep.subr.bf16.mxu0 %v953
      %1200 = vmatpush1.bf16.msra.mxu0 %v952
      %1201 = vmatprep.subr.bf16.mxu0 %v957
      %1202 = vmatpush1.bf16.msra.mxu0 %v956
      %1203 = vmatprep.subr.bf16.mxu0 %v961
      %1204 = vmatpush1.bf16.msra.mxu0 %v960
      %1205 = vmatprep.subr.bf16.mxu0 %v965
      %1206 = vmatpush1.bf16.msra.mxu0 %v964
      %1207 = vmatprep.subr.bf16.mxu0 %v969
      %1208 = vmatpush1.bf16.msra.mxu0 %v968
      %1209 = vmatprep.subr.bf16.mxu0 %v973
      %1210 = vmatpush1.bf16.msra.mxu0 %v972
      %1211 = vmatprep.subr.bf16.mxu0 %v977
      %1212 = vmatpush1.bf16.msra.mxu0 %v976
      %1213 = vmatprep.subr.bf16.mxu0 0
      %1214 = vmatpush1.bf16.msra.mxu0 0
      %1215 = vmatprep.subr.bf16.mxu0 0
      %1216 = vmatpush1.bf16.msra.mxu0 0
      %1217 = vmatprep.subr.bf16.mxu0 0
      %1218 = vmatpush1.bf16.msra.mxu0 0
      %1219 = vmatprep.subr.bf16.mxu0 0
      %1220 = vmatpush1.bf16.msra.mxu0 0
      %1221 = vmatprep.subr.bf16.mxu0 0
      %1222 = vmatpush1.bf16.msra.mxu0 0
      %1223 = vmatprep.subr.bf16.mxu0 0
      %1224 = vmatpush1.bf16.msra.mxu0 0
      %1225 = vmatprep.subr.bf16.mxu0 0
      %1226 = vmatpush1.bf16.msra.mxu0 0
      %1227 = vmatprep.subr.bf16.mxu0 0
      %1228 = vmatpush1.bf16.msra.mxu0 0
      %1229 = vmatprep.mubr.bf16.mxu0 0
      %1230 = vmatmul.mubr.bf16.gmra.mrb[0].mxu0 %v497
      %v1231 = vpop.f32.mrb[0].mxu0
      %v1232 = vadd.f32 %v1191, %v1231
      %v1233 = vpop.f32.mrb[0].mxu0
      %v1234 = vadd.f32 %v1193, %v1233
      %v1235 = vpop.f32.mrb[0].mxu0
      %v1236 = vpop.f32.mrb[0].mxu0
      %1237 = vdwg.mxu0
      %v1238 = vld [vmem:[%s413] sm:$0xf]
      %v1239 = vld [vmem:[%s417] sm:$0xf]
      %vm1240 = vcmask 1041408
      %v1241 = vsel %vm1240, %v1150, 0.0
      %v1242 = vrot.slane %v1241, 4
      %v1243 = vadd.f32 %v1241, %v1242
      %v1244 = vrot.slane %v1243, 2
      %v1245 = vadd.f32 %v1243, %v1244
      %v1246 = vrot.slane %v1245, 1
      %v1247 = vadd.f32 %v1245, %v1246
      %v1248 = vsel %vm1240, %v1152, 0.0
      %v1249 = vrot.slane %v1248, 4
      %v1250 = vadd.f32 %v1248, %v1249
      %v1251 = vrot.slane %v1250, 2
      %v1252 = vadd.f32 %v1250, %v1251
      %v1253 = vrot.slane %v1252, 1
      %v1254 = vadd.f32 %v1252, %v1253
      %v1255 = vsel %vm1240, %v1232, 0.0
      %v1256 = vrot.slane %v1255, 4
      %v1257 = vadd.f32 %v1255, %v1256
      %v1258 = vrot.slane %v1257, 2
      %v1259 = vadd.f32 %v1257, %v1258
      %v1260 = vrot.slane %v1259, 1
      %v1261 = vadd.f32 %v1259, %v1260
      %v1262 = vsel %vm1240, %v1234, 0.0
      %v1263 = vrot.slane %v1262, 4
      %v1264 = vadd.f32 %v1262, %v1263
      %v1265 = vrot.slane %v1264, 2
      %v1266 = vadd.f32 %v1264, %v1265
      %v1267 = vrot.slane %v1266, 1
      %v1268 = vadd.f32 %v1266, %v1267
      %v1269 = vrcp.pop 2.0
      %v1270 = vmul.f32 %v1247, %v1269
      %v1271 = vmul.f32 %v1254, %v1269
      %v1272 = vmul.f32 %v1261, %v1269
      %v1273 = vmul.f32 %v1268, %v1269
      %v1274 = vsub.f32 %v1150, %v1270
      %v1275 = vsub.f32 %v1152, %v1271
      %v1276 = vsub.f32 %v1232, %v1272
      %v1277 = vsub.f32 %v1234, %v1273
      %v1278 = vmul.f32 %v1274, %v1274
      %v1279 = vmul.f32 %v1275, %v1275
      %v1280 = vmul.f32 %v1276, %v1276
      %v1281 = vmul.f32 %v1277, %v1277
      %v1282 = vsel %vm1240, %v1278, 0.0
      %v1283 = vrot.slane %v1282, 4
      %v1284 = vadd.f32 %v1282, %v1283
      %v1285 = vrot.slane %v1284, 2
      %v1286 = vadd.f32 %v1284, %v1285
      %v1287 = vrot.slane %v1286, 1
      %v1288 = vadd.f32 %v1286, %v1287
      %v1289 = vsel %vm1240, %v1279, 0.0
      %v1290 = vrot.slane %v1289, 4
      %v1291 = vadd.f32 %v1289, %v1290
      %v1292 = vrot.slane %v1291, 2
      %v1293 = vadd.f32 %v1291, %v1292
      %v1294 = vrot.slane %v1293, 1
      %v1295 = vadd.f32 %v1293, %v1294
      %v1296 = vsel %vm1240, %v1280, 0.0
      %v1297 = vrot.slane %v1296, 4
      %v1298 = vadd.f32 %v1296, %v1297
      %v1299 = vrot.slane %v1298, 2
      %v1300 = vadd.f32 %v1298, %v1299
      %v1301 = vrot.slane %v1300, 1
      %v1302 = vadd.f32 %v1300, %v1301
      %v1303 = vsel %vm1240, %v1281, 0.0
      %v1304 = vrot.slane %v1303, 4
      %v1305 = vadd.f32 %v1303, %v1304
      %v1306 = vrot.slane %v1305, 2
      %v1307 = vadd.f32 %v1305, %v1306
      %v1308 = vrot.slane %v1307, 1
      %v1309 = vadd.f32 %v1307, %v1308
      %v1310 = vmul.f32 %v1288, %v1269
      %v1311 = vmul.f32 %v1295, %v1269
      %v1312 = vmul.f32 %v1302, %v1269
      %v1313 = vmul.f32 %v1309, %v1269
      %v1314 = vadd.f32 %v1310, 1e-05
      %v1315 = vadd.f32 %v1311, 1e-05
      %v1316 = vadd.f32 %v1312, 1e-05
      %v1317 = vadd.f32 %v1313, 1e-05
      %v1318 = vrsqrt.pop %v1314
      %v1319 = vrsqrt.pop %v1315
      %v1320 = vrsqrt.pop %v1316
      %v1321 = vrsqrt.pop %v1317
      %v1322 = vmul.f32 %v1274, %v1318
      %v1323 = vmul.f32 %v1275, %v1319
      %v1324 = vmul.f32 %v1276, %v1320
      %v1325 = vmul.f32 %v1277, %v1321
      %v1327 = vlaneseq
      %v1328 = vshrl.u32 %v1327, 7
      %v1329 = vsub.s32 0, %v1328
      %v1330 = vrot.slane %v1238, %v1329
      %v1331 = vlaneseq
      %v1332 = vshrl.u32 %v1331, 7
      %v1333 = vsub.s32 1, %v1332
      %v1334 = vrot.slane %v1238, %v1333
      %v1335 = vlaneseq
      %v1336 = vshrl.u32 %v1335, 7
      %v1337 = vsub.s32 2, %v1336
      %v1338 = vrot.slane %v1238, %v1337
      %v1339 = vlaneseq
      %v1340 = vshrl.u32 %v1339, 7
      %v1341 = vsub.s32 3, %v1340
      %v1342 = vrot.slane %v1238, %v1341
      %v1347 = vmul.f32 %v1322, %v1330
      %v1348 = vmul.f32 %v1323, %v1334
      %v1349 = vmul.f32 %v1324, %v1338
      %v1350 = vmul.f32 %v1325, %v1342
      %v1352 = vlaneseq
      %v1353 = vshrl.u32 %v1352, 7
      %v1354 = vsub.s32 0, %v1353
      %v1355 = vrot.slane %v1239, %v1354
      %v1356 = vlaneseq
      %v1357 = vshrl.u32 %v1356, 7
      %v1358 = vsub.s32 1, %v1357
      %v1359 = vrot.slane %v1239, %v1358
      %v1360 = vlaneseq
      %v1361 = vshrl.u32 %v1360, 7
      %v1362 = vsub.s32 2, %v1361
      %v1363 = vrot.slane %v1239, %v1362
      %v1364 = vlaneseq
      %v1365 = vshrl.u32 %v1364, 7
      %v1366 = vsub.s32 3, %v1365
      %v1367 = vrot.slane %v1239, %v1366
      %v1372 = vadd.f32 %v1347, %v1355
      %v1373 = vadd.f32 %v1348, %v1359
      %v1374 = vadd.f32 %v1349, %v1363
      %v1375 = vadd.f32 %v1350, %v1367
      %v1376 = vmax.f32 %v1372, 0.0
      %v1377 = vmax.f32 %v1373, 0.0
      %v1378 = vmax.f32 %v1374, 0.0
      %v1379 = vmax.f32 %v1375, 0.0
      %v1380 = vpack.c.bf16 %v1376, %v1376
      %v1381 = vpack.c.bf16 %v1377, %v1377
      %v1382 = vpack.c.bf16 %v1378, %v1378
      %v1383 = vpack.c.bf16 %v1379, %v1379
      %v1384 = vld [vmem:[%s422] sm:$0xff]
      %v1385 = vld [vmem:[%s422 + $0x8] sm:$0xff]
      %v1386 = vld [vmem:[%s422 + $0x10] sm:$0xff]
      %v1387 = vld [vmem:[%s422 + $0x18] sm:$0xff]
      %v1388 = vld [vmem:[%s422 + $0x20] sm:$0xff]
      %v1389 = vld [vmem:[%s422 + $0x28] sm:$0xff]
      %v1390 = vld [vmem:[%s422 + $0x30] sm:$0xff]
      %v1391 = vld [vmem:[%s422 + $0x38] sm:$0xff]
      %v1392 = vld [vmem:[%s422 + $0x40] sm:$0xff]
      %v1393 = vld [vmem:[%s422 + $0x48] sm:$0xff]
      %v1394 = vld [vmem:[%s422 + $0x50] sm:$0xff]
      %v1395 = vld [vmem:[%s422 + $0x58] sm:$0xff]
      %v1396 = vld [vmem:[%s422 + $0x60] sm:$0xff]
      %v1397 = vld [vmem:[%s422 + $0x68] sm:$0xff]
      %v1398 = vld [vmem:[%s422 + $0x70] sm:$0xff]
      %v1399 = vld [vmem:[%s422 + $0x78] sm:$0xff]
      %v1400 = vld [vmem:[%s422 + $0x80] sm:$0xff]
      %v1401 = vld [vmem:[%s422 + $0x88] sm:$0xff]
      %v1402 = vld [vmem:[%s422 + $0x90] sm:$0xff]
      %v1403 = vld [vmem:[%s422 + $0x98] sm:$0xff]
      %v1404 = vld [vmem:[%s422 + $0xa0] sm:$0xff]
      %v1405 = vld [vmem:[%s422 + $0xa8] sm:$0xff]
      %v1406 = vld [vmem:[%s422 + $0xb0] sm:$0xff]
      %v1407 = vld [vmem:[%s422 + $0xb8] sm:$0xff]
      %v1408 = vld [vmem:[%s422 + $0xc0] sm:$0xff]
      %v1409 = vld [vmem:[%s422 + $0xc8] sm:$0xff]
      %v1410 = vld [vmem:[%s422 + $0xd0] sm:$0xff]
      %v1411 = vld [vmem:[%s422 + $0xd8] sm:$0xff]
      %v1412 = vld [vmem:[%s422 + $0xe0] sm:$0xff]
      %v1413 = vld [vmem:[%s422 + $0xe8] sm:$0xff]
      %v1414 = vld [vmem:[%s422 + $0xf0] sm:$0xff]
      %v1415 = vld [vmem:[%s422 + $0xf8] sm:$0xff]
      %v1416 = vld [vmem:[%s422 + $0x100] sm:$0xff]
      %v1417 = vld [vmem:[%s422 + $0x108] sm:$0xff]
      %v1418 = vld [vmem:[%s422 + $0x110] sm:$0xff]
      %v1419 = vld [vmem:[%s422 + $0x118] sm:$0xff]
      %v1420 = vld [vmem:[%s422 + $0x120] sm:$0xff]
      %v1421 = vld [vmem:[%s422 + $0x128] sm:$0xff]
      %v1422 = vld [vmem:[%s422 + $0x130] sm:$0xff]
      %v1423 = vld [vmem:[%s422 + $0x138] sm:$0xff]
      %v1424 = vld [vmem:[%s422 + $0x140] sm:$0xff]
      %v1425 = vld [vmem:[%s422 + $0x148] sm:$0xff]
      %v1426 = vld [vmem:[%s422 + $0x150] sm:$0xff]
      %v1427 = vld [vmem:[%s422 + $0x158] sm:$0xff]
      %v1428 = vld [vmem:[%s422 + $0x160] sm:$0xff]
      %v1429 = vld [vmem:[%s422 + $0x168] sm:$0xff]
      %v1430 = vld [vmem:[%s422 + $0x170] sm:$0xff]
      %v1431 = vld [vmem:[%s422 + $0x178] sm:$0xff]
      %v1432 = vld [vmem:[%s422 + $0x180] sm:$0xff]
      %v1433 = vld [vmem:[%s422 + $0x188] sm:$0xff]
      %v1434 = vld [vmem:[%s422 + $0x190] sm:$0xff]
      %v1435 = vld [vmem:[%s422 + $0x198] sm:$0xff]
      %v1436 = vld [vmem:[%s422 + $0x1a0] sm:$0xff]
      %v1437 = vld [vmem:[%s422 + $0x1a8] sm:$0xff]
      %v1438 = vld [vmem:[%s422 + $0x1b0] sm:$0xff]
      %v1439 = vld [vmem:[%s422 + $0x1b8] sm:$0xff]
      %v1440 = vld [vmem:[%s422 + $0x1c0] sm:$0xff]
      %v1441 = vld [vmem:[%s422 + $0x1c8] sm:$0xff]
      %v1442 = vld [vmem:[%s422 + $0x1d0] sm:$0xff]
      %v1443 = vld [vmem:[%s422 + $0x1d8] sm:$0xff]
      %v1444 = vld [vmem:[%s422 + $0x1e0] sm:$0xff]
      %v1445 = vld [vmem:[%s422 + $0x1e8] sm:$0xff]
      %v1446 = vld [vmem:[%s422 + $0x1f0] sm:$0xff]
      %v1447 = vld [vmem:[%s422 + $0x1f8] sm:$0xff]
      %v1448 = vld [vmem:[%s422 + $0x200] sm:$0xff]
      %v1449 = vld [vmem:[%s422 + $0x208] sm:$0xff]
      %v1450 = vld [vmem:[%s422 + $0x210] sm:$0xff]
      %v1451 = vld [vmem:[%s422 + $0x218] sm:$0xff]
      %v1452 = vld [vmem:[%s422 + $0x220] sm:$0xff]
      %v1453 = vld [vmem:[%s422 + $0x228] sm:$0xff]
      %v1454 = vld [vmem:[%s422 + $0x230] sm:$0xff]
      %v1455 = vld [vmem:[%s422 + $0x238] sm:$0xff]
      %v1456 = vld [vmem:[%s422 + $0x240] sm:$0xff]
      %v1457 = vld [vmem:[%s422 + $0x248] sm:$0xff]
      %v1458 = vld [vmem:[%s422 + $0x250] sm:$0xff]
      %v1459 = vld [vmem:[%s422 + $0x258] sm:$0xff]
      %v1460 = vld [vmem:[%s422 + $0x260] sm:$0xff]
      %v1461 = vld [vmem:[%s422 + $0x268] sm:$0xff]
      %v1462 = vld [vmem:[%s422 + $0x270] sm:$0xff]
      %v1463 = vld [vmem:[%s422 + $0x278] sm:$0xff]
      %v1464 = vld [vmem:[%s422 + $0x280] sm:$0xff]
      %v1465 = vld [vmem:[%s422 + $0x288] sm:$0xff]
      %v1466 = vld [vmem:[%s422 + $0x290] sm:$0xff]
      %v1467 = vld [vmem:[%s422 + $0x298] sm:$0xff]
      %v1468 = vld [vmem:[%s422 + $0x2a0] sm:$0xff]
      %v1469 = vld [vmem:[%s422 + $0x2a8] sm:$0xff]
      %v1470 = vld [vmem:[%s422 + $0x2b0] sm:$0xff]
      %v1471 = vld [vmem:[%s422 + $0x2b8] sm:$0xff]
      %v1472 = vld [vmem:[%s422 + $0x2c0] sm:$0xff]
      %v1473 = vld [vmem:[%s422 + $0x2c8] sm:$0xff]
      %v1474 = vld [vmem:[%s422 + $0x2d0] sm:$0xff]
      %v1475 = vld [vmem:[%s422 + $0x2d8] sm:$0xff]
      %v1476 = vld [vmem:[%s422 + $0x2e0] sm:$0xff]
      %v1477 = vld [vmem:[%s422 + $0x2e8] sm:$0xff]
      %v1478 = vld [vmem:[%s422 + $0x2f0] sm:$0xff]
      %v1479 = vld [vmem:[%s422 + $0x2f8] sm:$0xff]
      %v1480 = vld [vmem:[%s422 + $0x300] sm:$0xff]
      %v1481 = vld [vmem:[%s422 + $0x308] sm:$0xff]
      %v1482 = vld [vmem:[%s422 + $0x310] sm:$0xff]
      %v1483 = vld [vmem:[%s422 + $0x318] sm:$0xff]
      %v1484 = vld [vmem:[%s422 + $0x320] sm:$0xff]
      %v1485 = vld [vmem:[%s422 + $0x328] sm:$0xff]
      %v1486 = vld [vmem:[%s422 + $0x330] sm:$0xff]
      %v1487 = vld [vmem:[%s422 + $0x338] sm:$0xff]
      %v1488 = vld [vmem:[%s422 + $0x340] sm:$0xff]
      %v1489 = vld [vmem:[%s422 + $0x348] sm:$0xff]
      %v1490 = vld [vmem:[%s422 + $0x350] sm:$0xff]
      %v1491 = vld [vmem:[%s422 + $0x358] sm:$0xff]
      %v1492 = vld [vmem:[%s422 + $0x360] sm:$0xff]
      %v1493 = vld [vmem:[%s422 + $0x368] sm:$0xff]
      %v1494 = vld [vmem:[%s422 + $0x370] sm:$0xff]
      %v1495 = vld [vmem:[%s422 + $0x378] sm:$0xff]
      %v1496 = vld [vmem:[%s422 + $0x380] sm:$0xff]
      %v1497 = vld [vmem:[%s422 + $0x388] sm:$0xff]
      %v1498 = vld [vmem:[%s422 + $0x390] sm:$0xff]
      %v1499 = vld [vmem:[%s422 + $0x398] sm:$0xff]
      %v1500 = vld [vmem:[%s422 + $0x3a0] sm:$0xff]
      %v1501 = vld [vmem:[%s422 + $0x3a8] sm:$0xff]
      %v1502 = vld [vmem:[%s422 + $0x3b0] sm:$0xff]
      %v1503 = vld [vmem:[%s422 + $0x3b8] sm:$0xff]
      %v1504 = vld [vmem:[%s422 + $0x3c0] sm:$0xff]
      %v1505 = vld [vmem:[%s422 + $0x3c8] sm:$0xff]
      %v1506 = vld [vmem:[%s422 + $0x3d0] sm:$0xff]
      %v1507 = vld [vmem:[%s422 + $0x3d8] sm:$0xff]
      %v1508 = vld [vmem:[%s422 + $0x3e0] sm:$0xff]
      %v1509 = vld [vmem:[%s422 + $0x3e8] sm:$0xff]
      %v1510 = vld [vmem:[%s422 + $0x3f0] sm:$0xff]
      %v1511 = vld [vmem:[%s422 + $0x3f8] sm:$0xff]
      %v1640 = vunpack.c.l.b16 %v1384
      %v1641 = vunpack.c.h.b16 %v1384
      %v1642 = vunpack.c.l.b16 %v1385
      %v1643 = vunpack.c.h.b16 %v1385
      %v1644 = vunpack.c.l.b16 %v1386
      %v1645 = vunpack.c.h.b16 %v1386
      %v1646 = vunpack.c.l.b16 %v1387
      %v1647 = vunpack.c.h.b16 %v1387
      %v1648 = vunpack.c.l.b16 %v1388
      %v1649 = vunpack.c.h.b16 %v1388
      %v1650 = vunpack.c.l.b16 %v1389
      %v1651 = vunpack.c.h.b16 %v1389
      %v1652 = vunpack.c.l.b16 %v1390
      %v1653 = vunpack.c.h.b16 %v1390
      %v1654 = vunpack.c.l.b16 %v1391
      %v1655 = vunpack.c.h.b16 %v1391
      %v1656 = vunpack.c.l.b16 %v1392
      %v1657 = vunpack.c.h.b16 %v1392
      %v1658 = vunpack.c.l.b16 %v1393
      %v1659 = vunpack.c.h.b16 %v1393
      %v1660 = vunpack.c.l.b16 %v1394
      %v1661 = vunpack.c.h.b16 %v1394
      %v1662 = vunpack.c.l.b16 %v1395
      %v1663 = vunpack.c.h.b16 %v1395
      %v1664 = vunpack.c.l.b16 %v1396
      %v1665 = vunpack.c.h.b16 %v1396
      %v1666 = vunpack.c.l.b16 %v1397
      %v1667 = vunpack.c.h.b16 %v1397
      %v1668 = vunpack.c.l.b16 %v1398
      %v1669 = vunpack.c.h.b16 %v1398
      %v1670 = vunpack.c.l.b16 %v1399
      %v1671 = vunpack.c.h.b16 %v1399
      %v1672 = vunpack.c.l.b16 %v1400
      %v1673 = vunpack.c.h.b16 %v1400
      %v1674 = vunpack.c.l.b16 %v1401
      %v1675 = vunpack.c.h.b16 %v1401
      %v1676 = vunpack.c.l.b16 %v1402
      %v1677 = vunpack.c.h.b16 %v1402
      %v1678 = vunpack.c.l.b16 %v1403
      %v1679 = vunpack.c.h.b16 %v1403
      %v1680 = vunpack.c.l.b16 %v1404
      %v1681 = vunpack.c.h.b16 %v1404
      %v1682 = vunpack.c.l.b16 %v1405
      %v1683 = vunpack.c.h.b16 %v1405
      %v1684 = vunpack.c.l.b16 %v1406
      %v1685 = vunpack.c.h.b16 %v1406
      %v1686 = vunpack.c.l.b16 %v1407
      %v1687 = vunpack.c.h.b16 %v1407
      %v1688 = vunpack.c.l.b16 %v1408
      %v1689 = vunpack.c.h.b16 %v1408
      %v1690 = vunpack.c.l.b16 %v1409
      %v1691 = vunpack.c.h.b16 %v1409
      %v1692 = vunpack.c.l.b16 %v1410
      %v1693 = vunpack.c.h.b16 %v1410
      %v1694 = vunpack.c.l.b16 %v1411
      %v1695 = vunpack.c.h.b16 %v1411
      %v1696 = vunpack.c.l.b16 %v1412
      %v1697 = vunpack.c.h.b16 %v1412
      %v1698 = vunpack.c.l.b16 %v1413
      %v1699 = vunpack.c.h.b16 %v1413
      %v1700 = vunpack.c.l.b16 %v1414
      %v1701 = vunpack.c.h.b16 %v1414
      %v1702 = vunpack.c.l.b16 %v1415
      %v1703 = vunpack.c.h.b16 %v1415
      %v1704 = vunpack.c.l.b16 %v1416
      %v1705 = vunpack.c.h.b16 %v1416
      %v1706 = vunpack.c.l.b16 %v1417
      %v1707 = vunpack.c.h.b16 %v1417
      %v1708 = vunpack.c.l.b16 %v1418
      %v1709 = vunpack.c.h.b16 %v1418
      %v1710 = vunpack.c.l.b16 %v1419
      %v1711 = vunpack.c.h.b16 %v1419
      %v1712 = vunpack.c.l.b16 %v1420
      %v1713 = vunpack.c.h.b16 %v1420
      %v1714 = vunpack.c.l.b16 %v1421
      %v1715 = vunpack.c.h.b16 %v1421
      %v1716 = vunpack.c.l.b16 %v1422
      %v1717 = vunpack.c.h.b16 %v1422
      %v1718 = vunpack.c.l.b16 %v1423
      %v1719 = vunpack.c.h.b16 %v1423
      %v1720 = vunpack.c.l.b16 %v1424
      %v1721 = vunpack.c.h.b16 %v1424
      %v1722 = vunpack.c.l.b16 %v1425
      %v1723 = vunpack.c.h.b16 %v1425
      %v1724 = vunpack.c.l.b16 %v1426
      %v1725 = vunpack.c.h.b16 %v1426
      %v1726 = vunpack.c.l.b16 %v1427
      %v1727 = vunpack.c.h.b16 %v1427
      %v1728 = vunpack.c.l.b16 %v1428
      %v1729 = vunpack.c.h.b16 %v1428
      %v1730 = vunpack.c.l.b16 %v1429
      %v1731 = vunpack.c.h.b16 %v1429
      %v1732 = vunpack.c.l.b16 %v1430
      %v1733 = vunpack.c.h.b16 %v1430
      %v1734 = vunpack.c.l.b16 %v1431
      %v1735 = vunpack.c.h.b16 %v1431
      %v1736 = vunpack.c.l.b16 %v1432
      %v1737 = vunpack.c.h.b16 %v1432
      %v1738 = vunpack.c.l.b16 %v1433
      %v1739 = vunpack.c.h.b16 %v1433
      %v1740 = vunpack.c.l.b16 %v1434
      %v1741 = vunpack.c.h.b16 %v1434
      %v1742 = vunpack.c.l.b16 %v1435
      %v1743 = vunpack.c.h.b16 %v1435
      %v1744 = vunpack.c.l.b16 %v1436
      %v1745 = vunpack.c.h.b16 %v1436
      %v1746 = vunpack.c.l.b16 %v1437
      %v1747 = vunpack.c.h.b16 %v1437
      %v1748 = vunpack.c.l.b16 %v1438
      %v1749 = vunpack.c.h.b16 %v1438
      %v1750 = vunpack.c.l.b16 %v1439
      %v1751 = vunpack.c.h.b16 %v1439
      %v1752 = vunpack.c.l.b16 %v1440
      %v1753 = vunpack.c.h.b16 %v1440
      %v1754 = vunpack.c.l.b16 %v1441
      %v1755 = vunpack.c.h.b16 %v1441
      %v1756 = vunpack.c.l.b16 %v1442
      %v1757 = vunpack.c.h.b16 %v1442
      %v1758 = vunpack.c.l.b16 %v1443
      %v1759 = vunpack.c.h.b16 %v1443
      %v1760 = vunpack.c.l.b16 %v1444
      %v1761 = vunpack.c.h.b16 %v1444
      %v1762 = vunpack.c.l.b16 %v1445
      %v1763 = vunpack.c.h.b16 %v1445
      %v1764 = vunpack.c.l.b16 %v1446
      %v1765 = vunpack.c.h.b16 %v1446
      %v1766 = vunpack.c.l.b16 %v1447
      %v1767 = vunpack.c.h.b16 %v1447
      %v1768 = vunpack.c.l.b16 %v1448
      %v1769 = vunpack.c.h.b16 %v1448
      %v1770 = vunpack.c.l.b16 %v1449
      %v1771 = vunpack.c.h.b16 %v1449
      %v1772 = vunpack.c.l.b16 %v1450
      %v1773 = vunpack.c.h.b16 %v1450
      %v1774 = vunpack.c.l.b16 %v1451
      %v1775 = vunpack.c.h.b16 %v1451
      %v1776 = vunpack.c.l.b16 %v1452
      %v1777 = vunpack.c.h.b16 %v1452
      %v1778 = vunpack.c.l.b16 %v1453
      %v1779 = vunpack.c.h.b16 %v1453
      %v1780 = vunpack.c.l.b16 %v1454
      %v1781 = vunpack.c.h.b16 %v1454
      %v1782 = vunpack.c.l.b16 %v1455
      %v1783 = vunpack.c.h.b16 %v1455
      %v1784 = vunpack.c.l.b16 %v1456
      %v1785 = vunpack.c.h.b16 %v1456
      %v1786 = vunpack.c.l.b16 %v1457
      %v1787 = vunpack.c.h.b16 %v1457
      %v1788 = vunpack.c.l.b16 %v1458
      %v1789 = vunpack.c.h.b16 %v1458
      %v1790 = vunpack.c.l.b16 %v1459
      %v1791 = vunpack.c.h.b16 %v1459
      %v1792 = vunpack.c.l.b16 %v1460
      %v1793 = vunpack.c.h.b16 %v1460
      %v1794 = vunpack.c.l.b16 %v1461
      %v1795 = vunpack.c.h.b16 %v1461
      %v1796 = vunpack.c.l.b16 %v1462
      %v1797 = vunpack.c.h.b16 %v1462
      %v1798 = vunpack.c.l.b16 %v1463
      %v1799 = vunpack.c.h.b16 %v1463
      %v1800 = vunpack.c.l.b16 %v1464
      %v1801 = vunpack.c.h.b16 %v1464
      %v1802 = vunpack.c.l.b16 %v1465
      %v1803 = vunpack.c.h.b16 %v1465
      %v1804 = vunpack.c.l.b16 %v1466
      %v1805 = vunpack.c.h.b16 %v1466
      %v1806 = vunpack.c.l.b16 %v1467
      %v1807 = vunpack.c.h.b16 %v1467
      %v1808 = vunpack.c.l.b16 %v1468
      %v1809 = vunpack.c.h.b16 %v1468
      %v1810 = vunpack.c.l.b16 %v1469
      %v1811 = vunpack.c.h.b16 %v1469
      %v1812 = vunpack.c.l.b16 %v1470
      %v1813 = vunpack.c.h.b16 %v1470
      %v1814 = vunpack.c.l.b16 %v1471
      %v1815 = vunpack.c.h.b16 %v1471
      %v1816 = vunpack.c.l.b16 %v1472
      %v1817 = vunpack.c.h.b16 %v1472
      %v1818 = vunpack.c.l.b16 %v1473
      %v1819 = vunpack.c.h.b16 %v1473
      %v1820 = vunpack.c.l.b16 %v1474
      %v1821 = vunpack.c.h.b16 %v1474
      %v1822 = vunpack.c.l.b16 %v1475
      %v1823 = vunpack.c.h.b16 %v1475
      %v1824 = vunpack.c.l.b16 %v1476
      %v1825 = vunpack.c.h.b16 %v1476
      %v1826 = vunpack.c.l.b16 %v1477
      %v1827 = vunpack.c.h.b16 %v1477
      %v1828 = vunpack.c.l.b16 %v1478
      %v1829 = vunpack.c.h.b16 %v1478
      %v1830 = vunpack.c.l.b16 %v1479
      %v1831 = vunpack.c.h.b16 %v1479
      %v1832 = vunpack.c.l.b16 %v1480
      %v1833 = vunpack.c.h.b16 %v1480
      %v1834 = vunpack.c.l.b16 %v1481
      %v1835 = vunpack.c.h.b16 %v1481
      %v1836 = vunpack.c.l.b16 %v1482
      %v1837 = vunpack.c.h.b16 %v1482
      %v1838 = vunpack.c.l.b16 %v1483
      %v1839 = vunpack.c.h.b16 %v1483
      %v1840 = vunpack.c.l.b16 %v1484
      %v1841 = vunpack.c.h.b16 %v1484
      %v1842 = vunpack.c.l.b16 %v1485
      %v1843 = vunpack.c.h.b16 %v1485
      %v1844 = vunpack.c.l.b16 %v1486
      %v1845 = vunpack.c.h.b16 %v1486
      %v1846 = vunpack.c.l.b16 %v1487
      %v1847 = vunpack.c.h.b16 %v1487
      %v1848 = vunpack.c.l.b16 %v1488
      %v1849 = vunpack.c.h.b16 %v1488
      %v1850 = vunpack.c.l.b16 %v1489
      %v1851 = vunpack.c.h.b16 %v1489
      %v1852 = vunpack.c.l.b16 %v1490
      %v1853 = vunpack.c.h.b16 %v1490
      %v1854 = vunpack.c.l.b16 %v1491
      %v1855 = vunpack.c.h.b16 %v1491
      %v1856 = vunpack.c.l.b16 %v1492
      %v1857 = vunpack.c.h.b16 %v1492
      %v1858 = vunpack.c.l.b16 %v1493
      %v1859 = vunpack.c.h.b16 %v1493
      %v1860 = vunpack.c.l.b16 %v1494
      %v1861 = vunpack.c.h.b16 %v1494
      %v1862 = vunpack.c.l.b16 %v1495
      %v1863 = vunpack.c.h.b16 %v1495
      %v1864 = vunpack.c.l.b16 %v1496
      %v1865 = vunpack.c.h.b16 %v1496
      %v1866 = vunpack.c.l.b16 %v1497
      %v1867 = vunpack.c.h.b16 %v1497
      %v1868 = vunpack.c.l.b16 %v1498
      %v1869 = vunpack.c.h.b16 %v1498
      %v1870 = vunpack.c.l.b16 %v1499
      %v1871 = vunpack.c.h.b16 %v1499
      %v1872 = vunpack.c.l.b16 %v1500
      %v1873 = vunpack.c.h.b16 %v1500
      %v1874 = vunpack.c.l.b16 %v1501
      %v1875 = vunpack.c.h.b16 %v1501
      %v1876 = vunpack.c.l.b16 %v1502
      %v1877 = vunpack.c.h.b16 %v1502
      %v1878 = vunpack.c.l.b16 %v1503
      %v1879 = vunpack.c.h.b16 %v1503
      %v1880 = vunpack.c.l.b16 %v1504
      %v1881 = vunpack.c.h.b16 %v1504
      %v1882 = vunpack.c.l.b16 %v1505
      %v1883 = vunpack.c.h.b16 %v1505
      %v1884 = vunpack.c.l.b16 %v1506
      %v1885 = vunpack.c.h.b16 %v1506
      %v1886 = vunpack.c.l.b16 %v1507
      %v1887 = vunpack.c.h.b16 %v1507
      %v1888 = vunpack.c.l.b16 %v1508
      %v1889 = vunpack.c.h.b16 %v1508
      %v1890 = vunpack.c.l.b16 %v1509
      %v1891 = vunpack.c.h.b16 %v1509
      %v1892 = vunpack.c.l.b16 %v1510
      %v1893 = vunpack.c.h.b16 %v1510
      %v1894 = vunpack.c.l.b16 %v1511
      %v1895 = vunpack.c.h.b16 %v1511
      %v1896 = vpack.c.b16 %v1644, %v1640
      %v1897 = vpack.c.b16 %v1645, %v1641
      %v1898 = vpack.c.b16 %v1646, %v1642
      %v1899 = vpack.c.b16 %v1647, %v1643
      %v1900 = vpack.c.b16 %v1652, %v1648
      %v1901 = vpack.c.b16 %v1653, %v1649
      %v1902 = vpack.c.b16 %v1654, %v1650
      %v1903 = vpack.c.b16 %v1655, %v1651
      %v1904 = vpack.c.b16 %v1660, %v1656
      %v1905 = vpack.c.b16 %v1661, %v1657
      %v1906 = vpack.c.b16 %v1662, %v1658
      %v1907 = vpack.c.b16 %v1663, %v1659
      %v1908 = vpack.c.b16 %v1668, %v1664
      %v1909 = vpack.c.b16 %v1669, %v1665
      %v1910 = vpack.c.b16 %v1670, %v1666
      %v1911 = vpack.c.b16 %v1671, %v1667
      %v1912 = vpack.c.b16 %v1676, %v1672
      %v1913 = vpack.c.b16 %v1677, %v1673
      %v1914 = vpack.c.b16 %v1678, %v1674
      %v1915 = vpack.c.b16 %v1679, %v1675
      %v1916 = vpack.c.b16 %v1684, %v1680
      %v1917 = vpack.c.b16 %v1685, %v1681
      %v1918 = vpack.c.b16 %v1686, %v1682
      %v1919 = vpack.c.b16 %v1687, %v1683
      %v1920 = vpack.c.b16 %v1692, %v1688
      %v1921 = vpack.c.b16 %v1693, %v1689
      %v1922 = vpack.c.b16 %v1694, %v1690
      %v1923 = vpack.c.b16 %v1695, %v1691
      %v1924 = vpack.c.b16 %v1700, %v1696
      %v1925 = vpack.c.b16 %v1701, %v1697
      %v1926 = vpack.c.b16 %v1702, %v1698
      %v1927 = vpack.c.b16 %v1703, %v1699
      %v1928 = vpack.c.b16 %v1708, %v1704
      %v1929 = vpack.c.b16 %v1709, %v1705
      %v1930 = vpack.c.b16 %v1710, %v1706
      %v1931 = vpack.c.b16 %v1711, %v1707
      %v1932 = vpack.c.b16 %v1716, %v1712
      %v1933 = vpack.c.b16 %v1717, %v1713
      %v1934 = vpack.c.b16 %v1718, %v1714
      %v1935 = vpack.c.b16 %v1719, %v1715
      %v1936 = vpack.c.b16 %v1724, %v1720
      %v1937 = vpack.c.b16 %v1725, %v1721
      %v1938 = vpack.c.b16 %v1726, %v1722
      %v1939 = vpack.c.b16 %v1727, %v1723
      %v1940 = vpack.c.b16 %v1732, %v1728
      %v1941 = vpack.c.b16 %v1733, %v1729
      %v1942 = vpack.c.b16 %v1734, %v1730
      %v1943 = vpack.c.b16 %v1735, %v1731
      %v1944 = vpack.c.b16 %v1740, %v1736
      %v1945 = vpack.c.b16 %v1741, %v1737
      %v1946 = vpack.c.b16 %v1742, %v1738
      %v1947 = vpack.c.b16 %v1743, %v1739
      %v1948 = vpack.c.b16 %v1748, %v1744
      %v1949 = vpack.c.b16 %v1749, %v1745
      %v1950 = vpack.c.b16 %v1750, %v1746
      %v1951 = vpack.c.b16 %v1751, %v1747
      %v1952 = vpack.c.b16 %v1756, %v1752
      %v1953 = vpack.c.b16 %v1757, %v1753
      %v1954 = vpack.c.b16 %v1758, %v1754
      %v1955 = vpack.c.b16 %v1759, %v1755
      %v1956 = vpack.c.b16 %v1764, %v1760
      %v1957 = vpack.c.b16 %v1765, %v1761
      %v1958 = vpack.c.b16 %v1766, %v1762
      %v1959 = vpack.c.b16 %v1767, %v1763
      %v1960 = vpack.c.b16 %v1772, %v1768
      %v1961 = vpack.c.b16 %v1773, %v1769
      %v1962 = vpack.c.b16 %v1774, %v1770
      %v1963 = vpack.c.b16 %v1775, %v1771
      %v1964 = vpack.c.b16 %v1780, %v1776
      %v1965 = vpack.c.b16 %v1781, %v1777
      %v1966 = vpack.c.b16 %v1782, %v1778
      %v1967 = vpack.c.b16 %v1783, %v1779
      %v1968 = vpack.c.b16 %v1788, %v1784
      %v1969 = vpack.c.b16 %v1789, %v1785
      %v1970 = vpack.c.b16 %v1790, %v1786
      %v1971 = vpack.c.b16 %v1791, %v1787
      %v1972 = vpack.c.b16 %v1796, %v1792
      %v1973 = vpack.c.b16 %v1797, %v1793
      %v1974 = vpack.c.b16 %v1798, %v1794
      %v1975 = vpack.c.b16 %v1799, %v1795
      %v1976 = vpack.c.b16 %v1804, %v1800
      %v1977 = vpack.c.b16 %v1805, %v1801
      %v1978 = vpack.c.b16 %v1806, %v1802
      %v1979 = vpack.c.b16 %v1807, %v1803
      %v1980 = vpack.c.b16 %v1812, %v1808
      %v1981 = vpack.c.b16 %v1813, %v1809
      %v1982 = vpack.c.b16 %v1814, %v1810
      %v1983 = vpack.c.b16 %v1815, %v1811
      %v1984 = vpack.c.b16 %v1820, %v1816
      %v1985 = vpack.c.b16 %v1821, %v1817
      %v1986 = vpack.c.b16 %v1822, %v1818
      %v1987 = vpack.c.b16 %v1823, %v1819
      %v1988 = vpack.c.b16 %v1828, %v1824
      %v1989 = vpack.c.b16 %v1829, %v1825
      %v1990 = vpack.c.b16 %v1830, %v1826
      %v1991 = vpack.c.b16 %v1831, %v1827
      %v1992 = vpack.c.b16 %v1836, %v1832
      %v1993 = vpack.c.b16 %v1837, %v1833
      %v1994 = vpack.c.b16 %v1838, %v1834
      %v1995 = vpack.c.b16 %v1839, %v1835
      %v1996 = vpack.c.b16 %v1844, %v1840
      %v1997 = vpack.c.b16 %v1845, %v1841
      %v1998 = vpack.c.b16 %v1846, %v1842
      %v1999 = vpack.c.b16 %v1847, %v1843
      %v2000 = vpack.c.b16 %v1852, %v1848
      %v2001 = vpack.c.b16 %v1853, %v1849
      %v2002 = vpack.c.b16 %v1854, %v1850
      %v2003 = vpack.c.b16 %v1855, %v1851
      %v2004 = vpack.c.b16 %v1860, %v1856
      %v2005 = vpack.c.b16 %v1861, %v1857
      %v2006 = vpack.c.b16 %v1862, %v1858
      %v2007 = vpack.c.b16 %v1863, %v1859
      %v2008 = vpack.c.b16 %v1868, %v1864
      %v2009 = vpack.c.b16 %v1869, %v1865
      %v2010 = vpack.c.b16 %v1870, %v1866
      %v2011 = vpack.c.b16 %v1871, %v1867
      %v2012 = vpack.c.b16 %v1876, %v1872
      %v2013 = vpack.c.b16 %v1877, %v1873
      %v2014 = vpack.c.b16 %v1878, %v1874
      %v2015 = vpack.c.b16 %v1879, %v1875
      %v2016 = vpack.c.b16 %v1884, %v1880
      %v2017 = vpack.c.b16 %v1885, %v1881
      %v2018 = vpack.c.b16 %v1886, %v1882
      %v2019 = vpack.c.b16 %v1887, %v1883
      %v2020 = vpack.c.b16 %v1892, %v1888
      %v2021 = vpack.c.b16 %v1893, %v1889
      %v2022 = vpack.c.b16 %v1894, %v1890
      %v2023 = vpack.c.b16 %v1895, %v1891
      %2152 = vmatprep.subr.bf16.mxu0 %v1897
      %2153 = vmatpush1.bf16.msra.mxu0 %v1896
      %2154 = vmatprep.subr.bf16.mxu0 %v1901
      %2155 = vmatpush1.bf16.msra.mxu0 %v1900
      %2156 = vmatprep.subr.bf16.mxu0 %v1905
      %2157 = vmatpush1.bf16.msra.mxu0 %v1904
      %2158 = vmatprep.subr.bf16.mxu0 %v1909
      %2159 = vmatpush1.bf16.msra.mxu0 %v1908
      %2160 = vmatprep.subr.bf16.mxu0 %v1913
      %2161 = vmatpush1.bf16.msra.mxu0 %v1912
      %2162 = vmatprep.subr.bf16.mxu0 %v1917
      %2163 = vmatpush1.bf16.msra.mxu0 %v1916
      %2164 = vmatprep.subr.bf16.mxu0 %v1921
      %2165 = vmatpush1.bf16.msra.mxu0 %v1920
      %2166 = vmatprep.subr.bf16.mxu0 %v1925
      %2167 = vmatpush1.bf16.msra.mxu0 %v1924
      %2168 = vmatprep.subr.bf16.mxu0 %v1929
      %2169 = vmatpush1.bf16.msra.mxu0 %v1928
      %2170 = vmatprep.subr.bf16.mxu0 %v1933
      %2171 = vmatpush1.bf16.msra.mxu0 %v1932
      %2172 = vmatprep.subr.bf16.mxu0 %v1937
      %2173 = vmatpush1.bf16.msra.mxu0 %v1936
      %2174 = vmatprep.subr.bf16.mxu0 %v1941
      %2175 = vmatpush1.bf16.msra.mxu0 %v1940
      %2176 = vmatprep.subr.bf16.mxu0 %v1945
      %2177 = vmatpush1.bf16.msra.mxu0 %v1944
      %2178 = vmatprep.subr.bf16.mxu0 %v1949
      %2179 = vmatpush1.bf16.msra.mxu0 %v1948
      %2180 = vmatprep.subr.bf16.mxu0 %v1953
      %2181 = vmatpush1.bf16.msra.mxu0 %v1952
      %2182 = vmatprep.subr.bf16.mxu0 %v1957
      %2183 = vmatpush1.bf16.msra.mxu0 %v1956
      %2184 = vmatprep.mubr.bf16.mxu0 %v1381
      %2185 = vmatmul.mubr.bf16.gmra.mrb[0].mxu0 %v1380
      %v2186 = vpop.f32.mrb[0].mxu0
      %v2187 = vadd.f32 0.0, %v2186
      %v2188 = vpop.f32.mrb[0].mxu0
      %v2189 = vadd.f32 0.0, %v2188
      %v2190 = vpop.f32.mrb[0].mxu0
      %v2191 = vpop.f32.mrb[0].mxu0
      %2192 = vdwg.mxu0
      %2193 = vmatprep.subr.bf16.mxu0 %v1961
      %2194 = vmatpush1.bf16.msra.mxu0 %v1960
      %2195 = vmatprep.subr.bf16.mxu0 %v1965
      %2196 = vmatpush1.bf16.msra.mxu0 %v1964
      %2197 = vmatprep.subr.bf16.mxu0 %v1969
      %2198 = vmatpush1.bf16.msra.mxu0 %v1968
      %2199 = vmatprep.subr.bf16.mxu0 %v1973
      %2200 = vmatpush1.bf16.msra.mxu0 %v1972
      %2201 = vmatprep.subr.bf16.mxu0 %v1977
      %2202 = vmatpush1.bf16.msra.mxu0 %v1976
      %2203 = vmatprep.subr.bf16.mxu0 %v1981
      %2204 = vmatpush1.bf16.msra.mxu0 %v1980
      %2205 = vmatprep.subr.bf16.mxu0 %v1985
      %2206 = vmatpush1.bf16.msra.mxu0 %v1984
      %2207 = vmatprep.subr.bf16.mxu0 %v1989
      %2208 = vmatpush1.bf16.msra.mxu0 %v1988
      %2209 = vmatprep.subr.bf16.mxu0 %v1993
      %2210 = vmatpush1.bf16.msra.mxu0 %v1992
      %2211 = vmatprep.subr.bf16.mxu0 %v1997
      %2212 = vmatpush1.bf16.msra.mxu0 %v1996
      %2213 = vmatprep.subr.bf16.mxu0 %v2001
      %2214 = vmatpush1.bf16.msra.mxu0 %v2000
      %2215 = vmatprep.subr.bf16.mxu0 %v2005
      %2216 = vmatpush1.bf16.msra.mxu0 %v2004
      %2217 = vmatprep.subr.bf16.mxu0 %v2009
      %2218 = vmatpush1.bf16.msra.mxu0 %v2008
      %2219 = vmatprep.subr.bf16.mxu0 %v2013
      %2220 = vmatpush1.bf16.msra.mxu0 %v2012
      %2221 = vmatprep.subr.bf16.mxu0 %v2017
      %2222 = vmatpush1.bf16.msra.mxu0 %v2016
      %2223 = vmatprep.subr.bf16.mxu0 %v2021
      %2224 = vmatpush1.bf16.msra.mxu0 %v2020
      %2225 = vmatprep.mubr.bf16.mxu0 %v1383
      %2226 = vmatmul.mubr.bf16.gmra.mrb[0].mxu0 %v1382
      %v2227 = vpop.f32.mrb[0].mxu0
      %v2228 = vadd.f32 %v2187, %v2227
      %v2229 = vpop.f32.mrb[0].mxu0
      %v2230 = vadd.f32 %v2189, %v2229
      %v2231 = vpop.f32.mrb[0].mxu0
      %v2232 = vpop.f32.mrb[0].mxu0
      %2233 = vdwg.mxu0
      %2234 = vmatprep.subr.bf16.mxu0 %v1899
      %2235 = vmatpush1.bf16.msra.mxu0 %v1898
      %2236 = vmatprep.subr.bf16.mxu0 %v1903
      %2237 = vmatpush1.bf16.msra.mxu0 %v1902
      %2238 = vmatprep.subr.bf16.mxu0 %v1907
      %2239 = vmatpush1.bf16.msra.mxu0 %v1906
      %2240 = vmatprep.subr.bf16.mxu0 %v1911
      %2241 = vmatpush1.bf16.msra.mxu0 %v1910
      %2242 = vmatprep.subr.bf16.mxu0 %v1915
      %2243 = vmatpush1.bf16.msra.mxu0 %v1914
      %2244 = vmatprep.subr.bf16.mxu0 %v1919
      %2245 = vmatpush1.bf16.msra.mxu0 %v1918
      %2246 = vmatprep.subr.bf16.mxu0 %v1923
      %2247 = vmatpush1.bf16.msra.mxu0 %v1922
      %2248 = vmatprep.subr.bf16.mxu0 %v1927
      %2249 = vmatpush1.bf16.msra.mxu0 %v1926
      %2250 = vmatprep.subr.bf16.mxu0 %v1931
      %2251 = vmatpush1.bf16.msra.mxu0 %v1930
      %2252 = vmatprep.subr.bf16.mxu0 %v1935
      %2253 = vmatpush1.bf16.msra.mxu0 %v1934
      %2254 = vmatprep.subr.bf16.mxu0 %v1939
      %2255 = vmatpush1.bf16.msra.mxu0 %v1938
      %2256 = vmatprep.subr.bf16.mxu0 %v1943
      %2257 = vmatpush1.bf16.msra.mxu0 %v1942
      %2258 = vmatprep.subr.bf16.mxu0 %v1947
      %2259 = vmatpush1.bf16.msra.mxu0 %v1946
      %2260 = vmatprep.subr.bf16.mxu0 %v1951
      %2261 = vmatpush1.bf16.msra.mxu0 %v1950
      %2262 = vmatprep.subr.bf16.mxu0 %v1955
      %2263 = vmatpush1.bf16.msra.mxu0 %v1954
      %2264 = vmatprep.subr.bf16.mxu0 %v1959
      %2265 = vmatpush1.bf16.msra.mxu0 %v1958
      %2266 = vmatprep.mubr.bf16.mxu0 %v1381
      %2267 = vmatmul.mubr.bf16.gmra.mrb[0].mxu0 %v1380
      %v2268 = vpop.f32.mrb[0].mxu0
      %v2269 = vadd.f32 0.0, %v2268
      %v2270 = vpop.f32.mrb[0].mxu0
      %v2271 = vadd.f32 0.0, %v2270
      %v2272 = vpop.f32.mrb[0].mxu0
      %v2273 = vpop.f32.mrb[0].mxu0
      %2274 = vdwg.mxu0
      %2275 = vmatprep.subr.bf16.mxu0 %v1963
      %2276 = vmatpush1.bf16.msra.mxu0 %v1962
      %2277 = vmatprep.subr.bf16.mxu0 %v1967
      %2278 = vmatpush1.bf16.msra.mxu0 %v1966
      %2279 = vmatprep.subr.bf16.mxu0 %v1971
      %2280 = vmatpush1.bf16.msra.mxu0 %v1970
      %2281 = vmatprep.subr.bf16.mxu0 %v1975
      %2282 = vmatpush1.bf16.msra.mxu0 %v1974
      %2283 = vmatprep.subr.bf16.mxu0 %v1979
      %2284 = vmatpush1.bf16.msra.mxu0 %v1978
      %2285 = vmatprep.subr.bf16.mxu0 %v1983
      %2286 = vmatpush1.bf16.msra.mxu0 %v1982
      %2287 = vmatprep.subr.bf16.mxu0 %v1987
      %2288 = vmatpush1.bf16.msra.mxu0 %v1986
      %2289 = vmatprep.subr.bf16.mxu0 %v1991
      %2290 = vmatpush1.bf16.msra.mxu0 %v1990
      %2291 = vmatprep.subr.bf16.mxu0 %v1995
      %2292 = vmatpush1.bf16.msra.mxu0 %v1994
      %2293 = vmatprep.subr.bf16.mxu0 %v1999
      %2294 = vmatpush1.bf16.msra.mxu0 %v1998
      %2295 = vmatprep.subr.bf16.mxu0 %v2003
      %2296 = vmatpush1.bf16.msra.mxu0 %v2002
      %2297 = vmatprep.subr.bf16.mxu0 %v2007
      %2298 = vmatpush1.bf16.msra.mxu0 %v2006
      %2299 = vmatprep.subr.bf16.mxu0 %v2011
      %2300 = vmatpush1.bf16.msra.mxu0 %v2010
      %2301 = vmatprep.subr.bf16.mxu0 %v2015
      %2302 = vmatpush1.bf16.msra.mxu0 %v2014
      %2303 = vmatprep.subr.bf16.mxu0 %v2019
      %2304 = vmatpush1.bf16.msra.mxu0 %v2018
      %2305 = vmatprep.subr.bf16.mxu0 %v2023
      %2306 = vmatpush1.bf16.msra.mxu0 %v2022
      %2307 = vmatprep.mubr.bf16.mxu0 %v1383
      %2308 = vmatmul.mubr.bf16.gmra.mrb[0].mxu0 %v1382
      %v2309 = vpop.f32.mrb[0].mxu0
      %v2310 = vadd.f32 %v2269, %v2309
      %v2311 = vpop.f32.mrb[0].mxu0
      %v2312 = vadd.f32 %v2271, %v2311
      %v2313 = vpop.f32.mrb[0].mxu0
      %v2314 = vpop.f32.mrb[0].mxu0
      %2315 = vdwg.mxu0
      %v2316 = vld [vmem:[%s426] sm:$0xf]
      %v2317 = vld [vmem:[%s430] sm:$0xf]
      %v2318 = vsel %vm1240, %v2228, 0.0
      %v2319 = vrot.slane %v2318, 4
      %v2320 = vadd.f32 %v2318, %v2319
      %v2321 = vrot.slane %v2320, 2
      %v2322 = vadd.f32 %v2320, %v2321
      %v2323 = vrot.slane %v2322, 1
      %v2324 = vadd.f32 %v2322, %v2323
      %v2325 = vsel %vm1240, %v2230, 0.0
      %v2326 = vrot.slane %v2325, 4
      %v2327 = vadd.f32 %v2325, %v2326
      %v2328 = vrot.slane %v2327, 2
      %v2329 = vadd.f32 %v2327, %v2328
      %v2330 = vrot.slane %v2329, 1
      %v2331 = vadd.f32 %v2329, %v2330
      %v2332 = vsel %vm1240, %v2310, 0.0
      %v2333 = vrot.slane %v2332, 4
      %v2334 = vadd.f32 %v2332, %v2333
      %v2335 = vrot.slane %v2334, 2
      %v2336 = vadd.f32 %v2334, %v2335
      %v2337 = vrot.slane %v2336, 1
      %v2338 = vadd.f32 %v2336, %v2337
      %v2339 = vsel %vm1240, %v2312, 0.0
      %v2340 = vrot.slane %v2339, 4
      %v2341 = vadd.f32 %v2339, %v2340
      %v2342 = vrot.slane %v2341, 2
      %v2343 = vadd.f32 %v2341, %v2342
      %v2344 = vrot.slane %v2343, 1
      %v2345 = vadd.f32 %v2343, %v2344
      %v2346 = vmul.f32 %v2324, %v1269
      %v2347 = vmul.f32 %v2331, %v1269
      %v2348 = vmul.f32 %v2338, %v1269
      %v2349 = vmul.f32 %v2345, %v1269
      %v2350 = vsub.f32 %v2228, %v2346
      %v2351 = vsub.f32 %v2230, %v2347
      %v2352 = vsub.f32 %v2310, %v2348
      %v2353 = vsub.f32 %v2312, %v2349
      %v2354 = vmul.f32 %v2350, %v2350
      %v2355 = vmul.f32 %v2351, %v2351
      %v2356 = vmul.f32 %v2352, %v2352
      %v2357 = vmul.f32 %v2353, %v2353
      %v2358 = vsel %vm1240, %v2354, 0.0
      %v2359 = vrot.slane %v2358, 4
      %v2360 = vadd.f32 %v2358, %v2359
      %v2361 = vrot.slane %v2360, 2
      %v2362 = vadd.f32 %v2360, %v2361
      %v2363 = vrot.slane %v2362, 1
      %v2364 = vadd.f32 %v2362, %v2363
      %v2365 = vsel %vm1240, %v2355, 0.0
      %v2366 = vrot.slane %v2365, 4
      %v2367 = vadd.f32 %v2365, %v2366
      %v2368 = vrot.slane %v2367, 2
      %v2369 = vadd.f32 %v2367, %v2368
      %v2370 = vrot.slane %v2369, 1
      %v2371 = vadd.f32 %v2369, %v2370
      %v2372 = vsel %vm1240, %v2356, 0.0
      %v2373 = vrot.slane %v2372, 4
      %v2374 = vadd.f32 %v2372, %v2373
      %v2375 = vrot.slane %v2374, 2
      %v2376 = vadd.f32 %v2374, %v2375
      %v2377 = vrot.slane %v2376, 1
      %v2378 = vadd.f32 %v2376, %v2377
      %v2379 = vsel %vm1240, %v2357, 0.0
      %v2380 = vrot.slane %v2379, 4
      %v2381 = vadd.f32 %v2379, %v2380
      %v2382 = vrot.slane %v2381, 2
      %v2383 = vadd.f32 %v2381, %v2382
      %v2384 = vrot.slane %v2383, 1
      %v2385 = vadd.f32 %v2383, %v2384
      %v2386 = vmul.f32 %v2364, %v1269
      %v2387 = vmul.f32 %v2371, %v1269
      %v2388 = vmul.f32 %v2378, %v1269
      %v2389 = vmul.f32 %v2385, %v1269
      %v2390 = vadd.f32 %v2386, 1e-05
      %v2391 = vadd.f32 %v2387, 1e-05
      %v2392 = vadd.f32 %v2388, 1e-05
      %v2393 = vadd.f32 %v2389, 1e-05
      %v2394 = vrsqrt.pop %v2390
      %v2395 = vrsqrt.pop %v2391
      %v2396 = vrsqrt.pop %v2392
      %v2397 = vrsqrt.pop %v2393
      %v2398 = vmul.f32 %v2350, %v2394
      %v2399 = vmul.f32 %v2351, %v2395
      %v2400 = vmul.f32 %v2352, %v2396
      %v2401 = vmul.f32 %v2353, %v2397
      %v2403 = vlaneseq
      %v2404 = vshrl.u32 %v2403, 7
      %v2405 = vsub.s32 0, %v2404
      %v2406 = vrot.slane %v2316, %v2405
      %v2407 = vlaneseq
      %v2408 = vshrl.u32 %v2407, 7
      %v2409 = vsub.s32 1, %v2408
      %v2410 = vrot.slane %v2316, %v2409
      %v2411 = vlaneseq
      %v2412 = vshrl.u32 %v2411, 7
      %v2413 = vsub.s32 2, %v2412
      %v2414 = vrot.slane %v2316, %v2413
      %v2415 = vlaneseq
      %v2416 = vshrl.u32 %v2415, 7
      %v2417 = vsub.s32 3, %v2416
      %v2418 = vrot.slane %v2316, %v2417
      %v2423 = vmul.f32 %v2398, %v2406
      %v2424 = vmul.f32 %v2399, %v2410
      %v2425 = vmul.f32 %v2400, %v2414
      %v2426 = vmul.f32 %v2401, %v2418
      %v2428 = vlaneseq
      %v2429 = vshrl.u32 %v2428, 7
      %v2430 = vsub.s32 0, %v2429
      %v2431 = vrot.slane %v2317, %v2430
      %v2432 = vlaneseq
      %v2433 = vshrl.u32 %v2432, 7
      %v2434 = vsub.s32 1, %v2433
      %v2435 = vrot.slane %v2317, %v2434
      %v2436 = vlaneseq
      %v2437 = vshrl.u32 %v2436, 7
      %v2438 = vsub.s32 2, %v2437
      %v2439 = vrot.slane %v2317, %v2438
      %v2440 = vlaneseq
      %v2441 = vshrl.u32 %v2440, 7
      %v2442 = vsub.s32 3, %v2441
      %v2443 = vrot.slane %v2317, %v2442
      %v2448 = vadd.f32 %v2423, %v2431
      %v2449 = vadd.f32 %v2424, %v2435
      %v2450 = vadd.f32 %v2425, %v2439
      %v2451 = vadd.f32 %v2426, %v2443
      %v2452 = vmax.f32 %v2448, 0.0
      %v2453 = vmax.f32 %v2449, 0.0
      %v2454 = vmax.f32 %v2450, 0.0
      %v2455 = vmax.f32 %v2451, 0.0
      %v2456 = vpack.c.bf16 %v2452, %v2452
      %v2457 = vpack.c.bf16 %v2453, %v2453
      %v2458 = vpack.c.bf16 %v2454, %v2454
      %v2459 = vpack.c.bf16 %v2455, %v2455
      %v2460 = vld [vmem:[%s435] sm:$0xff]
      %v2461 = vld [vmem:[%s435 + $0x8] sm:$0xff]
      %v2462 = vld [vmem:[%s435 + $0x10] sm:$0xff]
      %v2463 = vld [vmem:[%s435 + $0x18] sm:$0xff]
      %v2464 = vld [vmem:[%s435 + $0x20] sm:$0xff]
      %v2465 = vld [vmem:[%s435 + $0x28] sm:$0xff]
      %v2466 = vld [vmem:[%s435 + $0x30] sm:$0xff]
      %v2467 = vld [vmem:[%s435 + $0x38] sm:$0xff]
      %v2468 = vld [vmem:[%s435 + $0x40] sm:$0xff]
      %v2469 = vld [vmem:[%s435 + $0x48] sm:$0xff]
      %v2470 = vld [vmem:[%s435 + $0x50] sm:$0xff]
      %v2471 = vld [vmem:[%s435 + $0x58] sm:$0xff]
      %v2472 = vld [vmem:[%s435 + $0x60] sm:$0xff]
      %v2473 = vld [vmem:[%s435 + $0x68] sm:$0xff]
      %v2474 = vld [vmem:[%s435 + $0x70] sm:$0xff]
      %v2475 = vld [vmem:[%s435 + $0x78] sm:$0xff]
      %v2476 = vld [vmem:[%s435 + $0x80] sm:$0xff]
      %v2477 = vld [vmem:[%s435 + $0x88] sm:$0xff]
      %v2478 = vld [vmem:[%s435 + $0x90] sm:$0xff]
      %v2479 = vld [vmem:[%s435 + $0x98] sm:$0xff]
      %v2480 = vld [vmem:[%s435 + $0xa0] sm:$0xff]
      %v2481 = vld [vmem:[%s435 + $0xa8] sm:$0xff]
      %v2482 = vld [vmem:[%s435 + $0xb0] sm:$0xff]
      %v2483 = vld [vmem:[%s435 + $0xb8] sm:$0xff]
      %v2484 = vld [vmem:[%s435 + $0xc0] sm:$0xff]
      %v2485 = vld [vmem:[%s435 + $0xc8] sm:$0xff]
      %v2486 = vld [vmem:[%s435 + $0xd0] sm:$0xff]
      %v2487 = vld [vmem:[%s435 + $0xd8] sm:$0xff]
      %v2488 = vld [vmem:[%s435 + $0xe0] sm:$0xff]
      %v2489 = vld [vmem:[%s435 + $0xe8] sm:$0xff]
      %v2490 = vld [vmem:[%s435 + $0xf0] sm:$0xff]
      %v2491 = vld [vmem:[%s435 + $0xf8] sm:$0xff]
      %v2492 = vld [vmem:[%s435 + $0x100] sm:$0xff]
      %v2493 = vld [vmem:[%s435 + $0x108] sm:$0xff]
      %v2494 = vld [vmem:[%s435 + $0x110] sm:$0xff]
      %v2495 = vld [vmem:[%s435 + $0x118] sm:$0xff]
      %v2496 = vld [vmem:[%s435 + $0x120] sm:$0xff]
      %v2497 = vld [vmem:[%s435 + $0x128] sm:$0xff]
      %v2498 = vld [vmem:[%s435 + $0x130] sm:$0xff]
      %v2499 = vld [vmem:[%s435 + $0x138] sm:$0xff]
      %v2500 = vld [vmem:[%s435 + $0x140] sm:$0xff]
      %v2501 = vld [vmem:[%s435 + $0x148] sm:$0xff]
      %v2502 = vld [vmem:[%s435 + $0x150] sm:$0xff]
      %v2503 = vld [vmem:[%s435 + $0x158] sm:$0xff]
      %v2504 = vld [vmem:[%s435 + $0x160] sm:$0xff]
      %v2505 = vld [vmem:[%s435 + $0x168] sm:$0xff]
      %v2506 = vld [vmem:[%s435 + $0x170] sm:$0xff]
      %v2507 = vld [vmem:[%s435 + $0x178] sm:$0xff]
      %v2508 = vld [vmem:[%s435 + $0x180] sm:$0xff]
      %v2509 = vld [vmem:[%s435 + $0x188] sm:$0xff]
      %v2510 = vld [vmem:[%s435 + $0x190] sm:$0xff]
      %v2511 = vld [vmem:[%s435 + $0x198] sm:$0xff]
      %v2512 = vld [vmem:[%s435 + $0x1a0] sm:$0xff]
      %v2513 = vld [vmem:[%s435 + $0x1a8] sm:$0xff]
      %v2514 = vld [vmem:[%s435 + $0x1b0] sm:$0xff]
      %v2515 = vld [vmem:[%s435 + $0x1b8] sm:$0xff]
      %v2516 = vld [vmem:[%s435 + $0x1c0] sm:$0xff]
      %v2517 = vld [vmem:[%s435 + $0x1c8] sm:$0xff]
      %v2518 = vld [vmem:[%s435 + $0x1d0] sm:$0xff]
      %v2519 = vld [vmem:[%s435 + $0x1d8] sm:$0xff]
      %v2520 = vld [vmem:[%s435 + $0x1e0] sm:$0xff]
      %v2521 = vld [vmem:[%s435 + $0x1e8] sm:$0xff]
      %v2522 = vld [vmem:[%s435 + $0x1f0] sm:$0xff]
      %v2523 = vld [vmem:[%s435 + $0x1f8] sm:$0xff]
      %v2524 = vld [vmem:[%s435 + $0x200] sm:$0xff]
      %v2525 = vld [vmem:[%s435 + $0x208] sm:$0xff]
      %v2526 = vld [vmem:[%s435 + $0x210] sm:$0xff]
      %v2527 = vld [vmem:[%s435 + $0x218] sm:$0xff]
      %v2528 = vld [vmem:[%s435 + $0x220] sm:$0xff]
      %v2529 = vld [vmem:[%s435 + $0x228] sm:$0xff]
      %v2530 = vld [vmem:[%s435 + $0x230] sm:$0xff]
      %v2531 = vld [vmem:[%s435 + $0x238] sm:$0xff]
      %v2532 = vld [vmem:[%s435 + $0x240] sm:$0xff]
      %v2533 = vld [vmem:[%s435 + $0x248] sm:$0xff]
      %v2534 = vld [vmem:[%s435 + $0x250] sm:$0xff]
      %v2535 = vld [vmem:[%s435 + $0x258] sm:$0xff]
      %v2536 = vld [vmem:[%s435 + $0x260] sm:$0xff]
      %v2537 = vld [vmem:[%s435 + $0x268] sm:$0xff]
      %v2538 = vld [vmem:[%s435 + $0x270] sm:$0xff]
      %v2539 = vld [vmem:[%s435 + $0x278] sm:$0xff]
      %v2540 = vld [vmem:[%s435 + $0x280] sm:$0xff]
      %v2541 = vld [vmem:[%s435 + $0x288] sm:$0xff]
      %v2542 = vld [vmem:[%s435 + $0x290] sm:$0xff]
      %v2543 = vld [vmem:[%s435 + $0x298] sm:$0xff]
      %v2544 = vld [vmem:[%s435 + $0x2a0] sm:$0xff]
      %v2545 = vld [vmem:[%s435 + $0x2a8] sm:$0xff]
      %v2546 = vld [vmem:[%s435 + $0x2b0] sm:$0xff]
      %v2547 = vld [vmem:[%s435 + $0x2b8] sm:$0xff]
      %v2548 = vld [vmem:[%s435 + $0x2c0] sm:$0xff]
      %v2549 = vld [vmem:[%s435 + $0x2c8] sm:$0xff]
      %v2550 = vld [vmem:[%s435 + $0x2d0] sm:$0xff]
      %v2551 = vld [vmem:[%s435 + $0x2d8] sm:$0xff]
      %v2552 = vld [vmem:[%s435 + $0x2e0] sm:$0xff]
      %v2553 = vld [vmem:[%s435 + $0x2e8] sm:$0xff]
      %v2554 = vld [vmem:[%s435 + $0x2f0] sm:$0xff]
      %v2555 = vld [vmem:[%s435 + $0x2f8] sm:$0xff]
      %v2556 = vld [vmem:[%s435 + $0x300] sm:$0xff]
      %v2557 = vld [vmem:[%s435 + $0x308] sm:$0xff]
      %v2558 = vld [vmem:[%s435 + $0x310] sm:$0xff]
      %v2559 = vld [vmem:[%s435 + $0x318] sm:$0xff]
      %v2560 = vld [vmem:[%s435 + $0x320] sm:$0xff]
      %v2561 = vld [vmem:[%s435 + $0x328] sm:$0xff]
      %v2562 = vld [vmem:[%s435 + $0x330] sm:$0xff]
      %v2563 = vld [vmem:[%s435 + $0x338] sm:$0xff]
      %v2564 = vld [vmem:[%s435 + $0x340] sm:$0xff]
      %v2565 = vld [vmem:[%s435 + $0x348] sm:$0xff]
      %v2566 = vld [vmem:[%s435 + $0x350] sm:$0xff]
      %v2567 = vld [vmem:[%s435 + $0x358] sm:$0xff]
      %v2568 = vld [vmem:[%s435 + $0x360] sm:$0xff]
      %v2569 = vld [vmem:[%s435 + $0x368] sm:$0xff]
      %v2570 = vld [vmem:[%s435 + $0x370] sm:$0xff]
      %v2571 = vld [vmem:[%s435 + $0x378] sm:$0xff]
      %v2572 = vld [vmem:[%s435 + $0x380] sm:$0xff]
      %v2573 = vld [vmem:[%s435 + $0x388] sm:$0xff]
      %v2574 = vld [vmem:[%s435 + $0x390] sm:$0xff]
      %v2575 = vld [vmem:[%s435 + $0x398] sm:$0xff]
      %v2576 = vld [vmem:[%s435 + $0x3a0] sm:$0xff]
      %v2577 = vld [vmem:[%s435 + $0x3a8] sm:$0xff]
      %v2578 = vld [vmem:[%s435 + $0x3b0] sm:$0xff]
      %v2579 = vld [vmem:[%s435 + $0x3b8] sm:$0xff]
      %v2580 = vld [vmem:[%s435 + $0x3c0] sm:$0xff]
      %v2581 = vld [vmem:[%s435 + $0x3c8] sm:$0xff]
      %v2582 = vld [vmem:[%s435 + $0x3d0] sm:$0xff]
      %v2583 = vld [vmem:[%s435 + $0x3d8] sm:$0xff]
      %v2584 = vld [vmem:[%s435 + $0x3e0] sm:$0xff]
      %v2585 = vld [vmem:[%s435 + $0x3e8] sm:$0xff]
      %v2586 = vld [vmem:[%s435 + $0x3f0] sm:$0xff]
      %v2587 = vld [vmem:[%s435 + $0x3f8] sm:$0xff]
      %v2716 = vunpack.c.l.b16 %v2460
      %v2717 = vunpack.c.h.b16 %v2460
      %v2718 = vunpack.c.l.b16 %v2461
      %v2719 = vunpack.c.h.b16 %v2461
      %v2720 = vunpack.c.l.b16 %v2462
      %v2721 = vunpack.c.h.b16 %v2462
      %v2722 = vunpack.c.l.b16 %v2463
      %v2723 = vunpack.c.h.b16 %v2463
      %v2724 = vunpack.c.l.b16 %v2464
      %v2725 = vunpack.c.h.b16 %v2464
      %v2726 = vunpack.c.l.b16 %v2465
      %v2727 = vunpack.c.h.b16 %v2465
      %v2728 = vunpack.c.l.b16 %v2466
      %v2729 = vunpack.c.h.b16 %v2466
      %v2730 = vunpack.c.l.b16 %v2467
      %v2731 = vunpack.c.h.b16 %v2467
      %v2732 = vunpack.c.l.b16 %v2468
      %v2733 = vunpack.c.h.b16 %v2468
      %v2734 = vunpack.c.l.b16 %v2469
      %v2735 = vunpack.c.h.b16 %v2469
      %v2736 = vunpack.c.l.b16 %v2470
      %v2737 = vunpack.c.h.b16 %v2470
      %v2738 = vunpack.c.l.b16 %v2471
      %v2739 = vunpack.c.h.b16 %v2471
      %v2740 = vunpack.c.l.b16 %v2472
      %v2741 = vunpack.c.h.b16 %v2472
      %v2742 = vunpack.c.l.b16 %v2473
      %v2743 = vunpack.c.h.b16 %v2473
      %v2744 = vunpack.c.l.b16 %v2474
      %v2745 = vunpack.c.h.b16 %v2474
      %v2746 = vunpack.c.l.b16 %v2475
      %v2747 = vunpack.c.h.b16 %v2475
      %v2748 = vunpack.c.l.b16 %v2476
      %v2749 = vunpack.c.h.b16 %v2476
      %v2750 = vunpack.c.l.b16 %v2477
      %v2751 = vunpack.c.h.b16 %v2477
      %v2752 = vunpack.c.l.b16 %v2478
      %v2753 = vunpack.c.h.b16 %v2478
      %v2754 = vunpack.c.l.b16 %v2479
      %v2755 = vunpack.c.h.b16 %v2479
      %v2756 = vunpack.c.l.b16 %v2480
      %v2757 = vunpack.c.h.b16 %v2480
      %v2758 = vunpack.c.l.b16 %v2481
      %v2759 = vunpack.c.h.b16 %v2481
      %v2760 = vunpack.c.l.b16 %v2482
      %v2761 = vunpack.c.h.b16 %v2482
      %v2762 = vunpack.c.l.b16 %v2483
      %v2763 = vunpack.c.h.b16 %v2483
      %v2764 = vunpack.c.l.b16 %v2484
      %v2765 = vunpack.c.h.b16 %v2484
      %v2766 = vunpack.c.l.b16 %v2485
      %v2767 = vunpack.c.h.b16 %v2485
      %v2768 = vunpack.c.l.b16 %v2486
      %v2769 = vunpack.c.h.b16 %v2486
      %v2770 = vunpack.c.l.b16 %v2487
      %v2771 = vunpack.c.h.b16 %v2487
      %v2772 = vunpack.c.l.b16 %v2488
      %v2773 = vunpack.c.h.b16 %v2488
      %v2774 = vunpack.c.l.b16 %v2489
      %v2775 = vunpack.c.h.b16 %v2489
      %v2776 = vunpack.c.l.b16 %v2490
      %v2777 = vunpack.c.h.b16 %v2490
      %v2778 = vunpack.c.l.b16 %v2491
      %v2779 = vunpack.c.h.b16 %v2491
      %v2780 = vunpack.c.l.b16 %v2492
      %v2781 = vunpack.c.h.b16 %v2492
      %v2782 = vunpack.c.l.b16 %v2493
      %v2783 = vunpack.c.h.b16 %v2493
      %v2784 = vunpack.c.l.b16 %v2494
      %v2785 = vunpack.c.h.b16 %v2494
      %v2786 = vunpack.c.l.b16 %v2495
      %v2787 = vunpack.c.h.b16 %v2495
      %v2788 = vunpack.c.l.b16 %v2496
      %v2789 = vunpack.c.h.b16 %v2496
      %v2790 = vunpack.c.l.b16 %v2497
      %v2791 = vunpack.c.h.b16 %v2497
      %v2792 = vunpack.c.l.b16 %v2498
      %v2793 = vunpack.c.h.b16 %v2498
      %v2794 = vunpack.c.l.b16 %v2499
      %v2795 = vunpack.c.h.b16 %v2499
      %v2796 = vunpack.c.l.b16 %v2500
      %v2797 = vunpack.c.h.b16 %v2500
      %v2798 = vunpack.c.l.b16 %v2501
      %v2799 = vunpack.c.h.b16 %v2501
      %v2800 = vunpack.c.l.b16 %v2502
      %v2801 = vunpack.c.h.b16 %v2502
      %v2802 = vunpack.c.l.b16 %v2503
      %v2803 = vunpack.c.h.b16 %v2503
      %v2804 = vunpack.c.l.b16 %v2504
      %v2805 = vunpack.c.h.b16 %v2504
      %v2806 = vunpack.c.l.b16 %v2505
      %v2807 = vunpack.c.h.b16 %v2505
      %v2808 = vunpack.c.l.b16 %v2506
      %v2809 = vunpack.c.h.b16 %v2506
      %v2810 = vunpack.c.l.b16 %v2507
      %v2811 = vunpack.c.h.b16 %v2507
      %v2812 = vunpack.c.l.b16 %v2508
      %v2813 = vunpack.c.h.b16 %v2508
      %v2814 = vunpack.c.l.b16 %v2509
      %v2815 = vunpack.c.h.b16 %v2509
      %v2816 = vunpack.c.l.b16 %v2510
      %v2817 = vunpack.c.h.b16 %v2510
      %v2818 = vunpack.c.l.b16 %v2511
      %v2819 = vunpack.c.h.b16 %v2511
      %v2820 = vunpack.c.l.b16 %v2512
      %v2821 = vunpack.c.h.b16 %v2512
      %v2822 = vunpack.c.l.b16 %v2513
      %v2823 = vunpack.c.h.b16 %v2513
      %v2824 = vunpack.c.l.b16 %v2514
      %v2825 = vunpack.c.h.b16 %v2514
      %v2826 = vunpack.c.l.b16 %v2515
      %v2827 = vunpack.c.h.b16 %v2515
      %v2828 = vunpack.c.l.b16 %v2516
      %v2829 = vunpack.c.h.b16 %v2516
      %v2830 = vunpack.c.l.b16 %v2517
      %v2831 = vunpack.c.h.b16 %v2517
      %v2832 = vunpack.c.l.b16 %v2518
      %v2833 = vunpack.c.h.b16 %v2518
      %v2834 = vunpack.c.l.b16 %v2519
      %v2835 = vunpack.c.h.b16 %v2519
      %v2836 = vunpack.c.l.b16 %v2520
      %v2837 = vunpack.c.h.b16 %v2520
      %v2838 = vunpack.c.l.b16 %v2521
      %v2839 = vunpack.c.h.b16 %v2521
      %v2840 = vunpack.c.l.b16 %v2522
      %v2841 = vunpack.c.h.b16 %v2522
      %v2842 = vunpack.c.l.b16 %v2523
      %v2843 = vunpack.c.h.b16 %v2523
      %v2844 = vunpack.c.l.b16 %v2524
      %v2845 = vunpack.c.h.b16 %v2524
      %v2846 = vunpack.c.l.b16 %v2525
      %v2847 = vunpack.c.h.b16 %v2525
      %v2848 = vunpack.c.l.b16 %v2526
      %v2849 = vunpack.c.h.b16 %v2526
      %v2850 = vunpack.c.l.b16 %v2527
      %v2851 = vunpack.c.h.b16 %v2527
      %v2852 = vunpack.c.l.b16 %v2528
      %v2853 = vunpack.c.h.b16 %v2528
      %v2854 = vunpack.c.l.b16 %v2529
      %v2855 = vunpack.c.h.b16 %v2529
      %v2856 = vunpack.c.l.b16 %v2530
      %v2857 = vunpack.c.h.b16 %v2530
      %v2858 = vunpack.c.l.b16 %v2531
      %v2859 = vunpack.c.h.b16 %v2531
      %v2860 = vunpack.c.l.b16 %v2532
      %v2861 = vunpack.c.h.b16 %v2532
      %v2862 = vunpack.c.l.b16 %v2533
      %v2863 = vunpack.c.h.b16 %v2533
      %v2864 = vunpack.c.l.b16 %v2534
      %v2865 = vunpack.c.h.b16 %v2534
      %v2866 = vunpack.c.l.b16 %v2535
      %v2867 = vunpack.c.h.b16 %v2535
      %v2868 = vunpack.c.l.b16 %v2536
      %v2869 = vunpack.c.h.b16 %v2536
      %v2870 = vunpack.c.l.b16 %v2537
      %v2871 = vunpack.c.h.b16 %v2537
      %v2872 = vunpack.c.l.b16 %v2538
      %v2873 = vunpack.c.h.b16 %v2538
      %v2874 = vunpack.c.l.b16 %v2539
      %v2875 = vunpack.c.h.b16 %v2539
      %v2876 = vunpack.c.l.b16 %v2540
      %v2877 = vunpack.c.h.b16 %v2540
      %v2878 = vunpack.c.l.b16 %v2541
      %v2879 = vunpack.c.h.b16 %v2541
      %v2880 = vunpack.c.l.b16 %v2542
      %v2881 = vunpack.c.h.b16 %v2542
      %v2882 = vunpack.c.l.b16 %v2543
      %v2883 = vunpack.c.h.b16 %v2543
      %v2884 = vunpack.c.l.b16 %v2544
      %v2885 = vunpack.c.h.b16 %v2544
      %v2886 = vunpack.c.l.b16 %v2545
      %v2887 = vunpack.c.h.b16 %v2545
      %v2888 = vunpack.c.l.b16 %v2546
      %v2889 = vunpack.c.h.b16 %v2546
      %v2890 = vunpack.c.l.b16 %v2547
      %v2891 = vunpack.c.h.b16 %v2547
      %v2892 = vunpack.c.l.b16 %v2548
      %v2893 = vunpack.c.h.b16 %v2548
      %v2894 = vunpack.c.l.b16 %v2549
      %v2895 = vunpack.c.h.b16 %v2549
      %v2896 = vunpack.c.l.b16 %v2550
      %v2897 = vunpack.c.h.b16 %v2550
      %v2898 = vunpack.c.l.b16 %v2551
      %v2899 = vunpack.c.h.b16 %v2551
      %v2900 = vunpack.c.l.b16 %v2552
      %v2901 = vunpack.c.h.b16 %v2552
      %v2902 = vunpack.c.l.b16 %v2553
      %v2903 = vunpack.c.h.b16 %v2553
      %v2904 = vunpack.c.l.b16 %v2554
      %v2905 = vunpack.c.h.b16 %v2554
      %v2906 = vunpack.c.l.b16 %v2555
      %v2907 = vunpack.c.h.b16 %v2555
      %v2908 = vunpack.c.l.b16 %v2556
      %v2909 = vunpack.c.h.b16 %v2556
      %v2910 = vunpack.c.l.b16 %v2557
      %v2911 = vunpack.c.h.b16 %v2557
      %v2912 = vunpack.c.l.b16 %v2558
      %v2913 = vunpack.c.h.b16 %v2558
      %v2914 = vunpack.c.l.b16 %v2559
      %v2915 = vunpack.c.h.b16 %v2559
      %v2916 = vunpack.c.l.b16 %v2560
      %v2917 = vunpack.c.h.b16 %v2560
      %v2918 = vunpack.c.l.b16 %v2561
      %v2919 = vunpack.c.h.b16 %v2561
      %v2920 = vunpack.c.l.b16 %v2562
      %v2921 = vunpack.c.h.b16 %v2562
      %v2922 = vunpack.c.l.b16 %v2563
      %v2923 = vunpack.c.h.b16 %v2563
      %v2924 = vunpack.c.l.b16 %v2564
      %v2925 = vunpack.c.h.b16 %v2564
      %v2926 = vunpack.c.l.b16 %v2565
      %v2927 = vunpack.c.h.b16 %v2565
      %v2928 = vunpack.c.l.b16 %v2566
      %v2929 = vunpack.c.h.b16 %v2566
      %v2930 = vunpack.c.l.b16 %v2567
      %v2931 = vunpack.c.h.b16 %v2567
      %v2932 = vunpack.c.l.b16 %v2568
      %v2933 = vunpack.c.h.b16 %v2568
      %v2934 = vunpack.c.l.b16 %v2569
      %v2935 = vunpack.c.h.b16 %v2569
      %v2936 = vunpack.c.l.b16 %v2570
      %v2937 = vunpack.c.h.b16 %v2570
      %v2938 = vunpack.c.l.b16 %v2571
      %v2939 = vunpack.c.h.b16 %v2571
      %v2940 = vunpack.c.l.b16 %v2572
      %v2941 = vunpack.c.h.b16 %v2572
      %v2942 = vunpack.c.l.b16 %v2573
      %v2943 = vunpack.c.h.b16 %v2573
      %v2944 = vunpack.c.l.b16 %v2574
      %v2945 = vunpack.c.h.b16 %v2574
      %v2946 = vunpack.c.l.b16 %v2575
      %v2947 = vunpack.c.h.b16 %v2575
      %v2948 = vunpack.c.l.b16 %v2576
      %v2949 = vunpack.c.h.b16 %v2576
      %v2950 = vunpack.c.l.b16 %v2577
      %v2951 = vunpack.c.h.b16 %v2577
      %v2952 = vunpack.c.l.b16 %v2578
      %v2953 = vunpack.c.h.b16 %v2578
      %v2954 = vunpack.c.l.b16 %v2579
      %v2955 = vunpack.c.h.b16 %v2579
      %v2956 = vunpack.c.l.b16 %v2580
      %v2957 = vunpack.c.h.b16 %v2580
      %v2958 = vunpack.c.l.b16 %v2581
      %v2959 = vunpack.c.h.b16 %v2581
      %v2960 = vunpack.c.l.b16 %v2582
      %v2961 = vunpack.c.h.b16 %v2582
      %v2962 = vunpack.c.l.b16 %v2583
      %v2963 = vunpack.c.h.b16 %v2583
      %v2964 = vunpack.c.l.b16 %v2584
      %v2965 = vunpack.c.h.b16 %v2584
      %v2966 = vunpack.c.l.b16 %v2585
      %v2967 = vunpack.c.h.b16 %v2585
      %v2968 = vunpack.c.l.b16 %v2586
      %v2969 = vunpack.c.h.b16 %v2586
      %v2970 = vunpack.c.l.b16 %v2587
      %v2971 = vunpack.c.h.b16 %v2587
      %v2972 = vpack.c.b16 %v2720, %v2716
      %v2973 = vpack.c.b16 %v2721, %v2717
      %v2974 = vpack.c.b16 %v2722, %v2718
      %v2975 = vpack.c.b16 %v2723, %v2719
      %v2976 = vpack.c.b16 %v2728, %v2724
      %v2977 = vpack.c.b16 %v2729, %v2725
      %v2978 = vpack.c.b16 %v2730, %v2726
      %v2979 = vpack.c.b16 %v2731, %v2727
      %v2980 = vpack.c.b16 %v2736, %v2732
      %v2981 = vpack.c.b16 %v2737, %v2733
      %v2982 = vpack.c.b16 %v2738, %v2734
      %v2983 = vpack.c.b16 %v2739, %v2735
      %v2984 = vpack.c.b16 %v2744, %v2740
      %v2985 = vpack.c.b16 %v2745, %v2741
      %v2986 = vpack.c.b16 %v2746, %v2742
      %v2987 = vpack.c.b16 %v2747, %v2743
      %v2988 = vpack.c.b16 %v2752, %v2748
      %v2989 = vpack.c.b16 %v2753, %v2749
      %v2990 = vpack.c.b16 %v2754, %v2750
      %v2991 = vpack.c.b16 %v2755, %v2751
      %v2992 = vpack.c.b16 %v2760, %v2756
      %v2993 = vpack.c.b16 %v2761, %v2757
      %v2994 = vpack.c.b16 %v2762, %v2758
      %v2995 = vpack.c.b16 %v2763, %v2759
      %v2996 = vpack.c.b16 %v2768, %v2764
      %v2997 = vpack.c.b16 %v2769, %v2765
      %v2998 = vpack.c.b16 %v2770, %v2766
      %v2999 = vpack.c.b16 %v2771, %v2767
      %v3000 = vpack.c.b16 %v2776, %v2772
      %v3001 = vpack.c.b16 %v2777, %v2773
      %v3002 = vpack.c.b16 %v2778, %v2774
      %v3003 = vpack.c.b16 %v2779, %v2775
      %v3004 = vpack.c.b16 %v2784, %v2780
      %v3005 = vpack.c.b16 %v2785, %v2781
      %v3006 = vpack.c.b16 %v2786, %v2782
      %v3007 = vpack.c.b16 %v2787, %v2783
      %v3008 = vpack.c.b16 %v2792, %v2788
      %v3009 = vpack.c.b16 %v2793, %v2789
      %v3010 = vpack.c.b16 %v2794, %v2790
      %v3011 = vpack.c.b16 %v2795, %v2791
      %v3012 = vpack.c.b16 %v2800, %v2796
      %v3013 = vpack.c.b16 %v2801, %v2797
      %v3014 = vpack.c.b16 %v2802, %v2798
      %v3015 = vpack.c.b16 %v2803, %v2799
      %v3016 = vpack.c.b16 %v2808, %v2804
      %v3017 = vpack.c.b16 %v2809, %v2805
      %v3018 = vpack.c.b16 %v2810, %v2806
      %v3019 = vpack.c.b16 %v2811, %v2807
      %v3020 = vpack.c.b16 %v2816, %v2812
      %v3021 = vpack.c.b16 %v2817, %v2813
      %v3022 = vpack.c.b16 %v2818, %v2814
      %v3023 = vpack.c.b16 %v2819, %v2815
      %v3024 = vpack.c.b16 %v2824, %v2820
      %v3025 = vpack.c.b16 %v2825, %v2821
      %v3026 = vpack.c.b16 %v2826, %v2822
      %v3027 = vpack.c.b16 %v2827, %v2823
      %v3028 = vpack.c.b16 %v2832, %v2828
      %v3029 = vpack.c.b16 %v2833, %v2829
      %v3030 = vpack.c.b16 %v2834, %v2830
      %v3031 = vpack.c.b16 %v2835, %v2831
      %v3032 = vpack.c.b16 %v2840, %v2836
      %v3033 = vpack.c.b16 %v2841, %v2837
      %v3034 = vpack.c.b16 %v2842, %v2838
      %v3035 = vpack.c.b16 %v2843, %v2839
      %v3036 = vpack.c.b16 %v2848, %v2844
      %v3037 = vpack.c.b16 %v2849, %v2845
      %v3038 = vpack.c.b16 %v2850, %v2846
      %v3039 = vpack.c.b16 %v2851, %v2847
      %v3040 = vpack.c.b16 %v2856, %v2852
      %v3041 = vpack.c.b16 %v2857, %v2853
      %v3042 = vpack.c.b16 %v2858, %v2854
      %v3043 = vpack.c.b16 %v2859, %v2855
      %v3044 = vpack.c.b16 %v2864, %v2860
      %v3045 = vpack.c.b16 %v2865, %v2861
      %v3046 = vpack.c.b16 %v2866, %v2862
      %v3047 = vpack.c.b16 %v2867, %v2863
      %v3048 = vpack.c.b16 %v2872, %v2868
      %v3049 = vpack.c.b16 %v2873, %v2869
      %v3050 = vpack.c.b16 %v2874, %v2870
      %v3051 = vpack.c.b16 %v2875, %v2871
      %v3052 = vpack.c.b16 %v2880, %v2876
      %v3053 = vpack.c.b16 %v2881, %v2877
      %v3054 = vpack.c.b16 %v2882, %v2878
      %v3055 = vpack.c.b16 %v2883, %v2879
      %v3056 = vpack.c.b16 %v2888, %v2884
      %v3057 = vpack.c.b16 %v2889, %v2885
      %v3058 = vpack.c.b16 %v2890, %v2886
      %v3059 = vpack.c.b16 %v2891, %v2887
      %v3060 = vpack.c.b16 %v2896, %v2892
      %v3061 = vpack.c.b16 %v2897, %v2893
      %v3062 = vpack.c.b16 %v2898, %v2894
      %v3063 = vpack.c.b16 %v2899, %v2895
      %v3064 = vpack.c.b16 %v2904, %v2900
      %v3065 = vpack.c.b16 %v2905, %v2901
      %v3066 = vpack.c.b16 %v2906, %v2902
      %v3067 = vpack.c.b16 %v2907, %v2903
      %v3068 = vpack.c.b16 %v2912, %v2908
      %v3069 = vpack.c.b16 %v2913, %v2909
      %v3070 = vpack.c.b16 %v2914, %v2910
      %v3071 = vpack.c.b16 %v2915, %v2911
      %v3072 = vpack.c.b16 %v2920, %v2916
      %v3073 = vpack.c.b16 %v2921, %v2917
      %v3074 = vpack.c.b16 %v2922, %v2918
      %v3075 = vpack.c.b16 %v2923, %v2919
      %v3076 = vpack.c.b16 %v2928, %v2924
      %v3077 = vpack.c.b16 %v2929, %v2925
      %v3078 = vpack.c.b16 %v2930, %v2926
      %v3079 = vpack.c.b16 %v2931, %v2927
      %v3080 = vpack.c.b16 %v2936, %v2932
      %v3081 = vpack.c.b16 %v2937, %v2933
      %v3082 = vpack.c.b16 %v2938, %v2934
      %v3083 = vpack.c.b16 %v2939, %v2935
      %v3084 = vpack.c.b16 %v2944, %v2940
      %v3085 = vpack.c.b16 %v2945, %v2941
      %v3086 = vpack.c.b16 %v2946, %v2942
      %v3087 = vpack.c.b16 %v2947, %v2943
      %v3088 = vpack.c.b16 %v2952, %v2948
      %v3089 = vpack.c.b16 %v2953, %v2949
      %v3090 = vpack.c.b16 %v2954, %v2950
      %v3091 = vpack.c.b16 %v2955, %v2951
      %v3092 = vpack.c.b16 %v2960, %v2956
      %v3093 = vpack.c.b16 %v2961, %v2957
      %v3094 = vpack.c.b16 %v2962, %v2958
      %v3095 = vpack.c.b16 %v2963, %v2959
      %v3096 = vpack.c.b16 %v2968, %v2964
      %v3097 = vpack.c.b16 %v2969, %v2965
      %v3098 = vpack.c.b16 %v2970, %v2966
      %v3099 = vpack.c.b16 %v2971, %v2967
      %3228 = vmatprep.subr.bf16.mxu0 %v2973
      %3229 = vmatpush1.bf16.msra.mxu0 %v2972
      %3230 = vmatprep.subr.bf16.mxu0 %v2977
      %3231 = vmatpush1.bf16.msra.mxu0 %v2976
      %3232 = vmatprep.subr.bf16.mxu0 %v2981
      %3233 = vmatpush1.bf16.msra.mxu0 %v2980
      %3234 = vmatprep.subr.bf16.mxu0 %v2985
      %3235 = vmatpush1.bf16.msra.mxu0 %v2984
      %3236 = vmatprep.subr.bf16.mxu0 %v2989
      %3237 = vmatpush1.bf16.msra.mxu0 %v2988
      %3238 = vmatprep.subr.bf16.mxu0 %v2993
      %3239 = vmatpush1.bf16.msra.mxu0 %v2992
      %3240 = vmatprep.subr.bf16.mxu0 %v2997
      %3241 = vmatpush1.bf16.msra.mxu0 %v2996
      %3242 = vmatprep.subr.bf16.mxu0 %v3001
      %3243 = vmatpush1.bf16.msra.mxu0 %v3000
      %3244 = vmatprep.subr.bf16.mxu0 %v3005
      %3245 = vmatpush1.bf16.msra.mxu0 %v3004
      %3246 = vmatprep.subr.bf16.mxu0 %v3009
      %3247 = vmatpush1.bf16.msra.mxu0 %v3008
      %3248 = vmatprep.subr.bf16.mxu0 %v3013
      %3249 = vmatpush1.bf16.msra.mxu0 %v3012
      %3250 = vmatprep.subr.bf16.mxu0 %v3017
      %3251 = vmatpush1.bf16.msra.mxu0 %v3016
      %3252 = vmatprep.subr.bf16.mxu0 %v3021
      %3253 = vmatpush1.bf16.msra.mxu0 %v3020
      %3254 = vmatprep.subr.bf16.mxu0 %v3025
      %3255 = vmatpush1.bf16.msra.mxu0 %v3024
      %3256 = vmatprep.subr.bf16.mxu0 %v3029
      %3257 = vmatpush1.bf16.msra.mxu0 %v3028
      %3258 = vmatprep.subr.bf16.mxu0 %v3033
      %3259 = vmatpush1.bf16.msra.mxu0 %v3032
      %3260 = vmatprep.mubr.bf16.mxu0 %v2457
      %3261 = vmatmul.mubr.bf16.gmra.mrb[0].mxu0 %v2456
      %v3262 = vpop.f32.mrb[0].mxu0
      %v3263 = vadd.f32 0.0, %v3262
      %v3264 = vpop.f32.mrb[0].mxu0
      %v3265 = vadd.f32 0.0, %v3264
      %v3266 = vpop.f32.mrb[0].mxu0
      %v3267 = vpop.f32.mrb[0].mxu0
      %3268 = vdwg.mxu0
      %3269 = vmatprep.subr.bf16.mxu0 %v3037
      %3270 = vmatpush1.bf16.msra.mxu0 %v3036
      %3271 = vmatprep.subr.bf16.mxu0 %v3041
      %3272 = vmatpush1.bf16.msra.mxu0 %v3040
      %3273 = vmatprep.subr.bf16.mxu0 %v3045
      %3274 = vmatpush1.bf16.msra.mxu0 %v3044
      %3275 = vmatprep.subr.bf16.mxu0 %v3049
      %3276 = vmatpush1.bf16.msra.mxu0 %v3048
      %3277 = vmatprep.subr.bf16.mxu0 %v3053
      %3278 = vmatpush1.bf16.msra.mxu0 %v3052
      %3279 = vmatprep.subr.bf16.mxu0 %v3057
      %3280 = vmatpush1.bf16.msra.mxu0 %v3056
      %3281 = vmatprep.subr.bf16.mxu0 %v3061
      %3282 = vmatpush1.bf16.msra.mxu0 %v3060
      %3283 = vmatprep.subr.bf16.mxu0 %v3065
      %3284 = vmatpush1.bf16.msra.mxu0 %v3064
      %3285 = vmatprep.subr.bf16.mxu0 %v3069
      %3286 = vmatpush1.bf16.msra.mxu0 %v3068
      %3287 = vmatprep.subr.bf16.mxu0 %v3073
      %3288 = vmatpush1.bf16.msra.mxu0 %v3072
      %3289 = vmatprep.subr.bf16.mxu0 %v3077
      %3290 = vmatpush1.bf16.msra.mxu0 %v3076
      %3291 = vmatprep.subr.bf16.mxu0 %v3081
      %3292 = vmatpush1.bf16.msra.mxu0 %v3080
      %3293 = vmatprep.subr.bf16.mxu0 %v3085
      %3294 = vmatpush1.bf16.msra.mxu0 %v3084
      %3295 = vmatprep.subr.bf16.mxu0 %v3089
      %3296 = vmatpush1.bf16.msra.mxu0 %v3088
      %3297 = vmatprep.subr.bf16.mxu0 %v3093
      %3298 = vmatpush1.bf16.msra.mxu0 %v3092
      %3299 = vmatprep.subr.bf16.mxu0 %v3097
      %3300 = vmatpush1.bf16.msra.mxu0 %v3096
      %3301 = vmatprep.mubr.bf16.mxu0 %v2459
      %3302 = vmatmul.mubr.bf16.gmra.mrb[0].mxu0 %v2458
      %v3303 = vpop.f32.mrb[0].mxu0
      %v3304 = vadd.f32 %v3263, %v3303
      %v3305 = vpop.f32.mrb[0].mxu0
      %v3306 = vadd.f32 %v3265, %v3305
      %v3307 = vpop.f32.mrb[0].mxu0
      %v3308 = vpop.f32.mrb[0].mxu0
      %3309 = vdwg.mxu0
      %3310 = vmatprep.subr.bf16.mxu0 %v2975
      %3311 = vmatpush1.bf16.msra.mxu0 %v2974
      %3312 = vmatprep.subr.bf16.mxu0 %v2979
      %3313 = vmatpush1.bf16.msra.mxu0 %v2978
      %3314 = vmatprep.subr.bf16.mxu0 %v2983
      %3315 = vmatpush1.bf16.msra.mxu0 %v2982
      %3316 = vmatprep.subr.bf16.mxu0 %v2987
      %3317 = vmatpush1.bf16.msra.mxu0 %v2986
      %3318 = vmatprep.subr.bf16.mxu0 %v2991
      %3319 = vmatpush1.bf16.msra.mxu0 %v2990
      %3320 = vmatprep.subr.bf16.mxu0 %v2995
      %3321 = vmatpush1.bf16.msra.mxu0 %v2994
      %3322 = vmatprep.subr.bf16.mxu0 %v2999
      %3323 = vmatpush1.bf16.msra.mxu0 %v2998
      %3324 = vmatprep.subr.bf16.mxu0 %v3003
      %3325 = vmatpush1.bf16.msra.mxu0 %v3002
      %3326 = vmatprep.subr.bf16.mxu0 %v3007
      %3327 = vmatpush1.bf16.msra.mxu0 %v3006
      %3328 = vmatprep.subr.bf16.mxu0 %v3011
      %3329 = vmatpush1.bf16.msra.mxu0 %v3010
      %3330 = vmatprep.subr.bf16.mxu0 %v3015
      %3331 = vmatpush1.bf16.msra.mxu0 %v3014
      %3332 = vmatprep.subr.bf16.mxu0 %v3019
      %3333 = vmatpush1.bf16.msra.mxu0 %v3018
      %3334 = vmatprep.subr.bf16.mxu0 %v3023
      %3335 = vmatpush1.bf16.msra.mxu0 %v3022
      %3336 = vmatprep.subr.bf16.mxu0 %v3027
      %3337 = vmatpush1.bf16.msra.mxu0 %v3026
      %3338 = vmatprep.subr.bf16.mxu0 %v3031
      %3339 = vmatpush1.bf16.msra.mxu0 %v3030
      %3340 = vmatprep.subr.bf16.mxu0 %v3035
      %3341 = vmatpush1.bf16.msra.mxu0 %v3034
      %3342 = vmatprep.mubr.bf16.mxu0 %v2457
      %3343 = vmatmul.mubr.bf16.gmra.mrb[0].mxu0 %v2456
      %v3344 = vpop.f32.mrb[0].mxu0
      %v3345 = vadd.f32 0.0, %v3344
      %v3346 = vpop.f32.mrb[0].mxu0
      %v3347 = vadd.f32 0.0, %v3346
      %v3348 = vpop.f32.mrb[0].mxu0
      %v3349 = vpop.f32.mrb[0].mxu0
      %3350 = vdwg.mxu0
      %3351 = vmatprep.subr.bf16.mxu0 %v3039
      %3352 = vmatpush1.bf16.msra.mxu0 %v3038
      %3353 = vmatprep.subr.bf16.mxu0 %v3043
      %3354 = vmatpush1.bf16.msra.mxu0 %v3042
      %3355 = vmatprep.subr.bf16.mxu0 %v3047
      %3356 = vmatpush1.bf16.msra.mxu0 %v3046
      %3357 = vmatprep.subr.bf16.mxu0 %v3051
      %3358 = vmatpush1.bf16.msra.mxu0 %v3050
      %3359 = vmatprep.subr.bf16.mxu0 %v3055
      %3360 = vmatpush1.bf16.msra.mxu0 %v3054
      %3361 = vmatprep.subr.bf16.mxu0 %v3059
      %3362 = vmatpush1.bf16.msra.mxu0 %v3058
      %3363 = vmatprep.subr.bf16.mxu0 %v3063
      %3364 = vmatpush1.bf16.msra.mxu0 %v3062
      %3365 = vmatprep.subr.bf16.mxu0 %v3067
      %3366 = vmatpush1.bf16.msra.mxu0 %v3066
      %3367 = vmatprep.subr.bf16.mxu0 %v3071
      %3368 = vmatpush1.bf16.msra.mxu0 %v3070
      %3369 = vmatprep.subr.bf16.mxu0 %v3075
      %3370 = vmatpush1.bf16.msra.mxu0 %v3074
      %3371 = vmatprep.subr.bf16.mxu0 %v3079
      %3372 = vmatpush1.bf16.msra.mxu0 %v3078
      %3373 = vmatprep.subr.bf16.mxu0 %v3083
      %3374 = vmatpush1.bf16.msra.mxu0 %v3082
      %3375 = vmatprep.subr.bf16.mxu0 %v3087
      %3376 = vmatpush1.bf16.msra.mxu0 %v3086
      %3377 = vmatprep.subr.bf16.mxu0 %v3091
      %3378 = vmatpush1.bf16.msra.mxu0 %v3090
      %3379 = vmatprep.subr.bf16.mxu0 %v3095
      %3380 = vmatpush1.bf16.msra.mxu0 %v3094
      %3381 = vmatprep.subr.bf16.mxu0 %v3099
      %3382 = vmatpush1.bf16.msra.mxu0 %v3098
      %3383 = vmatprep.mubr.bf16.mxu0 %v2459
      %3384 = vmatmul.mubr.bf16.gmra.mrb[0].mxu0 %v2458
      %v3385 = vpop.f32.mrb[0].mxu0
      %v3386 = vadd.f32 %v3345, %v3385
      %v3387 = vpop.f32.mrb[0].mxu0
      %v3388 = vadd.f32 %v3347, %v3387
      %v3389 = vpop.f32.mrb[0].mxu0
      %v3390 = vpop.f32.mrb[0].mxu0
      %3391 = vdwg.mxu0
      %v3396 = vcombine.low %v3304, %v3306
      %v3397 = vcombine.low %v3386, %v3388
      %v3399 = vunpack.c.l.s4 1983009808
      %v3400 = vunpack.c.0.s8 %v3399
      %v3401 = vlaneseq
      %v3402 = vshrl.u32 %v3401, 7
      %v3403 = vsub.s32 %v3400, %v3402
      %v3404 = vrot.slane %v3396, %v3403
      %v3406 = vunpack.c.l.s4 1983009808
      %v3407 = vunpack.c.0.s8 %v3406
      %v3408 = vlaneseq
      %v3409 = vshrl.u32 %v3408, 7
      %v3410 = vsub.s32 %v3407, %v3409
      %v3411 = vrot.slane %v3397, %v3410
      %v3412 = vcombine.low %v3404, %v3411
      %3414 = vst [vmem:[%s440] sm:$0xff] %v3412
      %p3415 = scmp.lt.s32.totalorder %s20, 1
      %s3416 = scalar_select %p3415, %s20, 1
      %s3417 = smul.addr %s3416, 4
      %s3418 = smul.addr %s3417, 2
      %s3419 = scalar_lea.vmem %s9, %s3418
      // Predicated region
      $region57: #{mask_simclr_forward.3} parent=55 // pred_check
        %p3420 = pneg %p262
      $region58: #{mask_simclr_forward.3} parent=55 // pred_check_branch
        %3422 = sbr.rel (%p3420) target = $region60
      $region59: #{mask_simclr_forward.3} parent=55 // pred_region
        _
      $region60: #{mask_simclr_forward.3} parent=55 // pred_fallthru
        _
    $region56: #{mask_simclr_forward.3} parent=5 // pred_fallthru
      _
    %p3423 = scmp.le.s32.totalorder 2, %s15
    // Predicated region
    $region61: #{mask_simclr_forward.3} parent=5 // pred_check
      %p3424 = pneg %p3423
    $region62: #{mask_simclr_forward.3} parent=5 // pred_check_branch
      %3426 = sbr.rel (%p3424) target = $region64
    $region63: #{mask_simclr_forward.3} parent=5 // pred_region
      %s3427 = ssub.s32 %s15, 2
      // Predicated region
      $region65: #{mask_simclr_forward.3} parent=63 // pred_check
        %p3428 = pneg %p268
      $region66: #{mask_simclr_forward.3} parent=63 // pred_check_branch
        %3430 = sbr.rel (%p3428) target = $region68
      $region67: #{mask_simclr_forward.3} parent=63 // pred_region
        %p3431 = scmp.lt.s32.totalorder %s21, 1
        %s3432 = scalar_select %p3431, %s21, 1
        %s3433 = smul.addr %s3432, 4
        %s3434 = smul.addr %s3433, 2
        %s3435 = scalar_lea.vmem %s9, %s3434
      $region68: #{mask_simclr_forward.3} parent=63 // pred_fallthru
        _
    $region64: #{mask_simclr_forward.3} parent=5 // pred_fallthru
      _
  $region6: #{mask_simclr_forward.3} parent=0 // loop_footer
    %s19 = sadd.s32 1, %s15
  $region7: #{mask_simclr_forward.3} parent=0 // loop_footer_branch
    %14 = sbr.rel target = $region3
  $region8: #{mask_simclr_forward.3} parent=0 // loop_exit
    _

</llo_original>
